<compile_context>
chip_gen: v5e
topology: v5e:2x2
jax: 0.10.0
libtpu: 0.0.40
codegen_flags: <defaults>
</compile_context>

<pallas_src>
import functools
import math

import jax
import jax.numpy as jnp
import numpy as np
from jax.experimental import pallas as pl
from jax.experimental.pallas import tpu as pltpu

LN_EPS = 1e-5


# ---------------------------------------------------------------------------
# Fused Pallas kernel
# ---------------------------------------------------------------------------
def _layernorm(v, g, b):
    mu = jnp.mean(v, axis=-1, keepdims=True)
    c = v - mu
    var = jnp.mean(c * c, axis=-1, keepdims=True)
    return c * jax.lax.rsqrt(var + LN_EPS) * g + b


def _fused_forward_kernel(idpos_ref, bias_ref, emb_ref, wqkv_ref, pw_ref,
                          w1_ref, fb1_ref, w2_ref, vecs_ref, fw_ref, fb_ref,
                          out_ref, *, n_head, n_layer, block_size):
    """Full forward pass for Bs batch elements (one grid step).

    idpos : (rows, 2) int32  [token id | pos-slab column]   rows = Bs*T
    bias  : (rows, rows) f32 block-diagonal additive attention mask (0 / -1e30)
    emb   : (Vpad+T, E)      packed [token table ; positional encodings]
    wqkv  : (L*3*H, E, hs)   per-head Wq (pre-scaled by E**-0.5) | Wk | Wv
    pw    : (L, E, E)        attention output projection
    w1/fb1/w2 : (L,E,F)/(L,1,F)/(L,F,E) feed-forward
    vecs  : (L+1, 8, E)  rows: ln1_g, ln1_b, ln2_g, ln2_b, proj_b, ff_b2 ;
                          entry L: final-LN gamma, beta
    fw    : (T, E, Opad)     final linear weight, per-position, O padded to 128
    fb    : (1, Opad)        final linear bias (padded)
    out   : (Bs, Opad)
    """
    f32 = jnp.float32
    rows = idpos_ref.shape[0]
    T = block_size
    Bs = rows // T
    E = emb_ref.shape[1]
    H = n_head
    hs = E // H
    L = n_layer
    Opad = fw_ref.shape[-1]
    slab = emb_ref.shape[0]

    # ---- embedding gather + positional add in ONE two-hot matmul
    idpos = idpos_ref[...]                                    # (rows, 2) int32
    tok_id = idpos[:, 0:1]
    pos_id = idpos[:, 1:2]
    col = jax.lax.broadcasted_iota(jnp.int32, (rows, slab), 1)
    sel = ((col == tok_id) | (col == pos_id)).astype(f32)     # (rows, Vpad+T)
    x = jnp.dot(sel, emb_ref[...], preferred_element_type=f32)  # (rows, E)

    bias = bias_ref[...]                                       # (rows, rows)

    # ---- transformer blocks (statically unrolled; L is tiny)
    for l in range(L):
        vl = vecs_ref[l]                                       # (8, E)
        g1, b1 = vl[0:1], vl[1:2]
        g2, b2 = vl[2:3], vl[3:4]
        pb, fb2 = vl[4:5], vl[5:6]
        pwl = pw_ref[l]                                        # (E, E)

        h = _layernorm(x, g1, b1)                              # (rows, E)

        base = l * 3 * H
        attn = None
        for hh in range(H):
            # per-head projections: leading-dim weight indexing (no lane slices)
            q = jnp.dot(h, wqkv_ref[base + hh], preferred_element_type=f32)
            k = jnp.dot(h, wqkv_ref[base + H + hh], preferred_element_type=f32)
            v = jnp.dot(h, wqkv_ref[base + 2 * H + hh], preferred_element_type=f32)
            # scores (scale folded into Wq), block-diagonal mask, softmax
            s = jax.lax.dot_general(q, k, (((1,), (1,)), ((), ())),
                                    preferred_element_type=f32) + bias
            s = s - jnp.max(s, axis=-1, keepdims=True)
            es = jnp.exp(s)
            p = es * pl.reciprocal(jnp.sum(es, axis=-1, keepdims=True),
                                   approx=True)
            ho = jnp.dot(p, v, preferred_element_type=f32)     # (rows, hs)
            # fold head-concat into the output projection: aligned sublane
            # slice of proj_w instead of lane-concatenating head outputs.
            contrib = jnp.dot(ho, pwl[hh * hs:(hh + 1) * hs, :],
                              preferred_element_type=f32)      # (rows, E)
            attn = contrib if attn is None else attn + contrib
        x = x + attn + pb                                      # residual 1

        h2 = _layernorm(x, g2, b2)
        ff = jnp.dot(h2, w1_ref[l], preferred_element_type=f32) + fb1_ref[l]
        ff = jnp.maximum(ff, 0.0)                              # ReLU
        ff = jnp.dot(ff, w2_ref[l], preferred_element_type=f32) + fb2
        x = x + ff                                             # residual 2

    # ---- final LayerNorm + flatten(start_dim=1) + Linear(T*E -> O)
    # out[b] = sum_t xn[b*T+t, :] @ W_t  -- done with tiny 0/1 selection
    # matmuls (fully aligned, lane-dense Opad=128 output, no diagonal
    # lane extracts, no wasted MXU columns).
    vfin = vecs_ref[L]
    xn = _layernorm(x, vfin[0:1], vfin[1:2])                   # (rows, E)

    b_iota = jax.lax.broadcasted_iota(jnp.int32, (Bs, rows), 0)
    r_iota = jax.lax.broadcasted_iota(jnp.int32, (Bs, rows), 1)
    acc = jnp.zeros((Bs, Opad), f32) + fb_ref[...]
    for t in range(T):
        sel_t = (r_iota == (b_iota * T + t)).astype(f32)       # (Bs, rows)
        xt = jnp.dot(sel_t, xn, preferred_element_type=f32)    # (Bs, E)
        acc = acc + jnp.dot(xt, fw_ref[t], preferred_element_type=f32)
    out_ref[...] = acc


# ---------------------------------------------------------------------------
# One-time weight packing (run OUTSIDE the jitted forward path)
# ---------------------------------------------------------------------------
def pack_params(params, n_head):
    layers = params["layers"]
    L = len(layers)
    vocab, E = params["tok_emb"].shape
    H = n_head
    T = params["pos_pe"].shape[0]
    fw3 = params["fw"]                                   # (T, E, O)
    O = fw3.shape[-1]
    Vpad = ((vocab + 7) // 8) * 8
    Opad = ((O + 127) // 128) * 128
    scale = E ** (-0.5)

    # [token table (padded) ; positional encodings] slab
    emb = jnp.zeros((Vpad + T, E), jnp.float32)
    emb = emb.at[:vocab].set(params["tok_emb"])
    emb = emb.at[Vpad:].set(params["pos_pe"])

    # per-head Wq (pre-scaled) | Wk | Wv, packed along the leading dim
    wqkv = jnp.concatenate(
        [jnp.concatenate([p["wq"] * scale, p["wk"], p["wv"]], axis=0)
         for p in layers], axis=0)                       # (L*3*H, E, hs)

    pw = jnp.stack([p["proj_w"] for p in layers])        # (L, E, E)
    ff_w1 = jnp.stack([p["ff_w1"] for p in layers])      # (L, E, F)
    ff_b1 = jnp.stack([p["ff_b1"] for p in layers])      # (L, 1, F)
    ff_w2 = jnp.stack([p["ff_w2"] for p in layers])      # (L, F, E)

    def lvec(p):                                         # (8, E) per layer
        return jnp.concatenate([p["ln1_g"], p["ln1_b"], p["ln2_g"], p["ln2_b"],
                                p["proj_b"], p["ff_b2"],
                                jnp.zeros((2, E), jnp.float32)], axis=0)
    fin = jnp.concatenate([params["fln_g"], params["fln_b"],
                           jnp.zeros((6, E), jnp.float32)], axis=0)
    vecs = jnp.stack([lvec(p) for p in layers] + [fin])  # (L+1, 8, E)

    fw = jnp.zeros((T, E, Opad), jnp.float32).at[:, :, :O].set(fw3)
    fb = jnp.zeros((1, Opad), jnp.float32).at[:, :O].set(params["fb"])

    return dict(emb=emb, wqkv=wqkv, pw=pw, ff_w1=ff_w1, ff_b1=ff_b1,
                ff_w2=ff_w2, vecs=vecs, fw=fw, fb=fb)


# ---------------------------------------------------------------------------
# pallas_call wrapper
# ---------------------------------------------------------------------------
def hangman_forward(x_ids, kp, *, n_head, n_layer, output_size):
    B, T = x_ids.shape
    emb = kp["emb"]
    E = emb.shape[1]
    Vpad = emb.shape[0] - T
    H, L = n_head, n_layer
    hs = E // H
    F = kp["ff_w1"].shape[-1]
    Opad = kp["fw"].shape[-1]

    # Megacore split only when each half amortizes per-TC fixed cost and keeps
    # blocks tile-legal (Bs multiple of 8).  v5e/v6e and small batches -> 1.
    n_splits = 2 if (B % 2 == 0 and (B // 2) % 8 == 0) else 1
    Bs = B // n_splits
    rows = Bs * T

    # token id + positional-slab column, per row (precomputed: no int mod in-kernel)
    ids = x_ids.astype(jnp.int32).reshape(B * T, 1)
    posc = (jnp.tile(jnp.arange(T, dtype=jnp.int32), B) + Vpad).reshape(B * T, 1)
    idpos = jnp.concatenate([ids, posc], axis=1)                     # (B*T, 2)

    # block-diagonal additive attention mask for one grid block
    blk = jnp.arange(rows, dtype=jnp.int32) // T
    attn_bias = jnp.where(blk[:, None] == blk[None, :],
                          0.0, -1e30).astype(jnp.float32)            # (rows, rows)

    z2 = lambda i: (0, 0)
    z3 = lambda i: (0, 0, 0)
    in_specs = [
        pl.BlockSpec((rows, 2), lambda i: (i, 0)),       # token id / pos column
        pl.BlockSpec((rows, rows), z2),                  # block-diag attn mask
        pl.BlockSpec((Vpad + T, E), z2),                 # [tok table ; PE] slab
        pl.BlockSpec((L * 3 * H, E, hs), z3),            # per-head Wq|Wk|Wv
        pl.BlockSpec((L, E, E), z3),                     # attn out-proj W
        pl.BlockSpec((L, E, F), z3),                     # FF W1
        pl.BlockSpec((L, 1, F), z3),                     # FF b1
        pl.BlockSpec((L, F, E), z3),                     # FF W2
        pl.BlockSpec((L + 1, 8, E), z3),                 # LN / bias vectors
        pl.BlockSpec((T, E, Opad), z3),                  # final linear W (padded)
        pl.BlockSpec((1, Opad), z2),                     # final linear b (padded)
    ]

    kernel = functools.partial(_fused_forward_kernel, n_head=H, n_layer=L,
                               block_size=T)

    out = pl.pallas_call(
        kernel,
        out_shape=jax.ShapeDtypeStruct((B, Opad), jnp.float32),
        grid=(n_splits,),
        in_specs=in_specs,
        out_specs=pl.BlockSpec((Bs, Opad), lambda i: (i, 0)),
        compiler_params=pltpu.CompilerParams(dimension_semantics=("parallel",)),
    )(idpos, attn_bias, emb, kp["wqkv"], kp["pw"], kp["ff_w1"], kp["ff_b1"],
      kp["ff_w2"], kp["vecs"], kp["fw"], kp["fb"])

    return out[:, :output_size]                          # drop lane padding


# ---------------------------------------------------------------------------
# Deterministic parameter init + pure-JAX reference
# ---------------------------------------------------------------------------
def positional_encoding_1d(embed_size, block_size):
    assert embed_size % 2 == 0
    pos = jnp.arange(block_size, dtype=jnp.float32)[:, None]
    div = jnp.exp(jnp.arange(0, embed_size, 2, dtype=jnp.float32)
                  * (-(math.log(10000.0) / embed_size)))
    pe = jnp.zeros((block_size, embed_size), jnp.float32)
    pe = pe.at[:, 0::2].set(jnp.sin(pos * div))
    pe = pe.at[:, 1::2].set(jnp.cos(pos * div))
    return pe


def init_block_params(key, E, H):
    hs = E // H
    F = 4 * E
    ks = jax.random.split(key, 8)
    s = 0.1
    return dict(
        wq=jax.random.normal(ks[0], (H, E, hs), jnp.float32) * s,
        wk=jax.random.normal(ks[1], (H, E, hs), jnp.float32) * s,
        wv=jax.random.normal(ks[2], (H, E, hs), jnp.float32) * s,
        proj_w=jax.random.normal(ks[3], (E, E), jnp.float32) * s,
        proj_b=jax.random.normal(ks[4], (1, E), jnp.float32) * 0.01,
        ln1_g=jnp.ones((1, E), jnp.float32),
        ln1_b=jnp.zeros((1, E), jnp.float32),
        ln2_g=jnp.ones((1, E), jnp.float32),
        ln2_b=jnp.zeros((1, E), jnp.float32),
        ff_w1=jax.random.normal(ks[5], (E, F), jnp.float32) * s,
        ff_b1=jax.random.normal(ks[6], (1, F), jnp.float32) * 0.01,
        ff_w2=jax.random.normal(ks[7], (F, E), jnp.float32) * s,
        ff_b2=jnp.zeros((1, E), jnp.float32),
    )


def init_params(key, vocab, E, T, H, n_layer, O):
    keys = jax.random.split(key, n_layer + 3)
    tok = jax.random.normal(keys[0], (vocab, E), jnp.float32) * 0.1
    tok = tok.at[0].set(0.0)  # padding_idx=0
    layers = [init_block_params(keys[1 + i], E, H) for i in range(n_layer)]
    fw = jax.random.normal(keys[n_layer + 1], (T * E, O), jnp.float32) * 0.05
    fb = jax.random.normal(keys[n_layer + 2], (1, O), jnp.float32) * 0.01
    return dict(
        tok_emb=tok,
        pos_pe=positional_encoding_1d(E, T),
        layers=layers,
        fln_g=jnp.ones((1, E), jnp.float32),
        fln_b=jnp.zeros((1, E), jnp.float32),
        fw=fw.reshape(T, E, O),   # row-major flatten order (t, e) preserved
        fb=fb,
    )


def ref_forward(x_ids, params):
    def ln(v, g, b):
        mu = v.mean(-1, keepdims=True)
        var = ((v - mu) ** 2).mean(-1, keepdims=True)
        return (v - mu) / jnp.sqrt(var + LN_EPS) * g + b

    x = jnp.take(params["tok_emb"], x_ids, axis=0) + params["pos_pe"][None]
    B, T, E = x.shape
    for p in params["layers"]:
        h = ln(x, p["ln1_g"], p["ln1_b"])
        q = jnp.einsum("bte,hef->bhtf", h, p["wq"])
        k = jnp.einsum("bte,hef->bhtf", h, p["wk"])
        v = jnp.einsum("bte,hef->bhtf", h, p["wv"])
        s = jnp.einsum("bhtf,bhsf->bhts", q, k) * (E ** (-0.5))
        a = jax.nn.softmax(s, axis=-1)
        o = jnp.einsum("bhts,bhsf->bhtf", a, v)
        o = jnp.transpose(o, (0, 2, 1, 3)).reshape(B, T, E)
        x = x + (o @ p["proj_w"] + p["proj_b"])
        h2 = ln(x, p["ln2_g"], p["ln2_b"])
        f = jnp.maximum(h2 @ p["ff_w1"] + p["ff_b1"], 0.0)
        x = x + (f @ p["ff_w2"] + p["ff_b2"])
    x = ln(x, params["fln_g"], params["fln_b"])
    flat = x.reshape(B, T * E)
    O = params["fw"].shape[-1]
    return flat @ params["fw"].reshape(T * E, O) + params["fb"]


# ---------------------------------------------------------------------------
if __name__ == "__main__":
    vocab_size, embed_size, block_size = 28, 32, 8
    n_head, n_layer, output_size = 4, 2, 26
    batch = 2
    # TODO(synk): dropout is a no-op here (inference / eval mode semantics);
    # the module's output_func softmax is not applied in forward().

    key = jax.random.PRNGKey(0)
    kx, kp = jax.random.split(key)
    x_ids = jax.random.randint(kx, (batch, block_size), 0, vocab_size, dtype=jnp.int32)
    params = init_params(kp, vocab_size, embed_size, block_size,
                         n_head, n_layer, output_size)

    # Pack weights ONCE, outside the jitted forward path (perf review).
    packed = pack_params(params, n_head)
    packed = jax.tree_util.tree_map(jax.block_until_ready, packed)

    fwd = jax.jit(functools.partial(hangman_forward, n_head=n_head,
                                    n_layer=n_layer, output_size=output_size))
    logits = fwd(x_ids, packed)
    jax.block_until_ready(logits)

    ref = ref_forward(x_ids, params)
    assert logits.shape == (batch, output_size)
    # Tolerance accounts for the approx (EUP) softmax reciprocal.
    if not np.allclose(np.asarray(logits), np.asarray(ref), atol=5e-3, rtol=5e-3):
        raise SystemExit("MISMATCH between Pallas kernel and JAX reference")
    print("KERNEL_OK")
</pallas_src>

<mosaic_0001>
module attributes {stable_mosaic.version = 11 : i64} {
  func.func @_fused_forward_kernel(%arg0: i32, %arg1: memref<16x2xi32, #tpu.memory_space<vmem>>, %arg2: memref<16x16xf32, #tpu.memory_space<vmem>>, %arg3: memref<40x32xf32, #tpu.memory_space<vmem>>, %arg4: memref<24x32x8xf32, #tpu.memory_space<vmem>>, %arg5: memref<2x32x32xf32, #tpu.memory_space<vmem>>, %arg6: memref<2x32x128xf32, #tpu.memory_space<vmem>>, %arg7: memref<2x1x128xf32, #tpu.memory_space<vmem>>, %arg8: memref<2x128x32xf32, #tpu.memory_space<vmem>>, %arg9: memref<3x8x32xf32, #tpu.memory_space<vmem>>, %arg10: memref<8x32x128xf32, #tpu.memory_space<vmem>>, %arg11: memref<1x128xf32, #tpu.memory_space<vmem>>, %arg12: memref<2x128xf32, #tpu.memory_space<vmem>>) attributes {dimension_semantics = [#tpu.dimension_semantics<parallel>], iteration_bounds = array<i64: 1>, scalar_prefetch = 0 : i64, scratch_operands = 0 : i64, tpu.core_type = #tpu.core_type<tc>, window_params = [{transform_indices = @transform_0, window_bounds = array<i64: 16, 2>}, {pipeline_mode = #tpu.pipeline_mode<synchronous>, transform_indices = @transform_1, window_bounds = array<i64: 16, 16>}, {pipeline_mode = #tpu.pipeline_mode<synchronous>, transform_indices = @transform_2, window_bounds = array<i64: 40, 32>}, {pipeline_mode = #tpu.pipeline_mode<synchronous>, transform_indices = @transform_3, window_bounds = array<i64: 24, 32, 8>}, {pipeline_mode = #tpu.pipeline_mode<synchronous>, transform_indices = @transform_4, window_bounds = array<i64: 2, 32, 32>}, {pipeline_mode = #tpu.pipeline_mode<synchronous>, transform_indices = @transform_5, window_bounds = array<i64: 2, 32, 128>}, {pipeline_mode = #tpu.pipeline_mode<synchronous>, transform_indices = @transform_6, window_bounds = array<i64: 2, 1, 128>}, {pipeline_mode = #tpu.pipeline_mode<synchronous>, transform_indices = @transform_7, window_bounds = array<i64: 2, 128, 32>}, {pipeline_mode = #tpu.pipeline_mode<synchronous>, transform_indices = @transform_8, window_bounds = array<i64: 3, 8, 32>}, {pipeline_mode = #tpu.pipeline_mode<synchronous>, transform_indices = @transform_9, window_bounds = array<i64: 8, 32, 128>}, {pipeline_mode = #tpu.pipeline_mode<synchronous>, transform_indices = @transform_10, window_bounds = array<i64: 1, 128>}, {transform_indices = @transform_11, window_bounds = array<i64: 2, 128>}]} {
    %c0 = arith.constant 0 : index
    %c0_0 = arith.constant 0 : index
    %0 = vector.load %arg1[%c0, %c0_0] : memref<16x2xi32, #tpu.memory_space<vmem>>, vector<16x2xi32>
    %1 = vector.extract_strided_slice %0 {offsets = [0, 0], sizes = [16, 1], strides = [1, 1]} : vector<16x2xi32> to vector<16x1xi32>
    %2 = vector.extract_strided_slice %0 {offsets = [0, 1], sizes = [16, 1], strides = [1, 1]} : vector<16x2xi32> to vector<16x1xi32>
    %3 = tpu.iota {dimensions = array<i32: 1>} : vector<16x40xi32>
    %4 = vector.broadcast %1 : vector<16x1xi32> to vector<16x40xi32>
    %5 = arith.cmpi eq, %3, %4 : vector<16x40xi32>
    %6 = vector.broadcast %2 : vector<16x1xi32> to vector<16x40xi32>
    %7 = arith.cmpi eq, %3, %6 : vector<16x40xi32>
    %8 = arith.ori %5, %7 : vector<16x40xi1>
    %9 = arith.extui %8 : vector<16x40xi1> to vector<16x40xi32>
    %10 = arith.sitofp %9 : vector<16x40xi32> to vector<16x40xf32>
    %c0_1 = arith.constant 0 : index
    %c0_2 = arith.constant 0 : index
    %11 = vector.load %arg3[%c0_1, %c0_2] : memref<40x32xf32, #tpu.memory_space<vmem>>, vector<40x32xf32>
    %cst = arith.constant dense<0.000000e+00> : vector<16x32xf32>
    %12 = tpu.matmul %10, %11, %cst {dimension_numbers = #tpu.dot_dimension_numbers<[1], [0], [0], [1], [0, 0, 1, 1], [], []>} : vector<16x40xf32>, vector<40x32xf32>, vector<16x32xf32> -> vector<16x32xf32>
    %c0_3 = arith.constant 0 : index
    %c0_4 = arith.constant 0 : index
    %13 = vector.load %arg2[%c0_3, %c0_4] : memref<16x16xf32, #tpu.memory_space<vmem>>, vector<16x16xf32>
    %c0_5 = arith.constant 0 : index
    %c0_6 = arith.constant 0 : index
    %c0_7 = arith.constant 0 : index
    %14 = vector.load %arg9[%c0_5, %c0_6, %c0_7] : memref<3x8x32xf32, #tpu.memory_space<vmem>>, vector<1x8x32xf32>
    %15 = vector.shape_cast %14 : vector<1x8x32xf32> to vector<8x32xf32>
    %16 = vector.extract_strided_slice %15 {offsets = [0, 0], sizes = [1, 32], strides = [1, 1]} : vector<8x32xf32> to vector<1x32xf32>
    %17 = vector.extract_strided_slice %15 {offsets = [1, 0], sizes = [1, 32], strides = [1, 1]} : vector<8x32xf32> to vector<1x32xf32>
    %18 = vector.extract_strided_slice %15 {offsets = [2, 0], sizes = [1, 32], strides = [1, 1]} : vector<8x32xf32> to vector<1x32xf32>
    %19 = vector.extract_strided_slice %15 {offsets = [3, 0], sizes = [1, 32], strides = [1, 1]} : vector<8x32xf32> to vector<1x32xf32>
    %20 = vector.extract_strided_slice %15 {offsets = [4, 0], sizes = [1, 32], strides = [1, 1]} : vector<8x32xf32> to vector<1x32xf32>
    %21 = vector.extract_strided_slice %15 {offsets = [5, 0], sizes = [1, 32], strides = [1, 1]} : vector<8x32xf32> to vector<1x32xf32>
    %c0_8 = arith.constant 0 : index
    %c0_9 = arith.constant 0 : index
    %c0_10 = arith.constant 0 : index
    %22 = vector.load %arg5[%c0_8, %c0_9, %c0_10] : memref<2x32x32xf32, #tpu.memory_space<vmem>>, vector<1x32x32xf32>
    %23 = vector.shape_cast %22 : vector<1x32x32xf32> to vector<32x32xf32>
    %cst_11 = arith.constant dense<0.000000e+00> : vector<16xf32>
    %24 = vector.multi_reduction <add>, %12, %cst_11 [1] : vector<16x32xf32> to vector<16xf32>
    %25 = vector.shape_cast %24 : vector<16xf32> to vector<16x1xf32>
    %cst_12 = arith.constant 3.200000e+01 : f32
    %26 = vector.broadcast %cst_12 : f32 to vector<16x1xf32>
    %27 = arith.divf %25, %26 : vector<16x1xf32>
    %28 = vector.broadcast %27 : vector<16x1xf32> to vector<16x32xf32>
    %29 = arith.subf %12, %28 : vector<16x32xf32>
    %30 = arith.mulf %29, %29 : vector<16x32xf32>
    %cst_13 = arith.constant dense<0.000000e+00> : vector<16xf32>
    %31 = vector.multi_reduction <add>, %30, %cst_13 [1] : vector<16x32xf32> to vector<16xf32>
    %32 = vector.shape_cast %31 : vector<16xf32> to vector<16x1xf32>
    %cst_14 = arith.constant 3.200000e+01 : f32
    %33 = vector.broadcast %cst_14 : f32 to vector<16x1xf32>
    %34 = arith.divf %32, %33 : vector<16x1xf32>
    %cst_15 = arith.constant 9.99999974E-6 : f32
    %35 = vector.broadcast %cst_15 : f32 to vector<16x1xf32>
    %36 = arith.addf %34, %35 : vector<16x1xf32>
    %37 = math.rsqrt %36 : vector<16x1xf32>
    %38 = vector.broadcast %37 : vector<16x1xf32> to vector<16x32xf32>
    %39 = arith.mulf %29, %38 : vector<16x32xf32>
    %40 = vector.broadcast %16 : vector<1x32xf32> to vector<16x32xf32>
    %41 = arith.mulf %39, %40 : vector<16x32xf32>
    %42 = vector.broadcast %17 : vector<1x32xf32> to vector<16x32xf32>
    %43 = arith.addf %41, %42 : vector<16x32xf32>
    %c0_16 = arith.constant 0 : index
    %c0_17 = arith.constant 0 : index
    %c0_18 = arith.constant 0 : index
    %44 = vector.load %arg4[%c0_16, %c0_17, %c0_18] : memref<24x32x8xf32, #tpu.memory_space<vmem>>, vector<1x32x8xf32>
    %45 = vector.shape_cast %44 : vector<1x32x8xf32> to vector<32x8xf32>
    %cst_19 = arith.constant dense<0.000000e+00> : vector<16x8xf32>
    %46 = tpu.matmul %43, %45, %cst_19 {dimension_numbers = #tpu.dot_dimension_numbers<[1], [0], [0], [1], [0, 0, 1, 1], [], []>} : vector<16x32xf32>, vector<32x8xf32>, vector<16x8xf32> -> vector<16x8xf32>
    %c4 = arith.constant 4 : index
    %c0_20 = arith.constant 0 : index
    %c0_21 = arith.constant 0 : index
    %47 = vector.load %arg4[%c4, %c0_20, %c0_21] : memref<24x32x8xf32, #tpu.memory_space<vmem>>, vector<1x32x8xf32>
    %48 = vector.shape_cast %47 : vector<1x32x8xf32> to vector<32x8xf32>
    %cst_22 = arith.constant dense<0.000000e+00> : vector<16x8xf32>
    %49 = tpu.matmul %43, %48, %cst_22 {dimension_numbers = #tpu.dot_dimension_numbers<[1], [0], [0], [1], [0, 0, 1, 1], [], []>} : vector<16x32xf32>, vector<32x8xf32>, vector<16x8xf32> -> vector<16x8xf32>
    %c8 = arith.constant 8 : index
    %c0_23 = arith.constant 0 : index
    %c0_24 = arith.constant 0 : index
    %50 = vector.load %arg4[%c8, %c0_23, %c0_24] : memref<24x32x8xf32, #tpu.memory_space<vmem>>, vector<1x32x8xf32>
    %51 = vector.shape_cast %50 : vector<1x32x8xf32> to vector<32x8xf32>
    %cst_25 = arith.constant dense<0.000000e+00> : vector<16x8xf32>
    %52 = tpu.matmul %43, %51, %cst_25 {dimension_numbers = #tpu.dot_dimension_numbers<[1], [0], [0], [1], [0, 0, 1, 1], [], []>} : vector<16x32xf32>, vector<32x8xf32>, vector<16x8xf32> -> vector<16x8xf32>
    %cst_26 = arith.constant dense<0.000000e+00> : vector<16x16xf32>
    %53 = tpu.matmul %46, %49, %cst_26 {dimension_numbers = #tpu.dot_dimension_numbers<[1], [1], [0], [0], [0, 0, 1, 0], [], []>} : vector<16x8xf32>, vector<16x8xf32>, vector<16x16xf32> -> vector<16x16xf32>
    %54 = arith.addf %53, %13 : vector<16x16xf32>
    %cst_27 = arith.constant dense<0xFF800000> : vector<16xf32>
    %55 = vector.multi_reduction <maximumf>, %54, %cst_27 [1] : vector<16x16xf32> to vector<16xf32>
    %56 = vector.shape_cast %55 : vector<16xf32> to vector<16x1xf32>
    %57 = vector.broadcast %56 : vector<16x1xf32> to vector<16x16xf32>
    %58 = arith.subf %54, %57 : vector<16x16xf32>
    %59 = math.exp %58 : vector<16x16xf32>
    %cst_28 = arith.constant dense<0.000000e+00> : vector<16xf32>
    %60 = vector.multi_reduction <add>, %59, %cst_28 [1] : vector<16x16xf32> to vector<16xf32>
    %61 = vector.shape_cast %60 : vector<16xf32> to vector<16x1xf32>
    %62 = tpu.reciprocal %61 {approx = true} : vector<16x1xf32> -> vector<16x1xf32>
    %63 = vector.broadcast %62 : vector<16x1xf32> to vector<16x16xf32>
    %64 = arith.mulf %59, %63 : vector<16x16xf32>
    %cst_29 = arith.constant dense<0.000000e+00> : vector<16x8xf32>
    %65 = tpu.matmul %64, %52, %cst_29 {dimension_numbers = #tpu.dot_dimension_numbers<[1], [0], [0], [1], [0, 0, 1, 1], [], []>} : vector<16x16xf32>, vector<16x8xf32>, vector<16x8xf32> -> vector<16x8xf32>
    %66 = vector.extract_strided_slice %23 {offsets = [0, 0], sizes = [8, 32], strides = [1, 1]} : vector<32x32xf32> to vector<8x32xf32>
    %cst_30 = arith.constant dense<0.000000e+00> : vector<16x32xf32>
    %67 = tpu.matmul %65, %66, %cst_30 {dimension_numbers = #tpu.dot_dimension_numbers<[1], [0], [0], [1], [0, 0, 1, 1], [], []>} : vector<16x8xf32>, vector<8x32xf32>, vector<16x32xf32> -> vector<16x32xf32>
    %c1 = arith.constant 1 : index
    %c0_31 = arith.constant 0 : index
    %c0_32 = arith.constant 0 : index
    %68 = vector.load %arg4[%c1, %c0_31, %c0_32] : memref<24x32x8xf32, #tpu.memory_space<vmem>>, vector<1x32x8xf32>
    %69 = vector.shape_cast %68 : vector<1x32x8xf32> to vector<32x8xf32>
    %cst_33 = arith.constant dense<0.000000e+00> : vector<16x8xf32>
    %70 = tpu.matmul %43, %69, %cst_33 {dimension_numbers = #tpu.dot_dimension_numbers<[1], [0], [0], [1], [0, 0, 1, 1], [], []>} : vector<16x32xf32>, vector<32x8xf32>, vector<16x8xf32> -> vector<16x8xf32>
    %c5 = arith.constant 5 : index
    %c0_34 = arith.constant 0 : index
    %c0_35 = arith.constant 0 : index
    %71 = vector.load %arg4[%c5, %c0_34, %c0_35] : memref<24x32x8xf32, #tpu.memory_space<vmem>>, vector<1x32x8xf32>
    %72 = vector.shape_cast %71 : vector<1x32x8xf32> to vector<32x8xf32>
    %cst_36 = arith.constant dense<0.000000e+00> : vector<16x8xf32>
    %73 = tpu.matmul %43, %72, %cst_36 {dimension_numbers = #tpu.dot_dimension_numbers<[1], [0], [0], [1], [0, 0, 1, 1], [], []>} : vector<16x32xf32>, vector<32x8xf32>, vector<16x8xf32> -> vector<16x8xf32>
    %c9 = arith.constant 9 : index
    %c0_37 = arith.constant 0 : index
    %c0_38 = arith.constant 0 : index
    %74 = vector.load %arg4[%c9, %c0_37, %c0_38] : memref<24x32x8xf32, #tpu.memory_space<vmem>>, vector<1x32x8xf32>
    %75 = vector.shape_cast %74 : vector<1x32x8xf32> to vector<32x8xf32>
    %cst_39 = arith.constant dense<0.000000e+00> : vector<16x8xf32>
    %76 = tpu.matmul %43, %75, %cst_39 {dimension_numbers = #tpu.dot_dimension_numbers<[1], [0], [0], [1], [0, 0, 1, 1], [], []>} : vector<16x32xf32>, vector<32x8xf32>, vector<16x8xf32> -> vector<16x8xf32>
    %cst_40 = arith.constant dense<0.000000e+00> : vector<16x16xf32>
    %77 = tpu.matmul %70, %73, %cst_40 {dimension_numbers = #tpu.dot_dimension_numbers<[1], [1], [0], [0], [0, 0, 1, 0], [], []>} : vector<16x8xf32>, vector<16x8xf32>, vector<16x16xf32> -> vector<16x16xf32>
    %78 = arith.addf %77, %13 : vector<16x16xf32>
    %cst_41 = arith.constant dense<0xFF800000> : vector<16xf32>
    %79 = vector.multi_reduction <maximumf>, %78, %cst_41 [1] : vector<16x16xf32> to vector<16xf32>
    %80 = vector.shape_cast %79 : vector<16xf32> to vector<16x1xf32>
    %81 = vector.broadcast %80 : vector<16x1xf32> to vector<16x16xf32>
    %82 = arith.subf %78, %81 : vector<16x16xf32>
    %83 = math.exp %82 : vector<16x16xf32>
    %cst_42 = arith.constant dense<0.000000e+00> : vector<16xf32>
    %84 = vector.multi_reduction <add>, %83, %cst_42 [1] : vector<16x16xf32> to vector<16xf32>
    %85 = vector.shape_cast %84 : vector<16xf32> to vector<16x1xf32>
    %86 = tpu.reciprocal %85 {approx = true} : vector<16x1xf32> -> vector<16x1xf32>
    %87 = vector.broadcast %86 : vector<16x1xf32> to vector<16x16xf32>
    %88 = arith.mulf %83, %87 : vector<16x16xf32>
    %cst_43 = arith.constant dense<0.000000e+00> : vector<16x8xf32>
    %89 = tpu.matmul %88, %76, %cst_43 {dimension_numbers = #tpu.dot_dimension_numbers<[1], [0], [0], [1], [0, 0, 1, 1], [], []>} : vector<16x16xf32>, vector<16x8xf32>, vector<16x8xf32> -> vector<16x8xf32>
    %90 = vector.extract_strided_slice %23 {offsets = [8, 0], sizes = [8, 32], strides = [1, 1]} : vector<32x32xf32> to vector<8x32xf32>
    %cst_44 = arith.constant dense<0.000000e+00> : vector<16x32xf32>
    %91 = tpu.matmul %89, %90, %cst_44 {dimension_numbers = #tpu.dot_dimension_numbers<[1], [0], [0], [1], [0, 0, 1, 1], [], []>} : vector<16x8xf32>, vector<8x32xf32>, vector<16x32xf32> -> vector<16x32xf32>
    %92 = arith.addf %67, %91 : vector<16x32xf32>
    %c2 = arith.constant 2 : index
    %c0_45 = arith.constant 0 : index
    %c0_46 = arith.constant 0 : index
    %93 = vector.load %arg4[%c2, %c0_45, %c0_46] : memref<24x32x8xf32, #tpu.memory_space<vmem>>, vector<1x32x8xf32>
    %94 = vector.shape_cast %93 : vector<1x32x8xf32> to vector<32x8xf32>
    %cst_47 = arith.constant dense<0.000000e+00> : vector<16x8xf32>
    %95 = tpu.matmul %43, %94, %cst_47 {dimension_numbers = #tpu.dot_dimension_numbers<[1], [0], [0], [1], [0, 0, 1, 1], [], []>} : vector<16x32xf32>, vector<32x8xf32>, vector<16x8xf32> -> vector<16x8xf32>
    %c6 = arith.constant 6 : index
    %c0_48 = arith.constant 0 : index
    %c0_49 = arith.constant 0 : index
    %96 = vector.load %arg4[%c6, %c0_48, %c0_49] : memref<24x32x8xf32, #tpu.memory_space<vmem>>, vector<1x32x8xf32>
    %97 = vector.shape_cast %96 : vector<1x32x8xf32> to vector<32x8xf32>
    %cst_50 = arith.constant dense<0.000000e+00> : vector<16x8xf32>
    %98 = tpu.matmul %43, %97, %cst_50 {dimension_numbers = #tpu.dot_dimension_numbers<[1], [0], [0], [1], [0, 0, 1, 1], [], []>} : vector<16x32xf32>, vector<32x8xf32>, vector<16x8xf32> -> vector<16x8xf32>
    %c10 = arith.constant 10 : index
    %c0_51 = arith.constant 0 : index
    %c0_52 = arith.constant 0 : index
    %99 = vector.load %arg4[%c10, %c0_51, %c0_52] : memref<24x32x8xf32, #tpu.memory_space<vmem>>, vector<1x32x8xf32>
    %100 = vector.shape_cast %99 : vector<1x32x8xf32> to vector<32x8xf32>
    %cst_53 = arith.constant dense<0.000000e+00> : vector<16x8xf32>
    %101 = tpu.matmul %43, %100, %cst_53 {dimension_numbers = #tpu.dot_dimension_numbers<[1], [0], [0], [1], [0, 0, 1, 1], [], []>} : vector<16x32xf32>, vector<32x8xf32>, vector<16x8xf32> -> vector<16x8xf32>
    %cst_54 = arith.constant dense<0.000000e+00> : vector<16x16xf32>
    %102 = tpu.matmul %95, %98, %cst_54 {dimension_numbers = #tpu.dot_dimension_numbers<[1], [1], [0], [0], [0, 0, 1, 0], [], []>} : vector<16x8xf32>, vector<16x8xf32>, vector<16x16xf32> -> vector<16x16xf32>
    %103 = arith.addf %102, %13 : vector<16x16xf32>
    %cst_55 = arith.constant dense<0xFF800000> : vector<16xf32>
    %104 = vector.multi_reduction <maximumf>, %103, %cst_55 [1] : vector<16x16xf32> to vector<16xf32>
    %105 = vector.shape_cast %104 : vector<16xf32> to vector<16x1xf32>
    %106 = vector.broadcast %105 : vector<16x1xf32> to vector<16x16xf32>
    %107 = arith.subf %103, %106 : vector<16x16xf32>
    %108 = math.exp %107 : vector<16x16xf32>
    %cst_56 = arith.constant dense<0.000000e+00> : vector<16xf32>
    %109 = vector.multi_reduction <add>, %108, %cst_56 [1] : vector<16x16xf32> to vector<16xf32>
    %110 = vector.shape_cast %109 : vector<16xf32> to vector<16x1xf32>
    %111 = tpu.reciprocal %110 {approx = true} : vector<16x1xf32> -> vector<16x1xf32>
    %112 = vector.broadcast %111 : vector<16x1xf32> to vector<16x16xf32>
    %113 = arith.mulf %108, %112 : vector<16x16xf32>
    %cst_57 = arith.constant dense<0.000000e+00> : vector<16x8xf32>
    %114 = tpu.matmul %113, %101, %cst_57 {dimension_numbers = #tpu.dot_dimension_numbers<[1], [0], [0], [1], [0, 0, 1, 1], [], []>} : vector<16x16xf32>, vector<16x8xf32>, vector<16x8xf32> -> vector<16x8xf32>
    %115 = vector.extract_strided_slice %23 {offsets = [16, 0], sizes = [8, 32], strides = [1, 1]} : vector<32x32xf32> to vector<8x32xf32>
    %cst_58 = arith.constant dense<0.000000e+00> : vector<16x32xf32>
    %116 = tpu.matmul %114, %115, %cst_58 {dimension_numbers = #tpu.dot_dimension_numbers<[1], [0], [0], [1], [0, 0, 1, 1], [], []>} : vector<16x8xf32>, vector<8x32xf32>, vector<16x32xf32> -> vector<16x32xf32>
    %117 = arith.addf %92, %116 : vector<16x32xf32>
    %c3 = arith.constant 3 : index
    %c0_59 = arith.constant 0 : index
    %c0_60 = arith.constant 0 : index
    %118 = vector.load %arg4[%c3, %c0_59, %c0_60] : memref<24x32x8xf32, #tpu.memory_space<vmem>>, vector<1x32x8xf32>
    %119 = vector.shape_cast %118 : vector<1x32x8xf32> to vector<32x8xf32>
    %cst_61 = arith.constant dense<0.000000e+00> : vector<16x8xf32>
    %120 = tpu.matmul %43, %119, %cst_61 {dimension_numbers = #tpu.dot_dimension_numbers<[1], [0], [0], [1], [0, 0, 1, 1], [], []>} : vector<16x32xf32>, vector<32x8xf32>, vector<16x8xf32> -> vector<16x8xf32>
    %c7 = arith.constant 7 : index
    %c0_62 = arith.constant 0 : index
    %c0_63 = arith.constant 0 : index
    %121 = vector.load %arg4[%c7, %c0_62, %c0_63] : memref<24x32x8xf32, #tpu.memory_space<vmem>>, vector<1x32x8xf32>
    %122 = vector.shape_cast %121 : vector<1x32x8xf32> to vector<32x8xf32>
    %cst_64 = arith.constant dense<0.000000e+00> : vector<16x8xf32>
    %123 = tpu.matmul %43, %122, %cst_64 {dimension_numbers = #tpu.dot_dimension_numbers<[1], [0], [0], [1], [0, 0, 1, 1], [], []>} : vector<16x32xf32>, vector<32x8xf32>, vector<16x8xf32> -> vector<16x8xf32>
    %c11 = arith.constant 11 : index
    %c0_65 = arith.constant 0 : index
    %c0_66 = arith.constant 0 : index
    %124 = vector.load %arg4[%c11, %c0_65, %c0_66] : memref<24x32x8xf32, #tpu.memory_space<vmem>>, vector<1x32x8xf32>
    %125 = vector.shape_cast %124 : vector<1x32x8xf32> to vector<32x8xf32>
    %cst_67 = arith.constant dense<0.000000e+00> : vector<16x8xf32>
    %126 = tpu.matmul %43, %125, %cst_67 {dimension_numbers = #tpu.dot_dimension_numbers<[1], [0], [0], [1], [0, 0, 1, 1], [], []>} : vector<16x32xf32>, vector<32x8xf32>, vector<16x8xf32> -> vector<16x8xf32>
    %cst_68 = arith.constant dense<0.000000e+00> : vector<16x16xf32>
    %127 = tpu.matmul %120, %123, %cst_68 {dimension_numbers = #tpu.dot_dimension_numbers<[1], [1], [0], [0], [0, 0, 1, 0], [], []>} : vector<16x8xf32>, vector<16x8xf32>, vector<16x16xf32> -> vector<16x16xf32>
    %128 = arith.addf %127, %13 : vector<16x16xf32>
    %cst_69 = arith.constant dense<0xFF800000> : vector<16xf32>
    %129 = vector.multi_reduction <maximumf>, %128, %cst_69 [1] : vector<16x16xf32> to vector<16xf32>
    %130 = vector.shape_cast %129 : vector<16xf32> to vector<16x1xf32>
    %131 = vector.broadcast %130 : vector<16x1xf32> to vector<16x16xf32>
    %132 = arith.subf %128, %131 : vector<16x16xf32>
    %133 = math.exp %132 : vector<16x16xf32>
    %cst_70 = arith.constant dense<0.000000e+00> : vector<16xf32>
    %134 = vector.multi_reduction <add>, %133, %cst_70 [1] : vector<16x16xf32> to vector<16xf32>
    %135 = vector.shape_cast %134 : vector<16xf32> to vector<16x1xf32>
    %136 = tpu.reciprocal %135 {approx = true} : vector<16x1xf32> -> vector<16x1xf32>
    %137 = vector.broadcast %136 : vector<16x1xf32> to vector<16x16xf32>
    %138 = arith.mulf %133, %137 : vector<16x16xf32>
    %cst_71 = arith.constant dense<0.000000e+00> : vector<16x8xf32>
    %139 = tpu.matmul %138, %126, %cst_71 {dimension_numbers = #tpu.dot_dimension_numbers<[1], [0], [0], [1], [0, 0, 1, 1], [], []>} : vector<16x16xf32>, vector<16x8xf32>, vector<16x8xf32> -> vector<16x8xf32>
    %140 = vector.extract_strided_slice %23 {offsets = [24, 0], sizes = [8, 32], strides = [1, 1]} : vector<32x32xf32> to vector<8x32xf32>
    %cst_72 = arith.constant dense<0.000000e+00> : vector<16x32xf32>
    %141 = tpu.matmul %139, %140, %cst_72 {dimension_numbers = #tpu.dot_dimension_numbers<[1], [0], [0], [1], [0, 0, 1, 1], [], []>} : vector<16x8xf32>, vector<8x32xf32>, vector<16x32xf32> -> vector<16x32xf32>
    %142 = arith.addf %117, %141 : vector<16x32xf32>
    %143 = arith.addf %12, %142 : vector<16x32xf32>
    %144 = vector.broadcast %20 : vector<1x32xf32> to vector<16x32xf32>
    %145 = arith.addf %143, %144 : vector<16x32xf32>
    %cst_73 = arith.constant dense<0.000000e+00> : vector<16xf32>
    %146 = vector.multi_reduction <add>, %145, %cst_73 [1] : vector<16x32xf32> to vector<16xf32>
    %147 = vector.shape_cast %146 : vector<16xf32> to vector<16x1xf32>
    %cst_74 = arith.constant 3.200000e+01 : f32
    %148 = vector.broadcast %cst_74 : f32 to vector<16x1xf32>
    %149 = arith.divf %147, %148 : vector<16x1xf32>
    %150 = vector.broadcast %149 : vector<16x1xf32> to vector<16x32xf32>
    %151 = arith.subf %145, %150 : vector<16x32xf32>
    %152 = arith.mulf %151, %151 : vector<16x32xf32>
    %cst_75 = arith.constant dense<0.000000e+00> : vector<16xf32>
    %153 = vector.multi_reduction <add>, %152, %cst_75 [1] : vector<16x32xf32> to vector<16xf32>
    %154 = vector.shape_cast %153 : vector<16xf32> to vector<16x1xf32>
    %cst_76 = arith.constant 3.200000e+01 : f32
    %155 = vector.broadcast %cst_76 : f32 to vector<16x1xf32>
    %156 = arith.divf %154, %155 : vector<16x1xf32>
    %cst_77 = arith.constant 9.99999974E-6 : f32
    %157 = vector.broadcast %cst_77 : f32 to vector<16x1xf32>
    %158 = arith.addf %156, %157 : vector<16x1xf32>
    %159 = math.rsqrt %158 : vector<16x1xf32>
    %160 = vector.broadcast %159 : vector<16x1xf32> to vector<16x32xf32>
    %161 = arith.mulf %151, %160 : vector<16x32xf32>
    %162 = vector.broadcast %18 : vector<1x32xf32> to vector<16x32xf32>
    %163 = arith.mulf %161, %162 : vector<16x32xf32>
    %164 = vector.broadcast %19 : vector<1x32xf32> to vector<16x32xf32>
    %165 = arith.addf %163, %164 : vector<16x32xf32>
    %c0_78 = arith.constant 0 : index
    %c0_79 = arith.constant 0 : index
    %c0_80 = arith.constant 0 : index
    %166 = vector.load %arg6[%c0_78, %c0_79, %c0_80] : memref<2x32x128xf32, #tpu.memory_space<vmem>>, vector<1x32x128xf32>
    %167 = vector.shape_cast %166 : vector<1x32x128xf32> to vector<32x128xf32>
    %cst_81 = arith.constant dense<0.000000e+00> : vector<16x128xf32>
    %168 = tpu.matmul %165, %167, %cst_81 {dimension_numbers = #tpu.dot_dimension_numbers<[1], [0], [0], [1], [0, 0, 1, 1], [], []>} : vector<16x32xf32>, vector<32x128xf32>, vector<16x128xf32> -> vector<16x128xf32>
    %c0_82 = arith.constant 0 : index
    %c0_83 = arith.constant 0 : index
    %c0_84 = arith.constant 0 : index
    %169 = vector.load %arg7[%c0_82, %c0_83, %c0_84] : memref<2x1x128xf32, #tpu.memory_space<vmem>>, vector<1x1x128xf32>
    %170 = vector.shape_cast %169 : vector<1x1x128xf32> to vector<1x128xf32>
    %171 = vector.broadcast %170 : vector<1x128xf32> to vector<16x128xf32>
    %172 = arith.addf %168, %171 : vector<16x128xf32>
    %cst_85 = arith.constant 0.000000e+00 : f32
    %173 = vector.broadcast %cst_85 : f32 to vector<16x128xf32>
    %174 = arith.maximumf %172, %173 : vector<16x128xf32>
    %c0_86 = arith.constant 0 : index
    %c0_87 = arith.constant 0 : index
    %c0_88 = arith.constant 0 : index
    %175 = vector.load %arg8[%c0_86, %c0_87, %c0_88] : memref<2x128x32xf32, #tpu.memory_space<vmem>>, vector<1x128x32xf32>
    %176 = vector.shape_cast %175 : vector<1x128x32xf32> to vector<128x32xf32>
    %cst_89 = arith.constant dense<0.000000e+00> : vector<16x32xf32>
    %177 = tpu.matmul %174, %176, %cst_89 {dimension_numbers = #tpu.dot_dimension_numbers<[1], [0], [0], [1], [0, 0, 1, 1], [], []>} : vector<16x128xf32>, vector<128x32xf32>, vector<16x32xf32> -> vector<16x32xf32>
    %178 = vector.broadcast %21 : vector<1x32xf32> to vector<16x32xf32>
    %179 = arith.addf %177, %178 : vector<16x32xf32>
    %180 = arith.addf %145, %179 : vector<16x32xf32>
    %c1_90 = arith.constant 1 : index
    %c0_91 = arith.constant 0 : index
    %c0_92 = arith.constant 0 : index
    %181 = vector.load %arg9[%c1_90, %c0_91, %c0_92] : memref<3x8x32xf32, #tpu.memory_space<vmem>>, vector<1x8x32xf32>
    %182 = vector.shape_cast %181 : vector<1x8x32xf32> to vector<8x32xf32>
    %183 = vector.extract_strided_slice %182 {offsets = [0, 0], sizes = [1, 32], strides = [1, 1]} : vector<8x32xf32> to vector<1x32xf32>
    %184 = vector.extract_strided_slice %182 {offsets = [1, 0], sizes = [1, 32], strides = [1, 1]} : vector<8x32xf32> to vector<1x32xf32>
    %185 = vector.extract_strided_slice %182 {offsets = [2, 0], sizes = [1, 32], strides = [1, 1]} : vector<8x32xf32> to vector<1x32xf32>
    %186 = vector.extract_strided_slice %182 {offsets = [3, 0], sizes = [1, 32], strides = [1, 1]} : vector<8x32xf32> to vector<1x32xf32>
    %187 = vector.extract_strided_slice %182 {offsets = [4, 0], sizes = [1, 32], strides = [1, 1]} : vector<8x32xf32> to vector<1x32xf32>
    %188 = vector.extract_strided_slice %182 {offsets = [5, 0], sizes = [1, 32], strides = [1, 1]} : vector<8x32xf32> to vector<1x32xf32>
    %c1_93 = arith.constant 1 : index
    %c0_94 = arith.constant 0 : index
    %c0_95 = arith.constant 0 : index
    %189 = vector.load %arg5[%c1_93, %c0_94, %c0_95] : memref<2x32x32xf32, #tpu.memory_space<vmem>>, vector<1x32x32xf32>
    %190 = vector.shape_cast %189 : vector<1x32x32xf32> to vector<32x32xf32>
    %cst_96 = arith.constant dense<0.000000e+00> : vector<16xf32>
    %191 = vector.multi_reduction <add>, %180, %cst_96 [1] : vector<16x32xf32> to vector<16xf32>
    %192 = vector.shape_cast %191 : vector<16xf32> to vector<16x1xf32>
    %cst_97 = arith.constant 3.200000e+01 : f32
    %193 = vector.broadcast %cst_97 : f32 to vector<16x1xf32>
    %194 = arith.divf %192, %193 : vector<16x1xf32>
    %195 = vector.broadcast %194 : vector<16x1xf32> to vector<16x32xf32>
    %196 = arith.subf %180, %195 : vector<16x32xf32>
    %197 = arith.mulf %196, %196 : vector<16x32xf32>
    %cst_98 = arith.constant dense<0.000000e+00> : vector<16xf32>
    %198 = vector.multi_reduction <add>, %197, %cst_98 [1] : vector<16x32xf32> to vector<16xf32>
    %199 = vector.shape_cast %198 : vector<16xf32> to vector<16x1xf32>
    %cst_99 = arith.constant 3.200000e+01 : f32
    %200 = vector.broadcast %cst_99 : f32 to vector<16x1xf32>
    %201 = arith.divf %199, %200 : vector<16x1xf32>
    %cst_100 = arith.constant 9.99999974E-6 : f32
    %202 = vector.broadcast %cst_100 : f32 to vector<16x1xf32>
    %203 = arith.addf %201, %202 : vector<16x1xf32>
    %204 = math.rsqrt %203 : vector<16x1xf32>
    %205 = vector.broadcast %204 : vector<16x1xf32> to vector<16x32xf32>
    %206 = arith.mulf %196, %205 : vector<16x32xf32>
    %207 = vector.broadcast %183 : vector<1x32xf32> to vector<16x32xf32>
    %208 = arith.mulf %206, %207 : vector<16x32xf32>
    %209 = vector.broadcast %184 : vector<1x32xf32> to vector<16x32xf32>
    %210 = arith.addf %208, %209 : vector<16x32xf32>
    %c12 = arith.constant 12 : index
    %c0_101 = arith.constant 0 : index
    %c0_102 = arith.constant 0 : index
    %211 = vector.load %arg4[%c12, %c0_101, %c0_102] : memref<24x32x8xf32, #tpu.memory_space<vmem>>, vector<1x32x8xf32>
    %212 = vector.shape_cast %211 : vector<1x32x8xf32> to vector<32x8xf32>
    %cst_103 = arith.constant dense<0.000000e+00> : vector<16x8xf32>
    %213 = tpu.matmul %210, %212, %cst_103 {dimension_numbers = #tpu.dot_dimension_numbers<[1], [0], [0], [1], [0, 0, 1, 1], [], []>} : vector<16x32xf32>, vector<32x8xf32>, vector<16x8xf32> -> vector<16x8xf32>
    %c16 = arith.constant 16 : index
    %c0_104 = arith.constant 0 : index
    %c0_105 = arith.constant 0 : index
    %214 = vector.load %arg4[%c16, %c0_104, %c0_105] : memref<24x32x8xf32, #tpu.memory_space<vmem>>, vector<1x32x8xf32>
    %215 = vector.shape_cast %214 : vector<1x32x8xf32> to vector<32x8xf32>
    %cst_106 = arith.constant dense<0.000000e+00> : vector<16x8xf32>
    %216 = tpu.matmul %210, %215, %cst_106 {dimension_numbers = #tpu.dot_dimension_numbers<[1], [0], [0], [1], [0, 0, 1, 1], [], []>} : vector<16x32xf32>, vector<32x8xf32>, vector<16x8xf32> -> vector<16x8xf32>
    %c20 = arith.constant 20 : index
    %c0_107 = arith.constant 0 : index
    %c0_108 = arith.constant 0 : index
    %217 = vector.load %arg4[%c20, %c0_107, %c0_108] : memref<24x32x8xf32, #tpu.memory_space<vmem>>, vector<1x32x8xf32>
    %218 = vector.shape_cast %217 : vector<1x32x8xf32> to vector<32x8xf32>
    %cst_109 = arith.constant dense<0.000000e+00> : vector<16x8xf32>
    %219 = tpu.matmul %210, %218, %cst_109 {dimension_numbers = #tpu.dot_dimension_numbers<[1], [0], [0], [1], [0, 0, 1, 1], [], []>} : vector<16x32xf32>, vector<32x8xf32>, vector<16x8xf32> -> vector<16x8xf32>
    %cst_110 = arith.constant dense<0.000000e+00> : vector<16x16xf32>
    %220 = tpu.matmul %213, %216, %cst_110 {dimension_numbers = #tpu.dot_dimension_numbers<[1], [1], [0], [0], [0, 0, 1, 0], [], []>} : vector<16x8xf32>, vector<16x8xf32>, vector<16x16xf32> -> vector<16x16xf32>
    %221 = arith.addf %220, %13 : vector<16x16xf32>
    %cst_111 = arith.constant dense<0xFF800000> : vector<16xf32>
    %222 = vector.multi_reduction <maximumf>, %221, %cst_111 [1] : vector<16x16xf32> to vector<16xf32>
    %223 = vector.shape_cast %222 : vector<16xf32> to vector<16x1xf32>
    %224 = vector.broadcast %223 : vector<16x1xf32> to vector<16x16xf32>
    %225 = arith.subf %221, %224 : vector<16x16xf32>
    %226 = math.exp %225 : vector<16x16xf32>
    %cst_112 = arith.constant dense<0.000000e+00> : vector<16xf32>
    %227 = vector.multi_reduction <add>, %226, %cst_112 [1] : vector<16x16xf32> to vector<16xf32>
    %228 = vector.shape_cast %227 : vector<16xf32> to vector<16x1xf32>
    %229 = tpu.reciprocal %228 {approx = true} : vector<16x1xf32> -> vector<16x1xf32>
    %230 = vector.broadcast %229 : vector<16x1xf32> to vector<16x16xf32>
    %231 = arith.mulf %226, %230 : vector<16x16xf32>
    %cst_113 = arith.constant dense<0.000000e+00> : vector<16x8xf32>
    %232 = tpu.matmul %231, %219, %cst_113 {dimension_numbers = #tpu.dot_dimension_numbers<[1], [0], [0], [1], [0, 0, 1, 1], [], []>} : vector<16x16xf32>, vector<16x8xf32>, vector<16x8xf32> -> vector<16x8xf32>
    %233 = vector.extract_strided_slice %190 {offsets = [0, 0], sizes = [8, 32], strides = [1, 1]} : vector<32x32xf32> to vector<8x32xf32>
    %cst_114 = arith.constant dense<0.000000e+00> : vector<16x32xf32>
    %234 = tpu.matmul %232, %233, %cst_114 {dimension_numbers = #tpu.dot_dimension_numbers<[1], [0], [0], [1], [0, 0, 1, 1], [], []>} : vector<16x8xf32>, vector<8x32xf32>, vector<16x32xf32> -> vector<16x32xf32>
    %c13 = arith.constant 13 : index
    %c0_115 = arith.constant 0 : index
    %c0_116 = arith.constant 0 : index
    %235 = vector.load %arg4[%c13, %c0_115, %c0_116] : memref<24x32x8xf32, #tpu.memory_space<vmem>>, vector<1x32x8xf32>
    %236 = vector.shape_cast %235 : vector<1x32x8xf32> to vector<32x8xf32>
    %cst_117 = arith.constant dense<0.000000e+00> : vector<16x8xf32>
    %237 = tpu.matmul %210, %236, %cst_117 {dimension_numbers = #tpu.dot_dimension_numbers<[1], [0], [0], [1], [0, 0, 1, 1], [], []>} : vector<16x32xf32>, vector<32x8xf32>, vector<16x8xf32> -> vector<16x8xf32>
    %c17 = arith.constant 17 : index
    %c0_118 = arith.constant 0 : index
    %c0_119 = arith.constant 0 : index
    %238 = vector.load %arg4[%c17, %c0_118, %c0_119] : memref<24x32x8xf32, #tpu.memory_space<vmem>>, vector<1x32x8xf32>
    %239 = vector.shape_cast %238 : vector<1x32x8xf32> to vector<32x8xf32>
    %cst_120 = arith.constant dense<0.000000e+00> : vector<16x8xf32>
    %240 = tpu.matmul %210, %239, %cst_120 {dimension_numbers = #tpu.dot_dimension_numbers<[1], [0], [0], [1], [0, 0, 1, 1], [], []>} : vector<16x32xf32>, vector<32x8xf32>, vector<16x8xf32> -> vector<16x8xf32>
    %c21 = arith.constant 21 : index
    %c0_121 = arith.constant 0 : index
    %c0_122 = arith.constant 0 : index
    %241 = vector.load %arg4[%c21, %c0_121, %c0_122] : memref<24x32x8xf32, #tpu.memory_space<vmem>>, vector<1x32x8xf32>
    %242 = vector.shape_cast %241 : vector<1x32x8xf32> to vector<32x8xf32>
    %cst_123 = arith.constant dense<0.000000e+00> : vector<16x8xf32>
    %243 = tpu.matmul %210, %242, %cst_123 {dimension_numbers = #tpu.dot_dimension_numbers<[1], [0], [0], [1], [0, 0, 1, 1], [], []>} : vector<16x32xf32>, vector<32x8xf32>, vector<16x8xf32> -> vector<16x8xf32>
    %cst_124 = arith.constant dense<0.000000e+00> : vector<16x16xf32>
    %244 = tpu.matmul %237, %240, %cst_124 {dimension_numbers = #tpu.dot_dimension_numbers<[1], [1], [0], [0], [0, 0, 1, 0], [], []>} : vector<16x8xf32>, vector<16x8xf32>, vector<16x16xf32> -> vector<16x16xf32>
    %245 = arith.addf %244, %13 : vector<16x16xf32>
    %cst_125 = arith.constant dense<0xFF800000> : vector<16xf32>
    %246 = vector.multi_reduction <maximumf>, %245, %cst_125 [1] : vector<16x16xf32> to vector<16xf32>
    %247 = vector.shape_cast %246 : vector<16xf32> to vector<16x1xf32>
    %248 = vector.broadcast %247 : vector<16x1xf32> to vector<16x16xf32>
    %249 = arith.subf %245, %248 : vector<16x16xf32>
    %250 = math.exp %249 : vector<16x16xf32>
    %cst_126 = arith.constant dense<0.000000e+00> : vector<16xf32>
    %251 = vector.multi_reduction <add>, %250, %cst_126 [1] : vector<16x16xf32> to vector<16xf32>
    %252 = vector.shape_cast %251 : vector<16xf32> to vector<16x1xf32>
    %253 = tpu.reciprocal %252 {approx = true} : vector<16x1xf32> -> vector<16x1xf32>
    %254 = vector.broadcast %253 : vector<16x1xf32> to vector<16x16xf32>
    %255 = arith.mulf %250, %254 : vector<16x16xf32>
    %cst_127 = arith.constant dense<0.000000e+00> : vector<16x8xf32>
    %256 = tpu.matmul %255, %243, %cst_127 {dimension_numbers = #tpu.dot_dimension_numbers<[1], [0], [0], [1], [0, 0, 1, 1], [], []>} : vector<16x16xf32>, vector<16x8xf32>, vector<16x8xf32> -> vector<16x8xf32>
    %257 = vector.extract_strided_slice %190 {offsets = [8, 0], sizes = [8, 32], strides = [1, 1]} : vector<32x32xf32> to vector<8x32xf32>
    %cst_128 = arith.constant dense<0.000000e+00> : vector<16x32xf32>
    %258 = tpu.matmul %256, %257, %cst_128 {dimension_numbers = #tpu.dot_dimension_numbers<[1], [0], [0], [1], [0, 0, 1, 1], [], []>} : vector<16x8xf32>, vector<8x32xf32>, vector<16x32xf32> -> vector<16x32xf32>
    %259 = arith.addf %234, %258 : vector<16x32xf32>
    %c14 = arith.constant 14 : index
    %c0_129 = arith.constant 0 : index
    %c0_130 = arith.constant 0 : index
    %260 = vector.load %arg4[%c14, %c0_129, %c0_130] : memref<24x32x8xf32, #tpu.memory_space<vmem>>, vector<1x32x8xf32>
    %261 = vector.shape_cast %260 : vector<1x32x8xf32> to vector<32x8xf32>
    %cst_131 = arith.constant dense<0.000000e+00> : vector<16x8xf32>
    %262 = tpu.matmul %210, %261, %cst_131 {dimension_numbers = #tpu.dot_dimension_numbers<[1], [0], [0], [1], [0, 0, 1, 1], [], []>} : vector<16x32xf32>, vector<32x8xf32>, vector<16x8xf32> -> vector<16x8xf32>
    %c18 = arith.constant 18 : index
    %c0_132 = arith.constant 0 : index
    %c0_133 = arith.constant 0 : index
    %263 = vector.load %arg4[%c18, %c0_132, %c0_133] : memref<24x32x8xf32, #tpu.memory_space<vmem>>, vector<1x32x8xf32>
    %264 = vector.shape_cast %263 : vector<1x32x8xf32> to vector<32x8xf32>
    %cst_134 = arith.constant dense<0.000000e+00> : vector<16x8xf32>
    %265 = tpu.matmul %210, %264, %cst_134 {dimension_numbers = #tpu.dot_dimension_numbers<[1], [0], [0], [1], [0, 0, 1, 1], [], []>} : vector<16x32xf32>, vector<32x8xf32>, vector<16x8xf32> -> vector<16x8xf32>
    %c22 = arith.constant 22 : index
    %c0_135 = arith.constant 0 : index
    %c0_136 = arith.constant 0 : index
    %266 = vector.load %arg4[%c22, %c0_135, %c0_136] : memref<24x32x8xf32, #tpu.memory_space<vmem>>, vector<1x32x8xf32>
    %267 = vector.shape_cast %266 : vector<1x32x8xf32> to vector<32x8xf32>
    %cst_137 = arith.constant dense<0.000000e+00> : vector<16x8xf32>
    %268 = tpu.matmul %210, %267, %cst_137 {dimension_numbers = #tpu.dot_dimension_numbers<[1], [0], [0], [1], [0, 0, 1, 1], [], []>} : vector<16x32xf32>, vector<32x8xf32>, vector<16x8xf32> -> vector<16x8xf32>
    %cst_138 = arith.constant dense<0.000000e+00> : vector<16x16xf32>
    %269 = tpu.matmul %262, %265, %cst_138 {dimension_numbers = #tpu.dot_dimension_numbers<[1], [1], [0], [0], [0, 0, 1, 0], [], []>} : vector<16x8xf32>, vector<16x8xf32>, vector<16x16xf32> -> vector<16x16xf32>
    %270 = arith.addf %269, %13 : vector<16x16xf32>
    %cst_139 = arith.constant dense<0xFF800000> : vector<16xf32>
    %271 = vector.multi_reduction <maximumf>, %270, %cst_139 [1] : vector<16x16xf32> to vector<16xf32>
    %272 = vector.shape_cast %271 : vector<16xf32> to vector<16x1xf32>
    %273 = vector.broadcast %272 : vector<16x1xf32> to vector<16x16xf32>
    %274 = arith.subf %270, %273 : vector<16x16xf32>
    %275 = math.exp %274 : vector<16x16xf32>
    %cst_140 = arith.constant dense<0.000000e+00> : vector<16xf32>
    %276 = vector.multi_reduction <add>, %275, %cst_140 [1] : vector<16x16xf32> to vector<16xf32>
    %277 = vector.shape_cast %276 : vector<16xf32> to vector<16x1xf32>
    %278 = tpu.reciprocal %277 {approx = true} : vector<16x1xf32> -> vector<16x1xf32>
    %279 = vector.broadcast %278 : vector<16x1xf32> to vector<16x16xf32>
    %280 = arith.mulf %275, %279 : vector<16x16xf32>
    %cst_141 = arith.constant dense<0.000000e+00> : vector<16x8xf32>
    %281 = tpu.matmul %280, %268, %cst_141 {dimension_numbers = #tpu.dot_dimension_numbers<[1], [0], [0], [1], [0, 0, 1, 1], [], []>} : vector<16x16xf32>, vector<16x8xf32>, vector<16x8xf32> -> vector<16x8xf32>
    %282 = vector.extract_strided_slice %190 {offsets = [16, 0], sizes = [8, 32], strides = [1, 1]} : vector<32x32xf32> to vector<8x32xf32>
    %cst_142 = arith.constant dense<0.000000e+00> : vector<16x32xf32>
    %283 = tpu.matmul %281, %282, %cst_142 {dimension_numbers = #tpu.dot_dimension_numbers<[1], [0], [0], [1], [0, 0, 1, 1], [], []>} : vector<16x8xf32>, vector<8x32xf32>, vector<16x32xf32> -> vector<16x32xf32>
    %284 = arith.addf %259, %283 : vector<16x32xf32>
    %c15 = arith.constant 15 : index
    %c0_143 = arith.constant 0 : index
    %c0_144 = arith.constant 0 : index
    %285 = vector.load %arg4[%c15, %c0_143, %c0_144] : memref<24x32x8xf32, #tpu.memory_space<vmem>>, vector<1x32x8xf32>
    %286 = vector.shape_cast %285 : vector<1x32x8xf32> to vector<32x8xf32>
    %cst_145 = arith.constant dense<0.000000e+00> : vector<16x8xf32>
    %287 = tpu.matmul %210, %286, %cst_145 {dimension_numbers = #tpu.dot_dimension_numbers<[1], [0], [0], [1], [0, 0, 1, 1], [], []>} : vector<16x32xf32>, vector<32x8xf32>, vector<16x8xf32> -> vector<16x8xf32>
    %c19 = arith.constant 19 : index
    %c0_146 = arith.constant 0 : index
    %c0_147 = arith.constant 0 : index
    %288 = vector.load %arg4[%c19, %c0_146, %c0_147] : memref<24x32x8xf32, #tpu.memory_space<vmem>>, vector<1x32x8xf32>
    %289 = vector.shape_cast %288 : vector<1x32x8xf32> to vector<32x8xf32>
    %cst_148 = arith.constant dense<0.000000e+00> : vector<16x8xf32>
    %290 = tpu.matmul %210, %289, %cst_148 {dimension_numbers = #tpu.dot_dimension_numbers<[1], [0], [0], [1], [0, 0, 1, 1], [], []>} : vector<16x32xf32>, vector<32x8xf32>, vector<16x8xf32> -> vector<16x8xf32>
    %c23 = arith.constant 23 : index
    %c0_149 = arith.constant 0 : index
    %c0_150 = arith.constant 0 : index
    %291 = vector.load %arg4[%c23, %c0_149, %c0_150] : memref<24x32x8xf32, #tpu.memory_space<vmem>>, vector<1x32x8xf32>
    %292 = vector.shape_cast %291 : vector<1x32x8xf32> to vector<32x8xf32>
    %cst_151 = arith.constant dense<0.000000e+00> : vector<16x8xf32>
    %293 = tpu.matmul %210, %292, %cst_151 {dimension_numbers = #tpu.dot_dimension_numbers<[1], [0], [0], [1], [0, 0, 1, 1], [], []>} : vector<16x32xf32>, vector<32x8xf32>, vector<16x8xf32> -> vector<16x8xf32>
    %cst_152 = arith.constant dense<0.000000e+00> : vector<16x16xf32>
    %294 = tpu.matmul %287, %290, %cst_152 {dimension_numbers = #tpu.dot_dimension_numbers<[1], [1], [0], [0], [0, 0, 1, 0], [], []>} : vector<16x8xf32>, vector<16x8xf32>, vector<16x16xf32> -> vector<16x16xf32>
    %295 = arith.addf %294, %13 : vector<16x16xf32>
    %cst_153 = arith.constant dense<0xFF800000> : vector<16xf32>
    %296 = vector.multi_reduction <maximumf>, %295, %cst_153 [1] : vector<16x16xf32> to vector<16xf32>
    %297 = vector.shape_cast %296 : vector<16xf32> to vector<16x1xf32>
    %298 = vector.broadcast %297 : vector<16x1xf32> to vector<16x16xf32>
    %299 = arith.subf %295, %298 : vector<16x16xf32>
    %300 = math.exp %299 : vector<16x16xf32>
    %cst_154 = arith.constant dense<0.000000e+00> : vector<16xf32>
    %301 = vector.multi_reduction <add>, %300, %cst_154 [1] : vector<16x16xf32> to vector<16xf32>
    %302 = vector.shape_cast %301 : vector<16xf32> to vector<16x1xf32>
    %303 = tpu.reciprocal %302 {approx = true} : vector<16x1xf32> -> vector<16x1xf32>
    %304 = vector.broadcast %303 : vector<16x1xf32> to vector<16x16xf32>
    %305 = arith.mulf %300, %304 : vector<16x16xf32>
    %cst_155 = arith.constant dense<0.000000e+00> : vector<16x8xf32>
    %306 = tpu.matmul %305, %293, %cst_155 {dimension_numbers = #tpu.dot_dimension_numbers<[1], [0], [0], [1], [0, 0, 1, 1], [], []>} : vector<16x16xf32>, vector<16x8xf32>, vector<16x8xf32> -> vector<16x8xf32>
    %307 = vector.extract_strided_slice %190 {offsets = [24, 0], sizes = [8, 32], strides = [1, 1]} : vector<32x32xf32> to vector<8x32xf32>
    %cst_156 = arith.constant dense<0.000000e+00> : vector<16x32xf32>
    %308 = tpu.matmul %306, %307, %cst_156 {dimension_numbers = #tpu.dot_dimension_numbers<[1], [0], [0], [1], [0, 0, 1, 1], [], []>} : vector<16x8xf32>, vector<8x32xf32>, vector<16x32xf32> -> vector<16x32xf32>
    %309 = arith.addf %284, %308 : vector<16x32xf32>
    %310 = arith.addf %180, %309 : vector<16x32xf32>
    %311 = vector.broadcast %187 : vector<1x32xf32> to vector<16x32xf32>
    %312 = arith.addf %310, %311 : vector<16x32xf32>
    %cst_157 = arith.constant dense<0.000000e+00> : vector<16xf32>
    %313 = vector.multi_reduction <add>, %312, %cst_157 [1] : vector<16x32xf32> to vector<16xf32>
    %314 = vector.shape_cast %313 : vector<16xf32> to vector<16x1xf32>
    %cst_158 = arith.constant 3.200000e+01 : f32
    %315 = vector.broadcast %cst_158 : f32 to vector<16x1xf32>
    %316 = arith.divf %314, %315 : vector<16x1xf32>
    %317 = vector.broadcast %316 : vector<16x1xf32> to vector<16x32xf32>
    %318 = arith.subf %312, %317 : vector<16x32xf32>
    %319 = arith.mulf %318, %318 : vector<16x32xf32>
    %cst_159 = arith.constant dense<0.000000e+00> : vector<16xf32>
    %320 = vector.multi_reduction <add>, %319, %cst_159 [1] : vector<16x32xf32> to vector<16xf32>
    %321 = vector.shape_cast %320 : vector<16xf32> to vector<16x1xf32>
    %cst_160 = arith.constant 3.200000e+01 : f32
    %322 = vector.broadcast %cst_160 : f32 to vector<16x1xf32>
    %323 = arith.divf %321, %322 : vector<16x1xf32>
    %cst_161 = arith.constant 9.99999974E-6 : f32
    %324 = vector.broadcast %cst_161 : f32 to vector<16x1xf32>
    %325 = arith.addf %323, %324 : vector<16x1xf32>
    %326 = math.rsqrt %325 : vector<16x1xf32>
    %327 = vector.broadcast %326 : vector<16x1xf32> to vector<16x32xf32>
    %328 = arith.mulf %318, %327 : vector<16x32xf32>
    %329 = vector.broadcast %185 : vector<1x32xf32> to vector<16x32xf32>
    %330 = arith.mulf %328, %329 : vector<16x32xf32>
    %331 = vector.broadcast %186 : vector<1x32xf32> to vector<16x32xf32>
    %332 = arith.addf %330, %331 : vector<16x32xf32>
    %c1_162 = arith.constant 1 : index
    %c0_163 = arith.constant 0 : index
    %c0_164 = arith.constant 0 : index
    %333 = vector.load %arg6[%c1_162, %c0_163, %c0_164] : memref<2x32x128xf32, #tpu.memory_space<vmem>>, vector<1x32x128xf32>
    %334 = vector.shape_cast %333 : vector<1x32x128xf32> to vector<32x128xf32>
    %cst_165 = arith.constant dense<0.000000e+00> : vector<16x128xf32>
    %335 = tpu.matmul %332, %334, %cst_165 {dimension_numbers = #tpu.dot_dimension_numbers<[1], [0], [0], [1], [0, 0, 1, 1], [], []>} : vector<16x32xf32>, vector<32x128xf32>, vector<16x128xf32> -> vector<16x128xf32>
    %c1_166 = arith.constant 1 : index
    %c0_167 = arith.constant 0 : index
    %c0_168 = arith.constant 0 : index
    %336 = vector.load %arg7[%c1_166, %c0_167, %c0_168] : memref<2x1x128xf32, #tpu.memory_space<vmem>>, vector<1x1x128xf32>
    %337 = vector.shape_cast %336 : vector<1x1x128xf32> to vector<1x128xf32>
    %338 = vector.broadcast %337 : vector<1x128xf32> to vector<16x128xf32>
    %339 = arith.addf %335, %338 : vector<16x128xf32>
    %cst_169 = arith.constant 0.000000e+00 : f32
    %340 = vector.broadcast %cst_169 : f32 to vector<16x128xf32>
    %341 = arith.maximumf %339, %340 : vector<16x128xf32>
    %c1_170 = arith.constant 1 : index
    %c0_171 = arith.constant 0 : index
    %c0_172 = arith.constant 0 : index
    %342 = vector.load %arg8[%c1_170, %c0_171, %c0_172] : memref<2x128x32xf32, #tpu.memory_space<vmem>>, vector<1x128x32xf32>
    %343 = vector.shape_cast %342 : vector<1x128x32xf32> to vector<128x32xf32>
    %cst_173 = arith.constant dense<0.000000e+00> : vector<16x32xf32>
    %344 = tpu.matmul %341, %343, %cst_173 {dimension_numbers = #tpu.dot_dimension_numbers<[1], [0], [0], [1], [0, 0, 1, 1], [], []>} : vector<16x128xf32>, vector<128x32xf32>, vector<16x32xf32> -> vector<16x32xf32>
    %345 = vector.broadcast %188 : vector<1x32xf32> to vector<16x32xf32>
    %346 = arith.addf %344, %345 : vector<16x32xf32>
    %347 = arith.addf %312, %346 : vector<16x32xf32>
    %c2_174 = arith.constant 2 : index
    %c0_175 = arith.constant 0 : index
    %c0_176 = arith.constant 0 : index
    %348 = vector.load %arg9[%c2_174, %c0_175, %c0_176] : memref<3x8x32xf32, #tpu.memory_space<vmem>>, vector<1x8x32xf32>
    %349 = vector.shape_cast %348 : vector<1x8x32xf32> to vector<8x32xf32>
    %350 = vector.extract_strided_slice %349 {offsets = [0, 0], sizes = [1, 32], strides = [1, 1]} : vector<8x32xf32> to vector<1x32xf32>
    %351 = vector.extract_strided_slice %349 {offsets = [1, 0], sizes = [1, 32], strides = [1, 1]} : vector<8x32xf32> to vector<1x32xf32>
    %cst_177 = arith.constant dense<0.000000e+00> : vector<16xf32>
    %352 = vector.multi_reduction <add>, %347, %cst_177 [1] : vector<16x32xf32> to vector<16xf32>
    %353 = vector.shape_cast %352 : vector<16xf32> to vector<16x1xf32>
    %cst_178 = arith.constant 3.200000e+01 : f32
    %354 = vector.broadcast %cst_178 : f32 to vector<16x1xf32>
    %355 = arith.divf %353, %354 : vector<16x1xf32>
    %356 = vector.broadcast %355 : vector<16x1xf32> to vector<16x32xf32>
    %357 = arith.subf %347, %356 : vector<16x32xf32>
    %358 = arith.mulf %357, %357 : vector<16x32xf32>
    %cst_179 = arith.constant dense<0.000000e+00> : vector<16xf32>
    %359 = vector.multi_reduction <add>, %358, %cst_179 [1] : vector<16x32xf32> to vector<16xf32>
    %360 = vector.shape_cast %359 : vector<16xf32> to vector<16x1xf32>
    %cst_180 = arith.constant 3.200000e+01 : f32
    %361 = vector.broadcast %cst_180 : f32 to vector<16x1xf32>
    %362 = arith.divf %360, %361 : vector<16x1xf32>
    %cst_181 = arith.constant 9.99999974E-6 : f32
    %363 = vector.broadcast %cst_181 : f32 to vector<16x1xf32>
    %364 = arith.addf %362, %363 : vector<16x1xf32>
    %365 = math.rsqrt %364 : vector<16x1xf32>
    %366 = vector.broadcast %365 : vector<16x1xf32> to vector<16x32xf32>
    %367 = arith.mulf %357, %366 : vector<16x32xf32>
    %368 = vector.broadcast %350 : vector<1x32xf32> to vector<16x32xf32>
    %369 = arith.mulf %367, %368 : vector<16x32xf32>
    %370 = vector.broadcast %351 : vector<1x32xf32> to vector<16x32xf32>
    %371 = arith.addf %369, %370 : vector<16x32xf32>
    %372 = tpu.iota {dimensions = array<i32: 0>} : vector<2x16xi32>
    %373 = tpu.iota {dimensions = array<i32: 1>} : vector<2x16xi32>
    %cst_182 = arith.constant 0.000000e+00 : f32
    %374 = vector.broadcast %cst_182 : f32 to vector<2x128xf32>
    %c0_183 = arith.constant 0 : index
    %c0_184 = arith.constant 0 : index
    %375 = vector.load %arg11[%c0_183, %c0_184] : memref<1x128xf32, #tpu.memory_space<vmem>>, vector<1x128xf32>
    %376 = vector.broadcast %375 : vector<1x128xf32> to vector<2x128xf32>
    %377 = arith.addf %374, %376 : vector<2x128xf32>
    %c8_i32 = arith.constant 8 : i32
    %378 = vector.broadcast %c8_i32 : i32 to vector<2x16xi32>
    %379 = arith.muli %372, %378 : vector<2x16xi32>
    %c0_i32 = arith.constant 0 : i32
    %380 = vector.broadcast %c0_i32 : i32 to vector<2x16xi32>
    %381 = arith.addi %379, %380 : vector<2x16xi32>
    %382 = arith.cmpi eq, %373, %381 : vector<2x16xi32>
    %383 = arith.extui %382 : vector<2x16xi1> to vector<2x16xi32>
    %384 = arith.sitofp %383 : vector<2x16xi32> to vector<2x16xf32>
    %cst_185 = arith.constant dense<0.000000e+00> : vector<2x32xf32>
    %385 = tpu.matmul %384, %371, %cst_185 {dimension_numbers = #tpu.dot_dimension_numbers<[1], [0], [0], [1], [0, 0, 1, 1], [], []>} : vector<2x16xf32>, vector<16x32xf32>, vector<2x32xf32> -> vector<2x32xf32>
    %c0_186 = arith.constant 0 : index
    %c0_187 = arith.constant 0 : index
    %c0_188 = arith.constant 0 : index
    %386 = vector.load %arg10[%c0_186, %c0_187, %c0_188] : memref<8x32x128xf32, #tpu.memory_space<vmem>>, vector<1x32x128xf32>
    %387 = vector.shape_cast %386 : vector<1x32x128xf32> to vector<32x128xf32>
    %cst_189 = arith.constant dense<0.000000e+00> : vector<2x128xf32>
    %388 = tpu.matmul %385, %387, %cst_189 {dimension_numbers = #tpu.dot_dimension_numbers<[1], [0], [0], [1], [0, 0, 1, 1], [], []>} : vector<2x32xf32>, vector<32x128xf32>, vector<2x128xf32> -> vector<2x128xf32>
    %389 = arith.addf %377, %388 : vector<2x128xf32>
    %c8_i32_190 = arith.constant 8 : i32
    %390 = vector.broadcast %c8_i32_190 : i32 to vector<2x16xi32>
    %391 = arith.muli %372, %390 : vector<2x16xi32>
    %c1_i32 = arith.constant 1 : i32
    %392 = vector.broadcast %c1_i32 : i32 to vector<2x16xi32>
    %393 = arith.addi %391, %392 : vector<2x16xi32>
    %394 = arith.cmpi eq, %373, %393 : vector<2x16xi32>
    %395 = arith.extui %394 : vector<2x16xi1> to vector<2x16xi32>
    %396 = arith.sitofp %395 : vector<2x16xi32> to vector<2x16xf32>
    %cst_191 = arith.constant dense<0.000000e+00> : vector<2x32xf32>
    %397 = tpu.matmul %396, %371, %cst_191 {dimension_numbers = #tpu.dot_dimension_numbers<[1], [0], [0], [1], [0, 0, 1, 1], [], []>} : vector<2x16xf32>, vector<16x32xf32>, vector<2x32xf32> -> vector<2x32xf32>
    %c1_192 = arith.constant 1 : index
    %c0_193 = arith.constant 0 : index
    %c0_194 = arith.constant 0 : index
    %398 = vector.load %arg10[%c1_192, %c0_193, %c0_194] : memref<8x32x128xf32, #tpu.memory_space<vmem>>, vector<1x32x128xf32>
    %399 = vector.shape_cast %398 : vector<1x32x128xf32> to vector<32x128xf32>
    %cst_195 = arith.constant dense<0.000000e+00> : vector<2x128xf32>
    %400 = tpu.matmul %397, %399, %cst_195 {dimension_numbers = #tpu.dot_dimension_numbers<[1], [0], [0], [1], [0, 0, 1, 1], [], []>} : vector<2x32xf32>, vector<32x128xf32>, vector<2x128xf32> -> vector<2x128xf32>
    %401 = arith.addf %389, %400 : vector<2x128xf32>
    %c8_i32_196 = arith.constant 8 : i32
    %402 = vector.broadcast %c8_i32_196 : i32 to vector<2x16xi32>
    %403 = arith.muli %372, %402 : vector<2x16xi32>
    %c2_i32 = arith.constant 2 : i32
    %404 = vector.broadcast %c2_i32 : i32 to vector<2x16xi32>
    %405 = arith.addi %403, %404 : vector<2x16xi32>
    %406 = arith.cmpi eq, %373, %405 : vector<2x16xi32>
    %407 = arith.extui %406 : vector<2x16xi1> to vector<2x16xi32>
    %408 = arith.sitofp %407 : vector<2x16xi32> to vector<2x16xf32>
    %cst_197 = arith.constant dense<0.000000e+00> : vector<2x32xf32>
    %409 = tpu.matmul %408, %371, %cst_197 {dimension_numbers = #tpu.dot_dimension_numbers<[1], [0], [0], [1], [0, 0, 1, 1], [], []>} : vector<2x16xf32>, vector<16x32xf32>, vector<2x32xf32> -> vector<2x32xf32>
    %c2_198 = arith.constant 2 : index
    %c0_199 = arith.constant 0 : index
    %c0_200 = arith.constant 0 : index
    %410 = vector.load %arg10[%c2_198, %c0_199, %c0_200] : memref<8x32x128xf32, #tpu.memory_space<vmem>>, vector<1x32x128xf32>
    %411 = vector.shape_cast %410 : vector<1x32x128xf32> to vector<32x128xf32>
    %cst_201 = arith.constant dense<0.000000e+00> : vector<2x128xf32>
    %412 = tpu.matmul %409, %411, %cst_201 {dimension_numbers = #tpu.dot_dimension_numbers<[1], [0], [0], [1], [0, 0, 1, 1], [], []>} : vector<2x32xf32>, vector<32x128xf32>, vector<2x128xf32> -> vector<2x128xf32>
    %413 = arith.addf %401, %412 : vector<2x128xf32>
    %c8_i32_202 = arith.constant 8 : i32
    %414 = vector.broadcast %c8_i32_202 : i32 to vector<2x16xi32>
    %415 = arith.muli %372, %414 : vector<2x16xi32>
    %c3_i32 = arith.constant 3 : i32
    %416 = vector.broadcast %c3_i32 : i32 to vector<2x16xi32>
    %417 = arith.addi %415, %416 : vector<2x16xi32>
    %418 = arith.cmpi eq, %373, %417 : vector<2x16xi32>
    %419 = arith.extui %418 : vector<2x16xi1> to vector<2x16xi32>
    %420 = arith.sitofp %419 : vector<2x16xi32> to vector<2x16xf32>
    %cst_203 = arith.constant dense<0.000000e+00> : vector<2x32xf32>
    %421 = tpu.matmul %420, %371, %cst_203 {dimension_numbers = #tpu.dot_dimension_numbers<[1], [0], [0], [1], [0, 0, 1, 1], [], []>} : vector<2x16xf32>, vector<16x32xf32>, vector<2x32xf32> -> vector<2x32xf32>
    %c3_204 = arith.constant 3 : index
    %c0_205 = arith.constant 0 : index
    %c0_206 = arith.constant 0 : index
    %422 = vector.load %arg10[%c3_204, %c0_205, %c0_206] : memref<8x32x128xf32, #tpu.memory_space<vmem>>, vector<1x32x128xf32>
    %423 = vector.shape_cast %422 : vector<1x32x128xf32> to vector<32x128xf32>
    %cst_207 = arith.constant dense<0.000000e+00> : vector<2x128xf32>
    %424 = tpu.matmul %421, %423, %cst_207 {dimension_numbers = #tpu.dot_dimension_numbers<[1], [0], [0], [1], [0, 0, 1, 1], [], []>} : vector<2x32xf32>, vector<32x128xf32>, vector<2x128xf32> -> vector<2x128xf32>
    %425 = arith.addf %413, %424 : vector<2x128xf32>
    %c8_i32_208 = arith.constant 8 : i32
    %426 = vector.broadcast %c8_i32_208 : i32 to vector<2x16xi32>
    %427 = arith.muli %372, %426 : vector<2x16xi32>
    %c4_i32 = arith.constant 4 : i32
    %428 = vector.broadcast %c4_i32 : i32 to vector<2x16xi32>
    %429 = arith.addi %427, %428 : vector<2x16xi32>
    %430 = arith.cmpi eq, %373, %429 : vector<2x16xi32>
    %431 = arith.extui %430 : vector<2x16xi1> to vector<2x16xi32>
    %432 = arith.sitofp %431 : vector<2x16xi32> to vector<2x16xf32>
    %cst_209 = arith.constant dense<0.000000e+00> : vector<2x32xf32>
    %433 = tpu.matmul %432, %371, %cst_209 {dimension_numbers = #tpu.dot_dimension_numbers<[1], [0], [0], [1], [0, 0, 1, 1], [], []>} : vector<2x16xf32>, vector<16x32xf32>, vector<2x32xf32> -> vector<2x32xf32>
    %c4_210 = arith.constant 4 : index
    %c0_211 = arith.constant 0 : index
    %c0_212 = arith.constant 0 : index
    %434 = vector.load %arg10[%c4_210, %c0_211, %c0_212] : memref<8x32x128xf32, #tpu.memory_space<vmem>>, vector<1x32x128xf32>
    %435 = vector.shape_cast %434 : vector<1x32x128xf32> to vector<32x128xf32>
    %cst_213 = arith.constant dense<0.000000e+00> : vector<2x128xf32>
    %436 = tpu.matmul %433, %435, %cst_213 {dimension_numbers = #tpu.dot_dimension_numbers<[1], [0], [0], [1], [0, 0, 1, 1], [], []>} : vector<2x32xf32>, vector<32x128xf32>, vector<2x128xf32> -> vector<2x128xf32>
    %437 = arith.addf %425, %436 : vector<2x128xf32>
    %c8_i32_214 = arith.constant 8 : i32
    %438 = vector.broadcast %c8_i32_214 : i32 to vector<2x16xi32>
    %439 = arith.muli %372, %438 : vector<2x16xi32>
    %c5_i32 = arith.constant 5 : i32
    %440 = vector.broadcast %c5_i32 : i32 to vector<2x16xi32>
    %441 = arith.addi %439, %440 : vector<2x16xi32>
    %442 = arith.cmpi eq, %373, %441 : vector<2x16xi32>
    %443 = arith.extui %442 : vector<2x16xi1> to vector<2x16xi32>
    %444 = arith.sitofp %443 : vector<2x16xi32> to vector<2x16xf32>
    %cst_215 = arith.constant dense<0.000000e+00> : vector<2x32xf32>
    %445 = tpu.matmul %444, %371, %cst_215 {dimension_numbers = #tpu.dot_dimension_numbers<[1], [0], [0], [1], [0, 0, 1, 1], [], []>} : vector<2x16xf32>, vector<16x32xf32>, vector<2x32xf32> -> vector<2x32xf32>
    %c5_216 = arith.constant 5 : index
    %c0_217 = arith.constant 0 : index
    %c0_218 = arith.constant 0 : index
    %446 = vector.load %arg10[%c5_216, %c0_217, %c0_218] : memref<8x32x128xf32, #tpu.memory_space<vmem>>, vector<1x32x128xf32>
    %447 = vector.shape_cast %446 : vector<1x32x128xf32> to vector<32x128xf32>
    %cst_219 = arith.constant dense<0.000000e+00> : vector<2x128xf32>
    %448 = tpu.matmul %445, %447, %cst_219 {dimension_numbers = #tpu.dot_dimension_numbers<[1], [0], [0], [1], [0, 0, 1, 1], [], []>} : vector<2x32xf32>, vector<32x128xf32>, vector<2x128xf32> -> vector<2x128xf32>
    %449 = arith.addf %437, %448 : vector<2x128xf32>
    %c8_i32_220 = arith.constant 8 : i32
    %450 = vector.broadcast %c8_i32_220 : i32 to vector<2x16xi32>
    %451 = arith.muli %372, %450 : vector<2x16xi32>
    %c6_i32 = arith.constant 6 : i32
    %452 = vector.broadcast %c6_i32 : i32 to vector<2x16xi32>
    %453 = arith.addi %451, %452 : vector<2x16xi32>
    %454 = arith.cmpi eq, %373, %453 : vector<2x16xi32>
    %455 = arith.extui %454 : vector<2x16xi1> to vector<2x16xi32>
    %456 = arith.sitofp %455 : vector<2x16xi32> to vector<2x16xf32>
    %cst_221 = arith.constant dense<0.000000e+00> : vector<2x32xf32>
    %457 = tpu.matmul %456, %371, %cst_221 {dimension_numbers = #tpu.dot_dimension_numbers<[1], [0], [0], [1], [0, 0, 1, 1], [], []>} : vector<2x16xf32>, vector<16x32xf32>, vector<2x32xf32> -> vector<2x32xf32>
    %c6_222 = arith.constant 6 : index
    %c0_223 = arith.constant 0 : index
    %c0_224 = arith.constant 0 : index
    %458 = vector.load %arg10[%c6_222, %c0_223, %c0_224] : memref<8x32x128xf32, #tpu.memory_space<vmem>>, vector<1x32x128xf32>
    %459 = vector.shape_cast %458 : vector<1x32x128xf32> to vector<32x128xf32>
    %cst_225 = arith.constant dense<0.000000e+00> : vector<2x128xf32>
    %460 = tpu.matmul %457, %459, %cst_225 {dimension_numbers = #tpu.dot_dimension_numbers<[1], [0], [0], [1], [0, 0, 1, 1], [], []>} : vector<2x32xf32>, vector<32x128xf32>, vector<2x128xf32> -> vector<2x128xf32>
    %461 = arith.addf %449, %460 : vector<2x128xf32>
    %c8_i32_226 = arith.constant 8 : i32
    %462 = vector.broadcast %c8_i32_226 : i32 to vector<2x16xi32>
    %463 = arith.muli %372, %462 : vector<2x16xi32>
    %c7_i32 = arith.constant 7 : i32
    %464 = vector.broadcast %c7_i32 : i32 to vector<2x16xi32>
    %465 = arith.addi %463, %464 : vector<2x16xi32>
    %466 = arith.cmpi eq, %373, %465 : vector<2x16xi32>
    %467 = arith.extui %466 : vector<2x16xi1> to vector<2x16xi32>
    %468 = arith.sitofp %467 : vector<2x16xi32> to vector<2x16xf32>
    %cst_227 = arith.constant dense<0.000000e+00> : vector<2x32xf32>
    %469 = tpu.matmul %468, %371, %cst_227 {dimension_numbers = #tpu.dot_dimension_numbers<[1], [0], [0], [1], [0, 0, 1, 1], [], []>} : vector<2x16xf32>, vector<16x32xf32>, vector<2x32xf32> -> vector<2x32xf32>
    %c7_228 = arith.constant 7 : index
    %c0_229 = arith.constant 0 : index
    %c0_230 = arith.constant 0 : index
    %470 = vector.load %arg10[%c7_228, %c0_229, %c0_230] : memref<8x32x128xf32, #tpu.memory_space<vmem>>, vector<1x32x128xf32>
    %471 = vector.shape_cast %470 : vector<1x32x128xf32> to vector<32x128xf32>
    %cst_231 = arith.constant dense<0.000000e+00> : vector<2x128xf32>
    %472 = tpu.matmul %469, %471, %cst_231 {dimension_numbers = #tpu.dot_dimension_numbers<[1], [0], [0], [1], [0, 0, 1, 1], [], []>} : vector<2x32xf32>, vector<32x128xf32>, vector<2x128xf32> -> vector<2x128xf32>
    %473 = arith.addf %461, %472 : vector<2x128xf32>
    %c0_232 = arith.constant 0 : index
    %c0_233 = arith.constant 0 : index
    %474 = vector.load %arg12[%c0_232, %c0_233] : memref<2x128xf32, #tpu.memory_space<vmem>>, vector<2x128xf32>
    tpu.vector_store %arg12[%c0_232, %c0_233], %473 {strides = array<i32>} : memref<2x128xf32, #tpu.memory_space<vmem>>, vector<2x128xf32>,
    return
  }
  func.func @transform_0(%arg0: i32) -> (i32, i32) {
    %c0_i32 = arith.constant 0 : i32
    %c0_i32_0 = arith.constant 0 : i32
    return %arg0, %c0_i32 : i32, i32
  }
  func.func @transform_1(%arg0: i32) -> (i32, i32) {
    %c0_i32 = arith.constant 0 : i32
    %c0_i32_0 = arith.constant 0 : i32
    %c0_i32_1 = arith.constant 0 : i32
    return %c0_i32, %c0_i32_0 : i32, i32
  }
  func.func @transform_2(%arg0: i32) -> (i32, i32) {
    %c0_i32 = arith.constant 0 : i32
    %c0_i32_0 = arith.constant 0 : i32
    %c0_i32_1 = arith.constant 0 : i32
    return %c0_i32, %c0_i32_0 : i32, i32
  }
  func.func @transform_3(%arg0: i32) -> (i32, i32, i32) {
    %c0_i32 = arith.constant 0 : i32
    %c0_i32_0 = arith.constant 0 : i32
    %c0_i32_1 = arith.constant 0 : i32
    %c0_i32_2 = arith.constant 0 : i32
    return %c0_i32, %c0_i32_0, %c0_i32_1 : i32, i32, i32
  }
  func.func @transform_4(%arg0: i32) -> (i32, i32, i32) {
    %c0_i32 = arith.constant 0 : i32
    %c0_i32_0 = arith.constant 0 : i32
    %c0_i32_1 = arith.constant 0 : i32
    %c0_i32_2 = arith.constant 0 : i32
    return %c0_i32, %c0_i32_0, %c0_i32_1 : i32, i32, i32
  }
  func.func @transform_5(%arg0: i32) -> (i32, i32, i32) {
    %c0_i32 = arith.constant 0 : i32
    %c0_i32_0 = arith.constant 0 : i32
    %c0_i32_1 = arith.constant 0 : i32
    %c0_i32_2 = arith.constant 0 : i32
    return %c0_i32, %c0_i32_0, %c0_i32_1 : i32, i32, i32
  }
  func.func @transform_6(%arg0: i32) -> (i32, i32, i32) {
    %c0_i32 = arith.constant 0 : i32
    %c0_i32_0 = arith.constant 0 : i32
    %c0_i32_1 = arith.constant 0 : i32
    %c0_i32_2 = arith.constant 0 : i32
    return %c0_i32, %c0_i32_0, %c0_i32_1 : i32, i32, i32
  }
  func.func @transform_7(%arg0: i32) -> (i32, i32, i32) {
    %c0_i32 = arith.constant 0 : i32
    %c0_i32_0 = arith.constant 0 : i32
    %c0_i32_1 = arith.constant 0 : i32
    %c0_i32_2 = arith.constant 0 : i32
    return %c0_i32, %c0_i32_0, %c0_i32_1 : i32, i32, i32
  }
  func.func @transform_8(%arg0: i32) -> (i32, i32, i32) {
    %c0_i32 = arith.constant 0 : i32
    %c0_i32_0 = arith.constant 0 : i32
    %c0_i32_1 = arith.constant 0 : i32
    %c0_i32_2 = arith.constant 0 : i32
    return %c0_i32, %c0_i32_0, %c0_i32_1 : i32, i32, i32
  }
  func.func @transform_9(%arg0: i32) -> (i32, i32, i32) {
    %c0_i32 = arith.constant 0 : i32
    %c0_i32_0 = arith.constant 0 : i32
    %c0_i32_1 = arith.constant 0 : i32
    %c0_i32_2 = arith.constant 0 : i32
    return %c0_i32, %c0_i32_0, %c0_i32_1 : i32, i32, i32
  }
  func.func @transform_10(%arg0: i32) -> (i32, i32) {
    %c0_i32 = arith.constant 0 : i32
    %c0_i32_0 = arith.constant 0 : i32
    %c0_i32_1 = arith.constant 0 : i32
    return %c0_i32, %c0_i32_0 : i32, i32
  }
  func.func @transform_11(%arg0: i32) -> (i32, i32) {
    %c0_i32 = arith.constant 0 : i32
    %c0_i32_0 = arith.constant 0 : i32
    return %arg0, %c0_i32 : i32, i32
  }
}

</mosaic_0001>

<llo_original>
// kernel: hangman_forward.1
$region0: #{hangman_forward.1}
  #allocation0 [shape = 'u32[]', space=smem, size = 0x4, offset = 0x4, fixed_abs, tag = 'smem constant byte address 0x4 - core index']
  #allocation1 [shape = 'u32[72,128]{1,0:T(1,128)}', space=vmem, size = 0x9000, scoped, tag = 'internal scratch']
  %s0 = inlined_call_operand.vmem [shape: s32[16,2], index: 0, kind: input, shape index: {}]
  %s1 = inlined_call_operand.vmem [shape: f32[16,16], index: 1, kind: input, shape index: {}]
  %s2 = inlined_call_operand.vmem [shape: f32[40,32], index: 2, kind: input, shape index: {}]
  %s3 = inlined_call_operand.vmem [shape: f32[24,32,8], index: 3, kind: input, shape index: {}]
  %s4 = inlined_call_operand.vmem [shape: f32[2,32,32], index: 4, kind: input, shape index: {}]
  %s5 = inlined_call_operand.vmem [shape: f32[2,32,128], index: 5, kind: input, shape index: {}]
  %s6 = inlined_call_operand.vmem [shape: f32[2,1,128], index: 6, kind: input, shape index: {}]
  %s7 = inlined_call_operand.vmem [shape: f32[2,128,32], index: 7, kind: input, shape index: {}]
  %s8 = inlined_call_operand.vmem [shape: f32[3,8,32], index: 8, kind: input, shape index: {}]
  %s9 = inlined_call_operand.vmem [shape: f32[8,32,128], index: 9, kind: input, shape index: {}]
  %s10 = inlined_call_operand.vmem [shape: f32[1,128], index: 10, kind: input, shape index: {}]
  %s11 = inlined_call_operand.hbm [shape: f32[2,128], index: 11, kind: output, shape index: {}]
  %s12 = sld [smem:[#allocation0]]
  $region54: #{hangman_forward.1} parent=0
    _
  %s14 = ssub.s32 1, %s12
  %s15 = scalar_select 0, %s14, %s12
  $region1: #{hangman_forward.1} parent=0
    #allocation2 [shape = 'u8[1024]{0}', space=vmem, size = 0x400, scoped, tag = 'output window, operand 0, single buffered']
    #allocation3 [shape = 's32[1]{0}', space=sflag, size = 0x4, scoped, tag = 'scoped memory for hangman_forward.1']
    %16 = vsyncpa [#allocation3], 0
    // Predicated region
    $region2: #{hangman_forward.1} parent=1 // pred_check
      _
    $region3: #{hangman_forward.1} parent=1 // pred_check_branch
      %18 = sbr.rel (0) target = $region5
    $region4: #{hangman_forward.1} parent=1 // pred_region
      _
    $region5: #{hangman_forward.1} parent=1 // pred_fallthru
      _
    // Predicated region
    $region6: #{hangman_forward.1} parent=1 // pred_check
      _
    $region7: #{hangman_forward.1} parent=1 // pred_check_branch
      %20 = sbr.rel (0) target = $region9
    $region8: #{hangman_forward.1} parent=1 // pred_region
      _
    $region9: #{hangman_forward.1} parent=1 // pred_fallthru
      _
    // Predicated region
    $region10: #{hangman_forward.1} parent=1 // pred_check
      _
    $region11: #{hangman_forward.1} parent=1 // pred_check_branch
      %22 = sbr.rel (0) target = $region13
    $region12: #{hangman_forward.1} parent=1 // pred_region
      _
    $region13: #{hangman_forward.1} parent=1 // pred_fallthru
      _
    // Predicated region
    $region14: #{hangman_forward.1} parent=1 // pred_check
      _
    $region15: #{hangman_forward.1} parent=1 // pred_check_branch
      %24 = sbr.rel (0) target = $region17
    $region16: #{hangman_forward.1} parent=1 // pred_region
      _
    $region17: #{hangman_forward.1} parent=1 // pred_fallthru
      _
    // Predicated region
    $region18: #{hangman_forward.1} parent=1 // pred_check
      _
    $region19: #{hangman_forward.1} parent=1 // pred_check_branch
      %26 = sbr.rel (0) target = $region21
    $region20: #{hangman_forward.1} parent=1 // pred_region
      _
    $region21: #{hangman_forward.1} parent=1 // pred_fallthru
      _
    // Predicated region
    $region22: #{hangman_forward.1} parent=1 // pred_check
      _
    $region23: #{hangman_forward.1} parent=1 // pred_check_branch
      %28 = sbr.rel (0) target = $region25
    $region24: #{hangman_forward.1} parent=1 // pred_region
      _
    $region25: #{hangman_forward.1} parent=1 // pred_fallthru
      _
    // Predicated region
    $region26: #{hangman_forward.1} parent=1 // pred_check
      _
    $region27: #{hangman_forward.1} parent=1 // pred_check_branch
      %30 = sbr.rel (0) target = $region29
    $region28: #{hangman_forward.1} parent=1 // pred_region
      _
    $region29: #{hangman_forward.1} parent=1 // pred_fallthru
      _
    // Predicated region
    $region30: #{hangman_forward.1} parent=1 // pred_check
      _
    $region31: #{hangman_forward.1} parent=1 // pred_check_branch
      %32 = sbr.rel (0) target = $region33
    $region32: #{hangman_forward.1} parent=1 // pred_region
      _
    $region33: #{hangman_forward.1} parent=1 // pred_fallthru
      _
    // Predicated region
    $region34: #{hangman_forward.1} parent=1 // pred_check
      _
    $region35: #{hangman_forward.1} parent=1 // pred_check_branch
      %34 = sbr.rel (0) target = $region37
    $region36: #{hangman_forward.1} parent=1 // pred_region
      _
    $region37: #{hangman_forward.1} parent=1 // pred_fallthru
      _
    // Predicated region
    $region38: #{hangman_forward.1} parent=1 // pred_check
      _
    $region39: #{hangman_forward.1} parent=1 // pred_check_branch
      %36 = sbr.rel (0) target = $region41
    $region40: #{hangman_forward.1} parent=1 // pred_region
      _
    $region41: #{hangman_forward.1} parent=1 // pred_fallthru
      _
    // Predicated region
    $region42: #{hangman_forward.1} parent=1 // pred_check
      _
    $region43: #{hangman_forward.1} parent=1 // pred_check_branch
      %38 = sbr.rel (0) target = $region45
    $region44: #{hangman_forward.1} parent=1 // pred_region
      _
    $region45: #{hangman_forward.1} parent=1 // pred_fallthru
      _
    %v39 = vld [vmem:[%s0] sm:$0xff]
    %v40 = vld [vmem:[%s0 + $0x8] sm:$0xff]
    %v41 = vlaneseq
    %v42 = vand.u32 %v41, 127
    %43 = vset.pattern.permute.xlu0 0
    %44 = vperm.xlu0 %43, %v39
    %v45 = vpop.permute.xlu0 %44
    %46 = vset.pattern.permute.xlu0 0
    %47 = vperm.xlu0 %46, %v40
    %v48 = vpop.permute.xlu0 %47
    %vm49 = vcmp.eq.s32.totalorder %v42, %v45
    %vm50 = vcmp.eq.s32.totalorder %v42, %v48
    %51 = vset.pattern.permute.xlu0 1
    %52 = vperm.xlu0 %51, %v39
    %v53 = vpop.permute.xlu0 %52
    %54 = vset.pattern.permute.xlu0 1
    %55 = vperm.xlu0 %54, %v40
    %v56 = vpop.permute.xlu0 %55
    %vm57 = vcmp.eq.s32.totalorder %v42, %v53
    %vm58 = vcmp.eq.s32.totalorder %v42, %v56
    %vm59 = vmor %vm49, %vm57
    %vm60 = vmor %vm50, %vm58
    %v61 = vsel %vm59, 1, 0
    %v62 = vsel %vm60, 1, 0
    %v63 = vcvt.s32.f32 %v61
    %v64 = vcvt.s32.f32 %v62
    %v65 = vld [vmem:[%s2] sm:$0xff]
    %v66 = vld [vmem:[%s2 + $0x8] sm:$0xff]
    %v67 = vld [vmem:[%s2 + $0x10] sm:$0xff]
    %v68 = vld [vmem:[%s2 + $0x18] sm:$0xff]
    %v69 = vld [vmem:[%s2 + $0x20] sm:$0xff]
    %vm70 = vcmask 326656
    %v72 = vsel %vm70, %v63, 0
    %v75 = vsel %vm70, %v64, 0
    %77 = vmatpush.msra.mxu0 0.0
    %78 = vmatpush.msra.mxu0 0.0
    %79 = vmatpush.msra.mxu0 0.0
    %80 = vmatpush.msra.mxu0 0.0
    %81 = vmatpush.msra.mxu0 0.0
    %82 = vmatpush.msra.mxu0 0.0
    %83 = vmatpush.msra.mxu0 0.0
    %84 = vmatpush.msra.mxu0 0.0
    %85 = vmatpush.msra.mxu0 0.0
    %86 = vmatpush.msra.mxu0 0.0
    %87 = vmatpush.msra.mxu0 0.0
    %88 = vmatpush.msra.mxu0 %v69
    %89 = vmatpush.msra.mxu0 %v68
    %90 = vmatpush.msra.mxu0 %v67
    %91 = vmatpush.msra.mxu0 %v66
    %92 = vmatpush.msra.mxu0 %v65
    %93 = vmatmul.f32.gmra.mxu0 %v72
    %v94 = vpop.f32.mrf.mxu0
    %v95 = vadd.f32 0.0, %v94
    %96 = vmatmul.f32.gmra.mxu0 %v75
    %v97 = vpop.f32.mrf.mxu0
    %v98 = vadd.f32 0.0, %v97
    %99 = vdwg.mxu0
    %v100 = vld [vmem:[%s1] sm:$0xff]
    %v101 = vld [vmem:[%s1 + $0x8] sm:$0xff]
    %v102 = vld [vmem:[%s8] sm:$0xff]
    %v103 = vld [vmem:[%s4] sm:$0xff]
    %v104 = vld [vmem:[%s4 + $0x8] sm:$0xff]
    %v105 = vld [vmem:[%s4 + $0x10] sm:$0xff]
    %v106 = vld [vmem:[%s4 + $0x18] sm:$0xff]
    %vm107 = vcmask 261120
    %v108 = vsel %vm107, %v95, 0.0
    %109 = vadd.xlane.f32.xlu0 %v108
    %v110 = vpop.xlane.xlu0 %109
    %v111 = vsel %vm107, %v98, 0.0
    %112 = vadd.xlane.f32.xlu0 %v111
    %v113 = vpop.xlane.xlu0 %112
    %v114 = vrcp.pop 32.0
    %v115 = vmul.f32 32.0, %v114
    %v116 = vsub.f32 1.0, %v115
    %v117 = vmul.f32 %v114, %v116
    %v118 = vadd.f32 %v114, %v117
    %vm119 = vweird.f32 %v114
    %v120 = vsel %vm119, %v114, %v118
    %v121 = vmul.f32 %v110, %v120
    %v122 = vmul.f32 %v113, %v120
    %v123 = vsub.f32 %v95, %v121
    %v124 = vsub.f32 %v98, %v122
    %v125 = vmul.f32 %v123, %v123
    %v126 = vmul.f32 %v124, %v124
    %v127 = vsel %vm107, %v125, 0.0
    %128 = vadd.xlane.f32.xlu0 %v127
    %v129 = vpop.xlane.xlu0 %128
    %v130 = vsel %vm107, %v126, 0.0
    %131 = vadd.xlane.f32.xlu0 %v130
    %v132 = vpop.xlane.xlu0 %131
    %v133 = vmul.f32 %v129, %v120
    %v134 = vmul.f32 %v132, %v120
    %v135 = vadd.f32 %v133, 1e-05
    %v136 = vadd.f32 %v134, 1e-05
    %v137 = vrsqrt.pop %v135
    %v138 = vmul.f32 %v137, %v135
    %v139 = vmul.f32 %v138, %v137
    %v140 = vmul.f32 0.5, %v139
    %v141 = vsub.f32 1.5, %v140
    %v142 = vmul.f32 %v137, %v141
    %vm143 = vweird.f32 %v135
    %vm144 = vweird.f32 %v137
    %vm145 = vmor %vm143, %vm144
    %v146 = vsel %vm145, %v137, %v142
    %v147 = vrsqrt.pop %v136
    %v148 = vmul.f32 %v147, %v136
    %v149 = vmul.f32 %v148, %v147
    %v150 = vmul.f32 0.5, %v149
    %v151 = vsub.f32 1.5, %v150
    %v152 = vmul.f32 %v147, %v151
    %vm153 = vweird.f32 %v136
    %vm154 = vweird.f32 %v147
    %vm155 = vmor %vm153, %vm154
    %v156 = vsel %vm155, %v147, %v152
    %v157 = vmul.f32 %v123, %v146
    %v158 = vmul.f32 %v124, %v156
    %v159 = vperm.slane %v102, 0
    %v160 = vmul.f32 %v157, %v159
    %v161 = vmul.f32 %v158, %v159
    %v162 = vperm.slane %v102, 1
    %v163 = vadd.f32 %v160, %v162
    %v164 = vadd.f32 %v161, %v162
    %v165 = vld [vmem:[%s3] sm:$0xff]
    %v166 = vld [vmem:[%s3 + $0x8] sm:$0xff]
    %v167 = vld [vmem:[%s3 + $0x10] sm:$0xff]
    %v168 = vld [vmem:[%s3 + $0x18] sm:$0xff]
    %v170 = vsel %vm107, %v163, 0
    %v173 = vsel %vm107, %v164, 0
    %175 = vmatpush.msra.mxu0 0.0
    %176 = vmatpush.msra.mxu0 0.0
    %177 = vmatpush.msra.mxu0 0.0
    %178 = vmatpush.msra.mxu0 0.0
    %179 = vmatpush.msra.mxu0 0.0
    %180 = vmatpush.msra.mxu0 0.0
    %181 = vmatpush.msra.mxu0 0.0
    %182 = vmatpush.msra.mxu0 0.0
    %183 = vmatpush.msra.mxu0 0.0
    %184 = vmatpush.msra.mxu0 0.0
    %185 = vmatpush.msra.mxu0 0.0
    %186 = vmatpush.msra.mxu0 0.0
    %187 = vmatpush.msra.mxu0 %v168
    %188 = vmatpush.msra.mxu0 %v167
    %189 = vmatpush.msra.mxu0 %v166
    %190 = vmatpush.msra.mxu0 %v165
    %191 = vmatmul.f32.gmra.mxu0 %v170
    %v192 = vpop.f32.mrf.mxu0
    %v193 = vadd.f32 0.0, %v192
    %194 = vmatmul.f32.gmra.mxu0 %v173
    %v195 = vpop.f32.mrf.mxu0
    %v196 = vadd.f32 0.0, %v195
    %197 = vdwg.mxu0
    %s198 = scalar_lea.vmem %s3, 128
    %v199 = vld [vmem:[%s198] sm:$0xff]
    %v200 = vld [vmem:[%s198 + $0x8] sm:$0xff]
    %v201 = vld [vmem:[%s198 + $0x10] sm:$0xff]
    %v202 = vld [vmem:[%s198 + $0x18] sm:$0xff]
    %203 = vmatpush.msra.mxu0 0.0
    %204 = vmatpush.msra.mxu0 0.0
    %205 = vmatpush.msra.mxu0 0.0
    %206 = vmatpush.msra.mxu0 0.0
    %207 = vmatpush.msra.mxu0 0.0
    %208 = vmatpush.msra.mxu0 0.0
    %209 = vmatpush.msra.mxu0 0.0
    %210 = vmatpush.msra.mxu0 0.0
    %211 = vmatpush.msra.mxu0 0.0
    %212 = vmatpush.msra.mxu0 0.0
    %213 = vmatpush.msra.mxu0 0.0
    %214 = vmatpush.msra.mxu0 0.0
    %215 = vmatpush.msra.mxu0 %v202
    %216 = vmatpush.msra.mxu0 %v201
    %217 = vmatpush.msra.mxu0 %v200
    %218 = vmatpush.msra.mxu0 %v199
    %219 = vmatmul.f32.gmra.mxu0 %v170
    %v220 = vpop.f32.mrf.mxu0
    %v221 = vadd.f32 0.0, %v220
    %222 = vmatmul.f32.gmra.mxu0 %v173
    %v223 = vpop.f32.mrf.mxu0
    %v224 = vadd.f32 0.0, %v223
    %225 = vdwg.mxu0
    %s226 = scalar_lea.vmem %s3, 256
    %v227 = vld [vmem:[%s226] sm:$0xff]
    %v228 = vld [vmem:[%s226 + $0x8] sm:$0xff]
    %v229 = vld [vmem:[%s226 + $0x10] sm:$0xff]
    %v230 = vld [vmem:[%s226 + $0x18] sm:$0xff]
    %231 = vmatpush.msra.mxu0 0.0
    %232 = vmatpush.msra.mxu0 0.0
    %233 = vmatpush.msra.mxu0 0.0
    %234 = vmatpush.msra.mxu0 0.0
    %235 = vmatpush.msra.mxu0 0.0
    %236 = vmatpush.msra.mxu0 0.0
    %237 = vmatpush.msra.mxu0 0.0
    %238 = vmatpush.msra.mxu0 0.0
    %239 = vmatpush.msra.mxu0 0.0
    %240 = vmatpush.msra.mxu0 0.0
    %241 = vmatpush.msra.mxu0 0.0
    %242 = vmatpush.msra.mxu0 0.0
    %243 = vmatpush.msra.mxu0 %v230
    %244 = vmatpush.msra.mxu0 %v229
    %245 = vmatpush.msra.mxu0 %v228
    %246 = vmatpush.msra.mxu0 %v227
    %247 = vmatmul.f32.gmra.mxu0 %v170
    %v248 = vpop.f32.mrf.mxu0
    %v249 = vadd.f32 0.0, %v248
    %250 = vmatmul.f32.gmra.mxu0 %v173
    %v251 = vpop.f32.mrf.mxu0
    %v252 = vadd.f32 0.0, %v251
    %253 = vdwg.mxu0
    %vm254 = vcmask 64512
    %v256 = vsel %vm254, %v193, 0
    %v259 = vsel %vm254, %v196, 0
    %v262 = vsel %vm254, %v221, 0
    %v265 = vsel %vm254, %v224, 0
    %267 = vmatpush.xpose.msra.mxu0 0.0
    %268 = vmatpush.xpose.msra.mxu0 0.0
    %269 = vmatpush.xpose.msra.mxu0 0.0
    %270 = vmatpush.xpose.msra.mxu0 0.0
    %271 = vmatpush.xpose.msra.mxu0 0.0
    %272 = vmatpush.xpose.msra.mxu0 0.0
    %273 = vmatpush.xpose.msra.mxu0 0.0
    %274 = vmatpush.xpose.msra.mxu0 0.0
    %275 = vmatpush.xpose.msra.mxu0 0.0
    %276 = vmatpush.xpose.msra.mxu0 0.0
    %277 = vmatpush.xpose.msra.mxu0 0.0
    %278 = vmatpush.xpose.msra.mxu0 0.0
    %279 = vmatpush.xpose.msra.mxu0 0.0
    %280 = vmatpush.xpose.msra.mxu0 0.0
    %281 = vmatpush.xpose.msra.mxu0 %v265
    %282 = vmatpush.xpose.msra.mxu0 %v262
    %283 = vmatmul.f32.gmra.mxu0 %v256
    %v284 = vpop.f32.mrf.mxu0
    %v285 = vadd.f32 %v100, %v284
    %286 = vmatmul.f32.gmra.mxu0 %v259
    %v287 = vpop.f32.mrf.mxu0
    %v288 = vadd.f32 %v101, %v287
    %289 = vdwg.mxu0
    %vm290 = vcmask 130048
    %v291 = vsel %vm290, %v285, -inf
    %292 = vmax.xlane.f32.xlu0 %v291
    %v293 = vpop.xlane.xlu0 %292
    %v294 = vsel %vm290, %v288, -inf
    %295 = vmax.xlane.f32.xlu0 %v294
    %v296 = vpop.xlane.xlu0 %295
    %v297 = vsub.f32 %v285, %v293
    %v298 = vsub.f32 %v288, %v296
    %v299 = vmul.f32 %v297, 1.442695
    %v300 = vpow.pop %v299
    %v301 = vmul.f32 %v298, 1.442695
    %v302 = vpow.pop %v301
    %v303 = vsel %vm290, %v300, 0.0
    %304 = vadd.xlane.f32.xlu0 %v303
    %v305 = vpop.xlane.xlu0 %304
    %v306 = vsel %vm290, %v302, 0.0
    %307 = vadd.xlane.f32.xlu0 %v306
    %v308 = vpop.xlane.xlu0 %307
    %v309 = vrcp.pop %v305
    %v310 = vrcp.pop %v308
    %v311 = vmul.f32 %v300, %v309
    %v312 = vmul.f32 %v302, %v310
    %v314 = vsel %vm290, %v311, 0
    %v317 = vsel %vm290, %v312, 0
    %319 = vmatpush.msra.mxu0 0.0
    %320 = vmatpush.msra.mxu0 0.0
    %321 = vmatpush.msra.mxu0 0.0
    %322 = vmatpush.msra.mxu0 0.0
    %323 = vmatpush.msra.mxu0 0.0
    %324 = vmatpush.msra.mxu0 0.0
    %325 = vmatpush.msra.mxu0 0.0
    %326 = vmatpush.msra.mxu0 0.0
    %327 = vmatpush.msra.mxu0 0.0
    %328 = vmatpush.msra.mxu0 0.0
    %329 = vmatpush.msra.mxu0 0.0
    %330 = vmatpush.msra.mxu0 0.0
    %331 = vmatpush.msra.mxu0 0.0
    %332 = vmatpush.msra.mxu0 0.0
    %333 = vmatpush.msra.mxu0 %v252
    %334 = vmatpush.msra.mxu0 %v249
    %335 = vmatmul.f32.gmra.mxu0 %v314
    %v336 = vpop.f32.mrf.mxu0
    %v337 = vadd.f32 0.0, %v336
    %338 = vmatmul.f32.gmra.mxu0 %v317
    %v339 = vpop.f32.mrf.mxu0
    %v340 = vadd.f32 0.0, %v339
    %341 = vdwg.mxu0
    %s342 = scalar_lea.vmem %s3, 32
    %v343 = vld [vmem:[%s342] sm:$0xff]
    %v344 = vld [vmem:[%s342 + $0x8] sm:$0xff]
    %v345 = vld [vmem:[%s342 + $0x10] sm:$0xff]
    %v346 = vld [vmem:[%s342 + $0x18] sm:$0xff]
    %347 = vmatpush.msra.mxu0 0.0
    %348 = vmatpush.msra.mxu0 0.0
    %349 = vmatpush.msra.mxu0 0.0
    %350 = vmatpush.msra.mxu0 0.0
    %351 = vmatpush.msra.mxu0 0.0
    %352 = vmatpush.msra.mxu0 0.0
    %353 = vmatpush.msra.mxu0 0.0
    %354 = vmatpush.msra.mxu0 0.0
    %355 = vmatpush.msra.mxu0 0.0
    %356 = vmatpush.msra.mxu0 0.0
    %357 = vmatpush.msra.mxu0 0.0
    %358 = vmatpush.msra.mxu0 0.0
    %359 = vmatpush.msra.mxu0 %v346
    %360 = vmatpush.msra.mxu0 %v345
    %361 = vmatpush.msra.mxu0 %v344
    %362 = vmatpush.msra.mxu0 %v343
    %363 = vmatmul.f32.gmra.mxu0 %v170
    %v364 = vpop.f32.mrf.mxu0
    %v365 = vadd.f32 0.0, %v364
    %366 = vmatmul.f32.gmra.mxu0 %v173
    %v367 = vpop.f32.mrf.mxu0
    %v368 = vadd.f32 0.0, %v367
    %369 = vdwg.mxu0
    %s370 = scalar_lea.vmem %s3, 160
    %v371 = vld [vmem:[%s370] sm:$0xff]
    %v372 = vld [vmem:[%s370 + $0x8] sm:$0xff]
    %v373 = vld [vmem:[%s370 + $0x10] sm:$0xff]
    %v374 = vld [vmem:[%s370 + $0x18] sm:$0xff]
    %375 = vmatpush.msra.mxu0 0.0
    %376 = vmatpush.msra.mxu0 0.0
    %377 = vmatpush.msra.mxu0 0.0
    %378 = vmatpush.msra.mxu0 0.0
    %379 = vmatpush.msra.mxu0 0.0
    %380 = vmatpush.msra.mxu0 0.0
    %381 = vmatpush.msra.mxu0 0.0
    %382 = vmatpush.msra.mxu0 0.0
    %383 = vmatpush.msra.mxu0 0.0
    %384 = vmatpush.msra.mxu0 0.0
    %385 = vmatpush.msra.mxu0 0.0
    %386 = vmatpush.msra.mxu0 0.0
    %387 = vmatpush.msra.mxu0 %v374
    %388 = vmatpush.msra.mxu0 %v373
    %389 = vmatpush.msra.mxu0 %v372
    %390 = vmatpush.msra.mxu0 %v371
    %391 = vmatmul.f32.gmra.mxu0 %v170
    %v392 = vpop.f32.mrf.mxu0
    %v393 = vadd.f32 0.0, %v392
    %394 = vmatmul.f32.gmra.mxu0 %v173
    %v395 = vpop.f32.mrf.mxu0
    %v396 = vadd.f32 0.0, %v395
    %397 = vdwg.mxu0
    %s398 = scalar_lea.vmem %s3, 288
    %v399 = vld [vmem:[%s398] sm:$0xff]
    %v400 = vld [vmem:[%s398 + $0x8] sm:$0xff]
    %v401 = vld [vmem:[%s398 + $0x10] sm:$0xff]
    %v402 = vld [vmem:[%s398 + $0x18] sm:$0xff]
    %403 = vmatpush.msra.mxu0 0.0
    %404 = vmatpush.msra.mxu0 0.0
    %405 = vmatpush.msra.mxu0 0.0
    %406 = vmatpush.msra.mxu0 0.0
    %407 = vmatpush.msra.mxu0 0.0
    %408 = vmatpush.msra.mxu0 0.0
    %409 = vmatpush.msra.mxu0 0.0
    %410 = vmatpush.msra.mxu0 0.0
    %411 = vmatpush.msra.mxu0 0.0
    %412 = vmatpush.msra.mxu0 0.0
    %413 = vmatpush.msra.mxu0 0.0
    %414 = vmatpush.msra.mxu0 0.0
    %415 = vmatpush.msra.mxu0 %v402
    %416 = vmatpush.msra.mxu0 %v401
    %417 = vmatpush.msra.mxu0 %v400
    %418 = vmatpush.msra.mxu0 %v399
    %419 = vmatmul.f32.gmra.mxu0 %v170
    %v420 = vpop.f32.mrf.mxu0
    %v421 = vadd.f32 0.0, %v420
    %422 = vmatmul.f32.gmra.mxu0 %v173
    %v423 = vpop.f32.mrf.mxu0
    %v424 = vadd.f32 0.0, %v423
    %425 = vdwg.mxu0
    %v427 = vsel %vm254, %v365, 0
    %v430 = vsel %vm254, %v368, 0
    %v433 = vsel %vm254, %v393, 0
    %v436 = vsel %vm254, %v396, 0
    %438 = vmatpush.xpose.msra.mxu0 0.0
    %439 = vmatpush.xpose.msra.mxu0 0.0
    %440 = vmatpush.xpose.msra.mxu0 0.0
    %441 = vmatpush.xpose.msra.mxu0 0.0
    %442 = vmatpush.xpose.msra.mxu0 0.0
    %443 = vmatpush.xpose.msra.mxu0 0.0
    %444 = vmatpush.xpose.msra.mxu0 0.0
    %445 = vmatpush.xpose.msra.mxu0 0.0
    %446 = vmatpush.xpose.msra.mxu0 0.0
    %447 = vmatpush.xpose.msra.mxu0 0.0
    %448 = vmatpush.xpose.msra.mxu0 0.0
    %449 = vmatpush.xpose.msra.mxu0 0.0
    %450 = vmatpush.xpose.msra.mxu0 0.0
    %451 = vmatpush.xpose.msra.mxu0 0.0
    %452 = vmatpush.xpose.msra.mxu0 %v436
    %453 = vmatpush.xpose.msra.mxu0 %v433
    %454 = vmatmul.f32.gmra.mxu0 %v427
    %v455 = vpop.f32.mrf.mxu0
    %v456 = vadd.f32 %v100, %v455
    %457 = vmatmul.f32.gmra.mxu0 %v430
    %v458 = vpop.f32.mrf.mxu0
    %v459 = vadd.f32 %v101, %v458
    %460 = vdwg.mxu0
    %v461 = vsel %vm290, %v456, -inf
    %462 = vmax.xlane.f32.xlu0 %v461
    %v463 = vpop.xlane.xlu0 %462
    %v464 = vsel %vm290, %v459, -inf
    %465 = vmax.xlane.f32.xlu0 %v464
    %v466 = vpop.xlane.xlu0 %465
    %v467 = vsub.f32 %v456, %v463
    %v468 = vsub.f32 %v459, %v466
    %v469 = vmul.f32 %v467, 1.442695
    %v470 = vpow.pop %v469
    %v471 = vmul.f32 %v468, 1.442695
    %v472 = vpow.pop %v471
    %v473 = vsel %vm290, %v470, 0.0
    %474 = vadd.xlane.f32.xlu0 %v473
    %v475 = vpop.xlane.xlu0 %474
    %v476 = vsel %vm290, %v472, 0.0
    %477 = vadd.xlane.f32.xlu0 %v476
    %v478 = vpop.xlane.xlu0 %477
    %v479 = vrcp.pop %v475
    %v480 = vrcp.pop %v478
    %v481 = vmul.f32 %v470, %v479
    %v482 = vmul.f32 %v472, %v480
    %v484 = vsel %vm290, %v481, 0
    %v487 = vsel %vm290, %v482, 0
    %489 = vmatpush.msra.mxu0 0.0
    %490 = vmatpush.msra.mxu0 0.0
    %491 = vmatpush.msra.mxu0 0.0
    %492 = vmatpush.msra.mxu0 0.0
    %493 = vmatpush.msra.mxu0 0.0
    %494 = vmatpush.msra.mxu0 0.0
    %495 = vmatpush.msra.mxu0 0.0
    %496 = vmatpush.msra.mxu0 0.0
    %497 = vmatpush.msra.mxu0 0.0
    %498 = vmatpush.msra.mxu0 0.0
    %499 = vmatpush.msra.mxu0 0.0
    %500 = vmatpush.msra.mxu0 0.0
    %501 = vmatpush.msra.mxu0 0.0
    %502 = vmatpush.msra.mxu0 0.0
    %503 = vmatpush.msra.mxu0 %v424
    %504 = vmatpush.msra.mxu0 %v421
    %505 = vmatmul.f32.gmra.mxu0 %v484
    %v506 = vpop.f32.mrf.mxu0
    %v507 = vadd.f32 0.0, %v506
    %508 = vmatmul.f32.gmra.mxu0 %v487
    %v509 = vpop.f32.mrf.mxu0
    %v510 = vadd.f32 0.0, %v509
    %511 = vdwg.mxu0
    %v513 = vsel %vm254, %v507, 0
    %v516 = vsel %vm254, %v510, 0
    %518 = vmatpush.msra.mxu0 0.0
    %519 = vmatpush.msra.mxu0 0.0
    %520 = vmatpush.msra.mxu0 0.0
    %521 = vmatpush.msra.mxu0 0.0
    %522 = vmatpush.msra.mxu0 0.0
    %523 = vmatpush.msra.mxu0 0.0
    %524 = vmatpush.msra.mxu0 0.0
    %525 = vmatpush.msra.mxu0 0.0
    %526 = vmatpush.msra.mxu0 0.0
    %527 = vmatpush.msra.mxu0 0.0
    %528 = vmatpush.msra.mxu0 0.0
    %529 = vmatpush.msra.mxu0 0.0
    %530 = vmatpush.msra.mxu0 0.0
    %531 = vmatpush.msra.mxu0 0.0
    %532 = vmatpush.msra.mxu0 0.0
    %533 = vmatpush.msra.mxu0 %v104
    %534 = vmatmul.f32.gmra.mxu0 %v513
    %v535 = vpop.f32.mrf.mxu0
    %v536 = vadd.f32 0.0, %v535
    %537 = vmatmul.f32.gmra.mxu0 %v516
    %v538 = vpop.f32.mrf.mxu0
    %v539 = vadd.f32 0.0, %v538
    %540 = vdwg.mxu0
    %v542 = vsel %vm254, %v337, 0
    %v545 = vsel %vm254, %v340, 0
    %547 = vmatpush.msra.mxu0 0.0
    %548 = vmatpush.msra.mxu0 0.0
    %549 = vmatpush.msra.mxu0 0.0
    %550 = vmatpush.msra.mxu0 0.0
    %551 = vmatpush.msra.mxu0 0.0
    %552 = vmatpush.msra.mxu0 0.0
    %553 = vmatpush.msra.mxu0 0.0
    %554 = vmatpush.msra.mxu0 0.0
    %555 = vmatpush.msra.mxu0 0.0
    %556 = vmatpush.msra.mxu0 0.0
    %557 = vmatpush.msra.mxu0 0.0
    %558 = vmatpush.msra.mxu0 0.0
    %559 = vmatpush.msra.mxu0 0.0
    %560 = vmatpush.msra.mxu0 0.0
    %561 = vmatpush.msra.mxu0 0.0
    %562 = vmatpush.msra.mxu0 %v103
    %563 = vmatmul.f32.gmra.mxu0 %v542
    %v564 = vpop.f32.mrf.mxu0
    %v565 = vadd.f32 %v536, %v564
    %566 = vmatmul.f32.gmra.mxu0 %v545
    %v567 = vpop.f32.mrf.mxu0
    %v568 = vadd.f32 %v539, %v567
    %569 = vdwg.mxu0
    %s570 = scalar_lea.vmem %s3, 64
    %v571 = vld [vmem:[%s570] sm:$0xff]
    %v572 = vld [vmem:[%s570 + $0x8] sm:$0xff]
    %v573 = vld [vmem:[%s570 + $0x10] sm:$0xff]
    %v574 = vld [vmem:[%s570 + $0x18] sm:$0xff]
    %575 = vmatpush.msra.mxu0 0.0
    %576 = vmatpush.msra.mxu0 0.0
    %577 = vmatpush.msra.mxu0 0.0
    %578 = vmatpush.msra.mxu0 0.0
    %579 = vmatpush.msra.mxu0 0.0
    %580 = vmatpush.msra.mxu0 0.0
    %581 = vmatpush.msra.mxu0 0.0
    %582 = vmatpush.msra.mxu0 0.0
    %583 = vmatpush.msra.mxu0 0.0
    %584 = vmatpush.msra.mxu0 0.0
    %585 = vmatpush.msra.mxu0 0.0
    %586 = vmatpush.msra.mxu0 0.0
    %587 = vmatpush.msra.mxu0 %v574
    %588 = vmatpush.msra.mxu0 %v573
    %589 = vmatpush.msra.mxu0 %v572
    %590 = vmatpush.msra.mxu0 %v571
    %591 = vmatmul.f32.gmra.mxu0 %v170
    %v592 = vpop.f32.mrf.mxu0
    %v593 = vadd.f32 0.0, %v592
    %594 = vmatmul.f32.gmra.mxu0 %v173
    %v595 = vpop.f32.mrf.mxu0
    %v596 = vadd.f32 0.0, %v595
    %597 = vdwg.mxu0
    %s598 = scalar_lea.vmem %s3, 192
    %v599 = vld [vmem:[%s598] sm:$0xff]
    %v600 = vld [vmem:[%s598 + $0x8] sm:$0xff]
    %v601 = vld [vmem:[%s598 + $0x10] sm:$0xff]
    %v602 = vld [vmem:[%s598 + $0x18] sm:$0xff]
    %603 = vmatpush.msra.mxu0 0.0
    %604 = vmatpush.msra.mxu0 0.0
    %605 = vmatpush.msra.mxu0 0.0
    %606 = vmatpush.msra.mxu0 0.0
    %607 = vmatpush.msra.mxu0 0.0
    %608 = vmatpush.msra.mxu0 0.0
    %609 = vmatpush.msra.mxu0 0.0
    %610 = vmatpush.msra.mxu0 0.0
    %611 = vmatpush.msra.mxu0 0.0
    %612 = vmatpush.msra.mxu0 0.0
    %613 = vmatpush.msra.mxu0 0.0
    %614 = vmatpush.msra.mxu0 0.0
    %615 = vmatpush.msra.mxu0 %v602
    %616 = vmatpush.msra.mxu0 %v601
    %617 = vmatpush.msra.mxu0 %v600
    %618 = vmatpush.msra.mxu0 %v599
    %619 = vmatmul.f32.gmra.mxu0 %v170
    %v620 = vpop.f32.mrf.mxu0
    %v621 = vadd.f32 0.0, %v620
    %622 = vmatmul.f32.gmra.mxu0 %v173
    %v623 = vpop.f32.mrf.mxu0
    %v624 = vadd.f32 0.0, %v623
    %625 = vdwg.mxu0
    %s626 = scalar_lea.vmem %s3, 320
    %v627 = vld [vmem:[%s626] sm:$0xff]
    %v628 = vld [vmem:[%s626 + $0x8] sm:$0xff]
    %v629 = vld [vmem:[%s626 + $0x10] sm:$0xff]
    %v630 = vld [vmem:[%s626 + $0x18] sm:$0xff]
    %631 = vmatpush.msra.mxu0 0.0
    %632 = vmatpush.msra.mxu0 0.0
    %633 = vmatpush.msra.mxu0 0.0
    %634 = vmatpush.msra.mxu0 0.0
    %635 = vmatpush.msra.mxu0 0.0
    %636 = vmatpush.msra.mxu0 0.0
    %637 = vmatpush.msra.mxu0 0.0
    %638 = vmatpush.msra.mxu0 0.0
    %639 = vmatpush.msra.mxu0 0.0
    %640 = vmatpush.msra.mxu0 0.0
    %641 = vmatpush.msra.mxu0 0.0
    %642 = vmatpush.msra.mxu0 0.0
    %643 = vmatpush.msra.mxu0 %v630
    %644 = vmatpush.msra.mxu0 %v629
    %645 = vmatpush.msra.mxu0 %v628
    %646 = vmatpush.msra.mxu0 %v627
    %647 = vmatmul.f32.gmra.mxu0 %v170
    %v648 = vpop.f32.mrf.mxu0
    %v649 = vadd.f32 0.0, %v648
    %650 = vmatmul.f32.gmra.mxu0 %v173
    %v651 = vpop.f32.mrf.mxu0
    %v652 = vadd.f32 0.0, %v651
    %653 = vdwg.mxu0
    %v655 = vsel %vm254, %v593, 0
    %v658 = vsel %vm254, %v596, 0
    %v661 = vsel %vm254, %v621, 0
    %v664 = vsel %vm254, %v624, 0
    %666 = vmatpush.xpose.msra.mxu0 0.0
    %667 = vmatpush.xpose.msra.mxu0 0.0
    %668 = vmatpush.xpose.msra.mxu0 0.0
    %669 = vmatpush.xpose.msra.mxu0 0.0
    %670 = vmatpush.xpose.msra.mxu0 0.0
    %671 = vmatpush.xpose.msra.mxu0 0.0
    %672 = vmatpush.xpose.msra.mxu0 0.0
    %673 = vmatpush.xpose.msra.mxu0 0.0
    %674 = vmatpush.xpose.msra.mxu0 0.0
    %675 = vmatpush.xpose.msra.mxu0 0.0
    %676 = vmatpush.xpose.msra.mxu0 0.0
    %677 = vmatpush.xpose.msra.mxu0 0.0
    %678 = vmatpush.xpose.msra.mxu0 0.0
    %679 = vmatpush.xpose.msra.mxu0 0.0
    %680 = vmatpush.xpose.msra.mxu0 %v664
    %681 = vmatpush.xpose.msra.mxu0 %v661
    %682 = vmatmul.f32.gmra.mxu0 %v655
    %v683 = vpop.f32.mrf.mxu0
    %v684 = vadd.f32 %v100, %v683
    %685 = vmatmul.f32.gmra.mxu0 %v658
    %v686 = vpop.f32.mrf.mxu0
    %v687 = vadd.f32 %v101, %v686
    %688 = vdwg.mxu0
    %v689 = vsel %vm290, %v684, -inf
    %690 = vmax.xlane.f32.xlu0 %v689
    %v691 = vpop.xlane.xlu0 %690
    %v692 = vsel %vm290, %v687, -inf
    %693 = vmax.xlane.f32.xlu0 %v692
    %v694 = vpop.xlane.xlu0 %693
    %v695 = vsub.f32 %v684, %v691
    %v696 = vsub.f32 %v687, %v694
    %v697 = vmul.f32 %v695, 1.442695
    %v698 = vpow.pop %v697
    %v699 = vmul.f32 %v696, 1.442695
    %v700 = vpow.pop %v699
    %v701 = vsel %vm290, %v698, 0.0
    %702 = vadd.xlane.f32.xlu0 %v701
    %v703 = vpop.xlane.xlu0 %702
    %v704 = vsel %vm290, %v700, 0.0
    %705 = vadd.xlane.f32.xlu0 %v704
    %v706 = vpop.xlane.xlu0 %705
    %v707 = vrcp.pop %v703
    %v708 = vrcp.pop %v706
    %v709 = vmul.f32 %v698, %v707
    %v710 = vmul.f32 %v700, %v708
    %v712 = vsel %vm290, %v709, 0
    %v715 = vsel %vm290, %v710, 0
    %717 = vmatpush.msra.mxu0 0.0
    %718 = vmatpush.msra.mxu0 0.0
    %719 = vmatpush.msra.mxu0 0.0
    %720 = vmatpush.msra.mxu0 0.0
    %721 = vmatpush.msra.mxu0 0.0
    %722 = vmatpush.msra.mxu0 0.0
    %723 = vmatpush.msra.mxu0 0.0
    %724 = vmatpush.msra.mxu0 0.0
    %725 = vmatpush.msra.mxu0 0.0
    %726 = vmatpush.msra.mxu0 0.0
    %727 = vmatpush.msra.mxu0 0.0
    %728 = vmatpush.msra.mxu0 0.0
    %729 = vmatpush.msra.mxu0 0.0
    %730 = vmatpush.msra.mxu0 0.0
    %731 = vmatpush.msra.mxu0 %v652
    %732 = vmatpush.msra.mxu0 %v649
    %733 = vmatmul.f32.gmra.mxu0 %v712
    %v734 = vpop.f32.mrf.mxu0
    %v735 = vadd.f32 0.0, %v734
    %736 = vmatmul.f32.gmra.mxu0 %v715
    %v737 = vpop.f32.mrf.mxu0
    %v738 = vadd.f32 0.0, %v737
    %739 = vdwg.mxu0
    %v741 = vsel %vm254, %v735, 0
    %v744 = vsel %vm254, %v738, 0
    %746 = vmatpush.msra.mxu0 0.0
    %747 = vmatpush.msra.mxu0 0.0
    %748 = vmatpush.msra.mxu0 0.0
    %749 = vmatpush.msra.mxu0 0.0
    %750 = vmatpush.msra.mxu0 0.0
    %751 = vmatpush.msra.mxu0 0.0
    %752 = vmatpush.msra.mxu0 0.0
    %753 = vmatpush.msra.mxu0 0.0
    %754 = vmatpush.msra.mxu0 0.0
    %755 = vmatpush.msra.mxu0 0.0
    %756 = vmatpush.msra.mxu0 0.0
    %757 = vmatpush.msra.mxu0 0.0
    %758 = vmatpush.msra.mxu0 0.0
    %759 = vmatpush.msra.mxu0 0.0
    %760 = vmatpush.msra.mxu0 0.0
    %761 = vmatpush.msra.mxu0 %v105
    %762 = vmatmul.f32.gmra.mxu0 %v741
    %v763 = vpop.f32.mrf.mxu0
    %v764 = vadd.f32 0.0, %v763
    %765 = vmatmul.f32.gmra.mxu0 %v744
    %v766 = vpop.f32.mrf.mxu0
    %v767 = vadd.f32 0.0, %v766
    %768 = vdwg.mxu0
    %v769 = vadd.f32 %v565, %v764
    %v770 = vadd.f32 %v568, %v767
    %s771 = scalar_lea.vmem %s3, 96
    %v772 = vld [vmem:[%s771] sm:$0xff]
    %v773 = vld [vmem:[%s771 + $0x8] sm:$0xff]
    %v774 = vld [vmem:[%s771 + $0x10] sm:$0xff]
    %v775 = vld [vmem:[%s771 + $0x18] sm:$0xff]
    %776 = vmatpush.msra.mxu0 0.0
    %777 = vmatpush.msra.mxu0 0.0
    %778 = vmatpush.msra.mxu0 0.0
    %779 = vmatpush.msra.mxu0 0.0
    %780 = vmatpush.msra.mxu0 0.0
    %781 = vmatpush.msra.mxu0 0.0
    %782 = vmatpush.msra.mxu0 0.0
    %783 = vmatpush.msra.mxu0 0.0
    %784 = vmatpush.msra.mxu0 0.0
    %785 = vmatpush.msra.mxu0 0.0
    %786 = vmatpush.msra.mxu0 0.0
    %787 = vmatpush.msra.mxu0 0.0
    %788 = vmatpush.msra.mxu0 %v775
    %789 = vmatpush.msra.mxu0 %v774
    %790 = vmatpush.msra.mxu0 %v773
    %791 = vmatpush.msra.mxu0 %v772
    %792 = vmatmul.f32.gmra.mxu0 %v170
    %v793 = vpop.f32.mrf.mxu0
    %v794 = vadd.f32 0.0, %v793
    %795 = vmatmul.f32.gmra.mxu0 %v173
    %v796 = vpop.f32.mrf.mxu0
    %v797 = vadd.f32 0.0, %v796
    %798 = vdwg.mxu0
    %s799 = scalar_lea.vmem %s3, 224
    %v800 = vld [vmem:[%s799] sm:$0xff]
    %v801 = vld [vmem:[%s799 + $0x8] sm:$0xff]
    %v802 = vld [vmem:[%s799 + $0x10] sm:$0xff]
    %v803 = vld [vmem:[%s799 + $0x18] sm:$0xff]
    %804 = vmatpush.msra.mxu0 0.0
    %805 = vmatpush.msra.mxu0 0.0
    %806 = vmatpush.msra.mxu0 0.0
    %807 = vmatpush.msra.mxu0 0.0
    %808 = vmatpush.msra.mxu0 0.0
    %809 = vmatpush.msra.mxu0 0.0
    %810 = vmatpush.msra.mxu0 0.0
    %811 = vmatpush.msra.mxu0 0.0
    %812 = vmatpush.msra.mxu0 0.0
    %813 = vmatpush.msra.mxu0 0.0
    %814 = vmatpush.msra.mxu0 0.0
    %815 = vmatpush.msra.mxu0 0.0
    %816 = vmatpush.msra.mxu0 %v803
    %817 = vmatpush.msra.mxu0 %v802
    %818 = vmatpush.msra.mxu0 %v801
    %819 = vmatpush.msra.mxu0 %v800
    %820 = vmatmul.f32.gmra.mxu0 %v170
    %v821 = vpop.f32.mrf.mxu0
    %v822 = vadd.f32 0.0, %v821
    %823 = vmatmul.f32.gmra.mxu0 %v173
    %v824 = vpop.f32.mrf.mxu0
    %v825 = vadd.f32 0.0, %v824
    %826 = vdwg.mxu0
    %s827 = scalar_lea.vmem %s3, 352
    %v828 = vld [vmem:[%s827] sm:$0xff]
    %v829 = vld [vmem:[%s827 + $0x8] sm:$0xff]
    %v830 = vld [vmem:[%s827 + $0x10] sm:$0xff]
    %v831 = vld [vmem:[%s827 + $0x18] sm:$0xff]
    %832 = vmatpush.msra.mxu0 0.0
    %833 = vmatpush.msra.mxu0 0.0
    %834 = vmatpush.msra.mxu0 0.0
    %835 = vmatpush.msra.mxu0 0.0
    %836 = vmatpush.msra.mxu0 0.0
    %837 = vmatpush.msra.mxu0 0.0
    %838 = vmatpush.msra.mxu0 0.0
    %839 = vmatpush.msra.mxu0 0.0
    %840 = vmatpush.msra.mxu0 0.0
    %841 = vmatpush.msra.mxu0 0.0
    %842 = vmatpush.msra.mxu0 0.0
    %843 = vmatpush.msra.mxu0 0.0
    %844 = vmatpush.msra.mxu0 %v831
    %845 = vmatpush.msra.mxu0 %v830
    %846 = vmatpush.msra.mxu0 %v829
    %847 = vmatpush.msra.mxu0 %v828
    %848 = vmatmul.f32.gmra.mxu0 %v170
    %v849 = vpop.f32.mrf.mxu0
    %v850 = vadd.f32 0.0, %v849
    %851 = vmatmul.f32.gmra.mxu0 %v173
    %v852 = vpop.f32.mrf.mxu0
    %v853 = vadd.f32 0.0, %v852
    %854 = vdwg.mxu0
    %v856 = vsel %vm254, %v794, 0
    %v859 = vsel %vm254, %v797, 0
    %v862 = vsel %vm254, %v822, 0
    %v865 = vsel %vm254, %v825, 0
    %867 = vmatpush.xpose.msra.mxu0 0.0
    %868 = vmatpush.xpose.msra.mxu0 0.0
    %869 = vmatpush.xpose.msra.mxu0 0.0
    %870 = vmatpush.xpose.msra.mxu0 0.0
    %871 = vmatpush.xpose.msra.mxu0 0.0
    %872 = vmatpush.xpose.msra.mxu0 0.0
    %873 = vmatpush.xpose.msra.mxu0 0.0
    %874 = vmatpush.xpose.msra.mxu0 0.0
    %875 = vmatpush.xpose.msra.mxu0 0.0
    %876 = vmatpush.xpose.msra.mxu0 0.0
    %877 = vmatpush.xpose.msra.mxu0 0.0
    %878 = vmatpush.xpose.msra.mxu0 0.0
    %879 = vmatpush.xpose.msra.mxu0 0.0
    %880 = vmatpush.xpose.msra.mxu0 0.0
    %881 = vmatpush.xpose.msra.mxu0 %v865
    %882 = vmatpush.xpose.msra.mxu0 %v862
    %883 = vmatmul.f32.gmra.mxu0 %v856
    %v884 = vpop.f32.mrf.mxu0
    %v885 = vadd.f32 %v100, %v884
    %886 = vmatmul.f32.gmra.mxu0 %v859
    %v887 = vpop.f32.mrf.mxu0
    %v888 = vadd.f32 %v101, %v887
    %889 = vdwg.mxu0
    %v890 = vsel %vm290, %v885, -inf
    %891 = vmax.xlane.f32.xlu0 %v890
    %v892 = vpop.xlane.xlu0 %891
    %v893 = vsel %vm290, %v888, -inf
    %894 = vmax.xlane.f32.xlu0 %v893
    %v895 = vpop.xlane.xlu0 %894
    %v896 = vsub.f32 %v885, %v892
    %v897 = vsub.f32 %v888, %v895
    %v898 = vmul.f32 %v896, 1.442695
    %v899 = vpow.pop %v898
    %v900 = vmul.f32 %v897, 1.442695
    %v901 = vpow.pop %v900
    %v902 = vsel %vm290, %v899, 0.0
    %903 = vadd.xlane.f32.xlu0 %v902
    %v904 = vpop.xlane.xlu0 %903
    %v905 = vsel %vm290, %v901, 0.0
    %906 = vadd.xlane.f32.xlu0 %v905
    %v907 = vpop.xlane.xlu0 %906
    %v908 = vrcp.pop %v904
    %v909 = vrcp.pop %v907
    %v910 = vmul.f32 %v899, %v908
    %v911 = vmul.f32 %v901, %v909
    %v913 = vsel %vm290, %v910, 0
    %v916 = vsel %vm290, %v911, 0
    %918 = vmatpush.msra.mxu0 0.0
    %919 = vmatpush.msra.mxu0 0.0
    %920 = vmatpush.msra.mxu0 0.0
    %921 = vmatpush.msra.mxu0 0.0
    %922 = vmatpush.msra.mxu0 0.0
    %923 = vmatpush.msra.mxu0 0.0
    %924 = vmatpush.msra.mxu0 0.0
    %925 = vmatpush.msra.mxu0 0.0
    %926 = vmatpush.msra.mxu0 0.0
    %927 = vmatpush.msra.mxu0 0.0
    %928 = vmatpush.msra.mxu0 0.0
    %929 = vmatpush.msra.mxu0 0.0
    %930 = vmatpush.msra.mxu0 0.0
    %931 = vmatpush.msra.mxu0 0.0
    %932 = vmatpush.msra.mxu0 %v853
    %933 = vmatpush.msra.mxu0 %v850
    %934 = vmatmul.f32.gmra.mxu0 %v913
    %v935 = vpop.f32.mrf.mxu0
    %v936 = vadd.f32 0.0, %v935
    %937 = vmatmul.f32.gmra.mxu0 %v916
    %v938 = vpop.f32.mrf.mxu0
    %v939 = vadd.f32 0.0, %v938
    %940 = vdwg.mxu0
    %v942 = vsel %vm254, %v936, 0
    %v945 = vsel %vm254, %v939, 0
    %947 = vmatpush.msra.mxu0 0.0
    %948 = vmatpush.msra.mxu0 0.0
    %949 = vmatpush.msra.mxu0 0.0
    %950 = vmatpush.msra.mxu0 0.0
    %951 = vmatpush.msra.mxu0 0.0
    %952 = vmatpush.msra.mxu0 0.0
    %953 = vmatpush.msra.mxu0 0.0
    %954 = vmatpush.msra.mxu0 0.0
    %955 = vmatpush.msra.mxu0 0.0
    %956 = vmatpush.msra.mxu0 0.0
    %957 = vmatpush.msra.mxu0 0.0
    %958 = vmatpush.msra.mxu0 0.0
    %959 = vmatpush.msra.mxu0 0.0
    %960 = vmatpush.msra.mxu0 0.0
    %961 = vmatpush.msra.mxu0 0.0
    %962 = vmatpush.msra.mxu0 %v106
    %963 = vmatmul.f32.gmra.mxu0 %v942
    %v964 = vpop.f32.mrf.mxu0
    %v965 = vadd.f32 0.0, %v964
    %966 = vmatmul.f32.gmra.mxu0 %v945
    %v967 = vpop.f32.mrf.mxu0
    %v968 = vadd.f32 0.0, %v967
    %969 = vdwg.mxu0
    %v970 = vadd.f32 %v769, %v965
    %v971 = vadd.f32 %v770, %v968
    %v972 = vadd.f32 %v95, %v970
    %v973 = vadd.f32 %v98, %v971
    %v974 = vperm.slane %v102, 4
    %v975 = vadd.f32 %v972, %v974
    %v976 = vadd.f32 %v973, %v974
    %v977 = vsel %vm107, %v975, 0.0
    %978 = vadd.xlane.f32.xlu0 %v977
    %v979 = vpop.xlane.xlu0 %978
    %v980 = vsel %vm107, %v976, 0.0
    %981 = vadd.xlane.f32.xlu0 %v980
    %v982 = vpop.xlane.xlu0 %981
    %v983 = vmul.f32 %v979, %v120
    %v984 = vmul.f32 %v982, %v120
    %v985 = vsub.f32 %v975, %v983
    %v986 = vsub.f32 %v976, %v984
    %v987 = vmul.f32 %v985, %v985
    %v988 = vmul.f32 %v986, %v986
    %v989 = vsel %vm107, %v987, 0.0
    %990 = vadd.xlane.f32.xlu0 %v989
    %v991 = vpop.xlane.xlu0 %990
    %v992 = vsel %vm107, %v988, 0.0
    %993 = vadd.xlane.f32.xlu0 %v992
    %v994 = vpop.xlane.xlu0 %993
    %v995 = vmul.f32 %v991, %v120
    %v996 = vmul.f32 %v994, %v120
    %v997 = vadd.f32 %v995, 1e-05
    %v998 = vadd.f32 %v996, 1e-05
    %v999 = vrsqrt.pop %v997
    %v1000 = vmul.f32 %v999, %v997
    %v1001 = vmul.f32 %v1000, %v999
    %v1002 = vmul.f32 0.5, %v1001
    %v1003 = vsub.f32 1.5, %v1002
    %v1004 = vmul.f32 %v999, %v1003
    %vm1005 = vweird.f32 %v997
    %vm1006 = vweird.f32 %v999
    %vm1007 = vmor %vm1005, %vm1006
    %v1008 = vsel %vm1007, %v999, %v1004
    %v1009 = vrsqrt.pop %v998
    %v1010 = vmul.f32 %v1009, %v998
    %v1011 = vmul.f32 %v1010, %v1009
    %v1012 = vmul.f32 0.5, %v1011
    %v1013 = vsub.f32 1.5, %v1012
    %v1014 = vmul.f32 %v1009, %v1013
    %vm1015 = vweird.f32 %v998
    %vm1016 = vweird.f32 %v1009
    %vm1017 = vmor %vm1015, %vm1016
    %v1018 = vsel %vm1017, %v1009, %v1014
    %v1019 = vmul.f32 %v985, %v1008
    %v1020 = vmul.f32 %v986, %v1018
    %v1021 = vperm.slane %v102, 2
    %v1022 = vmul.f32 %v1019, %v1021
    %v1023 = vmul.f32 %v1020, %v1021
    %v1024 = vperm.slane %v102, 3
    %v1025 = vadd.f32 %v1022, %v1024
    %v1026 = vadd.f32 %v1023, %v1024
    %v1027 = vld [vmem:[%s5] sm:$0xff]
    %v1028 = vld [vmem:[%s5 + $0x8] sm:$0xff]
    %v1029 = vld [vmem:[%s5 + $0x10] sm:$0xff]
    %v1030 = vld [vmem:[%s5 + $0x18] sm:$0xff]
    %v1031 = vld [vmem:[%s6] sm:$0x1]
    %v1033 = vperm.slane %v1031, 0
    %v1036 = vsel %vm107, %v1025, 0
    %v1039 = vsel %vm107, %v1026, 0
    %1041 = vmatpush.msra.mxu0 0.0
    %1042 = vmatpush.msra.mxu0 0.0
    %1043 = vmatpush.msra.mxu0 0.0
    %1044 = vmatpush.msra.mxu0 0.0
    %1045 = vmatpush.msra.mxu0 0.0
    %1046 = vmatpush.msra.mxu0 0.0
    %1047 = vmatpush.msra.mxu0 0.0
    %1048 = vmatpush.msra.mxu0 0.0
    %1049 = vmatpush.msra.mxu0 0.0
    %1050 = vmatpush.msra.mxu0 0.0
    %1051 = vmatpush.msra.mxu0 0.0
    %1052 = vmatpush.msra.mxu0 0.0
    %1053 = vmatpush.msra.mxu0 %v1030
    %1054 = vmatpush.msra.mxu0 %v1029
    %1055 = vmatpush.msra.mxu0 %v1028
    %1056 = vmatpush.msra.mxu0 %v1027
    %1057 = vmatmul.f32.gmra.mxu0 %v1036
    %v1058 = vpop.f32.mrf.mxu0
    %v1059 = vadd.f32 %v1033, %v1058
    %1060 = vmatmul.f32.gmra.mxu0 %v1039
    %v1061 = vpop.f32.mrf.mxu0
    %v1062 = vadd.f32 %v1033, %v1061
    %1063 = vdwg.mxu0
    %v1064 = vmax.f32 %v1059, 0.0
    %v1065 = vmax.f32 %v1062, 0.0
    %v1066 = vld [vmem:[%s7] sm:$0xff]
    %v1067 = vld [vmem:[%s7 + $0x8] sm:$0xff]
    %v1068 = vld [vmem:[%s7 + $0x10] sm:$0xff]
    %v1069 = vld [vmem:[%s7 + $0x18] sm:$0xff]
    %v1070 = vld [vmem:[%s7 + $0x20] sm:$0xff]
    %v1071 = vld [vmem:[%s7 + $0x28] sm:$0xff]
    %v1072 = vld [vmem:[%s7 + $0x30] sm:$0xff]
    %v1073 = vld [vmem:[%s7 + $0x38] sm:$0xff]
    %v1074 = vld [vmem:[%s7 + $0x40] sm:$0xff]
    %v1075 = vld [vmem:[%s7 + $0x48] sm:$0xff]
    %v1076 = vld [vmem:[%s7 + $0x50] sm:$0xff]
    %v1077 = vld [vmem:[%s7 + $0x58] sm:$0xff]
    %v1078 = vld [vmem:[%s7 + $0x60] sm:$0xff]
    %v1079 = vld [vmem:[%s7 + $0x68] sm:$0xff]
    %v1080 = vld [vmem:[%s7 + $0x70] sm:$0xff]
    %v1081 = vld [vmem:[%s7 + $0x78] sm:$0xff]
    %v1082 = vperm.slane %v102, 5
    %1083 = vmatpush.msra.mxu0 %v1081
    %1084 = vmatpush.msra.mxu0 %v1080
    %1085 = vmatpush.msra.mxu0 %v1079
    %1086 = vmatpush.msra.mxu0 %v1078
    %1087 = vmatpush.msra.mxu0 %v1077
    %1088 = vmatpush.msra.mxu0 %v1076
    %1089 = vmatpush.msra.mxu0 %v1075
    %1090 = vmatpush.msra.mxu0 %v1074
    %1091 = vmatpush.msra.mxu0 %v1073
    %1092 = vmatpush.msra.mxu0 %v1072
    %1093 = vmatpush.msra.mxu0 %v1071
    %1094 = vmatpush.msra.mxu0 %v1070
    %1095 = vmatpush.msra.mxu0 %v1069
    %1096 = vmatpush.msra.mxu0 %v1068
    %1097 = vmatpush.msra.mxu0 %v1067
    %1098 = vmatpush.msra.mxu0 %v1066
    %1099 = vmatmul.f32.gmra.mxu0 %v1064
    %v1100 = vpop.f32.mrf.mxu0
    %v1101 = vadd.f32 %v1082, %v1100
    %1102 = vmatmul.f32.gmra.mxu0 %v1065
    %v1103 = vpop.f32.mrf.mxu0
    %v1104 = vadd.f32 %v1082, %v1103
    %1105 = vdwg.mxu0
    %v1106 = vadd.f32 %v975, %v1101
    %v1107 = vadd.f32 %v976, %v1104
    %s1108 = scalar_lea.vmem %s8, 8
    %v1109 = vld [vmem:[%s1108] sm:$0xff]
    %s1110 = scalar_lea.vmem %s4, 32
    %v1111 = vld [vmem:[%s1110] sm:$0xff]
    %v1112 = vld [vmem:[%s1110 + $0x8] sm:$0xff]
    %v1113 = vld [vmem:[%s1110 + $0x10] sm:$0xff]
    %v1114 = vld [vmem:[%s1110 + $0x18] sm:$0xff]
    %v1115 = vsel %vm107, %v1106, 0.0
    %1116 = vadd.xlane.f32.xlu0 %v1115
    %v1117 = vpop.xlane.xlu0 %1116
    %v1118 = vsel %vm107, %v1107, 0.0
    %1119 = vadd.xlane.f32.xlu0 %v1118
    %v1120 = vpop.xlane.xlu0 %1119
    %v1121 = vmul.f32 %v1117, %v120
    %v1122 = vmul.f32 %v1120, %v120
    %v1123 = vsub.f32 %v1106, %v1121
    %v1124 = vsub.f32 %v1107, %v1122
    %v1125 = vmul.f32 %v1123, %v1123
    %v1126 = vmul.f32 %v1124, %v1124
    %v1127 = vsel %vm107, %v1125, 0.0
    %1128 = vadd.xlane.f32.xlu0 %v1127
    %v1129 = vpop.xlane.xlu0 %1128
    %v1130 = vsel %vm107, %v1126, 0.0
    %1131 = vadd.xlane.f32.xlu0 %v1130
    %v1132 = vpop.xlane.xlu0 %1131
    %v1133 = vmul.f32 %v1129, %v120
    %v1134 = vmul.f32 %v1132, %v120
    %v1135 = vadd.f32 %v1133, 1e-05
    %v1136 = vadd.f32 %v1134, 1e-05
    %v1137 = vrsqrt.pop %v1135
    %v1138 = vmul.f32 %v1137, %v1135
    %v1139 = vmul.f32 %v1138, %v1137
    %v1140 = vmul.f32 0.5, %v1139
    %v1141 = vsub.f32 1.5, %v1140
    %v1142 = vmul.f32 %v1137, %v1141
    %vm1143 = vweird.f32 %v1135
    %vm1144 = vweird.f32 %v1137
    %vm1145 = vmor %vm1143, %vm1144
    %v1146 = vsel %vm1145, %v1137, %v1142
    %v1147 = vrsqrt.pop %v1136
    %v1148 = vmul.f32 %v1147, %v1136
    %v1149 = vmul.f32 %v1148, %v1147
    %v1150 = vmul.f32 0.5, %v1149
    %v1151 = vsub.f32 1.5, %v1150
    %v1152 = vmul.f32 %v1147, %v1151
    %vm1153 = vweird.f32 %v1136
    %vm1154 = vweird.f32 %v1147
    %vm1155 = vmor %vm1153, %vm1154
    %v1156 = vsel %vm1155, %v1147, %v1152
    %v1157 = vmul.f32 %v1123, %v1146
    %v1158 = vmul.f32 %v1124, %v1156
    %v1159 = vperm.slane %v1109, 0
    %v1160 = vmul.f32 %v1157, %v1159
    %v1161 = vmul.f32 %v1158, %v1159
    %v1162 = vperm.slane %v1109, 1
    %v1163 = vadd.f32 %v1160, %v1162
    %v1164 = vadd.f32 %v1161, %v1162
    %s1165 = scalar_lea.vmem %s3, 384
    %v1166 = vld [vmem:[%s1165] sm:$0xff]
    %v1167 = vld [vmem:[%s1165 + $0x8] sm:$0xff]
    %v1168 = vld [vmem:[%s1165 + $0x10] sm:$0xff]
    %v1169 = vld [vmem:[%s1165 + $0x18] sm:$0xff]
    %v1171 = vsel %vm107, %v1163, 0
    %v1174 = vsel %vm107, %v1164, 0
    %1176 = vmatpush.msra.mxu0 0.0
    %1177 = vmatpush.msra.mxu0 0.0
    %1178 = vmatpush.msra.mxu0 0.0
    %1179 = vmatpush.msra.mxu0 0.0
    %1180 = vmatpush.msra.mxu0 0.0
    %1181 = vmatpush.msra.mxu0 0.0
    %1182 = vmatpush.msra.mxu0 0.0
    %1183 = vmatpush.msra.mxu0 0.0
    %1184 = vmatpush.msra.mxu0 0.0
    %1185 = vmatpush.msra.mxu0 0.0
    %1186 = vmatpush.msra.mxu0 0.0
    %1187 = vmatpush.msra.mxu0 0.0
    %1188 = vmatpush.msra.mxu0 %v1169
    %1189 = vmatpush.msra.mxu0 %v1168
    %1190 = vmatpush.msra.mxu0 %v1167
    %1191 = vmatpush.msra.mxu0 %v1166
    %1192 = vmatmul.f32.gmra.mxu0 %v1171
    %v1193 = vpop.f32.mrf.mxu0
    %v1194 = vadd.f32 0.0, %v1193
    %1195 = vmatmul.f32.gmra.mxu0 %v1174
    %v1196 = vpop.f32.mrf.mxu0
    %v1197 = vadd.f32 0.0, %v1196
    %1198 = vdwg.mxu0
    %s1199 = scalar_lea.vmem %s3, 512
    %v1200 = vld [vmem:[%s1199] sm:$0xff]
    %v1201 = vld [vmem:[%s1199 + $0x8] sm:$0xff]
    %v1202 = vld [vmem:[%s1199 + $0x10] sm:$0xff]
    %v1203 = vld [vmem:[%s1199 + $0x18] sm:$0xff]
    %1204 = vmatpush.msra.mxu0 0.0
    %1205 = vmatpush.msra.mxu0 0.0
    %1206 = vmatpush.msra.mxu0 0.0
    %1207 = vmatpush.msra.mxu0 0.0
    %1208 = vmatpush.msra.mxu0 0.0
    %1209 = vmatpush.msra.mxu0 0.0
    %1210 = vmatpush.msra.mxu0 0.0
    %1211 = vmatpush.msra.mxu0 0.0
    %1212 = vmatpush.msra.mxu0 0.0
    %1213 = vmatpush.msra.mxu0 0.0
    %1214 = vmatpush.msra.mxu0 0.0
    %1215 = vmatpush.msra.mxu0 0.0
    %1216 = vmatpush.msra.mxu0 %v1203
    %1217 = vmatpush.msra.mxu0 %v1202
    %1218 = vmatpush.msra.mxu0 %v1201
    %1219 = vmatpush.msra.mxu0 %v1200
    %1220 = vmatmul.f32.gmra.mxu0 %v1171
    %v1221 = vpop.f32.mrf.mxu0
    %v1222 = vadd.f32 0.0, %v1221
    %1223 = vmatmul.f32.gmra.mxu0 %v1174
    %v1224 = vpop.f32.mrf.mxu0
    %v1225 = vadd.f32 0.0, %v1224
    %1226 = vdwg.mxu0
    %s1227 = scalar_lea.vmem %s3, 640
    %v1228 = vld [vmem:[%s1227] sm:$0xff]
    %v1229 = vld [vmem:[%s1227 + $0x8] sm:$0xff]
    %v1230 = vld [vmem:[%s1227 + $0x10] sm:$0xff]
    %v1231 = vld [vmem:[%s1227 + $0x18] sm:$0xff]
    %1232 = vmatpush.msra.mxu0 0.0
    %1233 = vmatpush.msra.mxu0 0.0
    %1234 = vmatpush.msra.mxu0 0.0
    %1235 = vmatpush.msra.mxu0 0.0
    %1236 = vmatpush.msra.mxu0 0.0
    %1237 = vmatpush.msra.mxu0 0.0
    %1238 = vmatpush.msra.mxu0 0.0
    %1239 = vmatpush.msra.mxu0 0.0
    %1240 = vmatpush.msra.mxu0 0.0
    %1241 = vmatpush.msra.mxu0 0.0
    %1242 = vmatpush.msra.mxu0 0.0
    %1243 = vmatpush.msra.mxu0 0.0
    %1244 = vmatpush.msra.mxu0 %v1231
    %1245 = vmatpush.msra.mxu0 %v1230
    %1246 = vmatpush.msra.mxu0 %v1229
    %1247 = vmatpush.msra.mxu0 %v1228
    %1248 = vmatmul.f32.gmra.mxu0 %v1171
    %v1249 = vpop.f32.mrf.mxu0
    %v1250 = vadd.f32 0.0, %v1249
    %1251 = vmatmul.f32.gmra.mxu0 %v1174
    %v1252 = vpop.f32.mrf.mxu0
    %v1253 = vadd.f32 0.0, %v1252
    %1254 = vdwg.mxu0
    %v1256 = vsel %vm254, %v1194, 0
    %v1259 = vsel %vm254, %v1197, 0
    %v1262 = vsel %vm254, %v1222, 0
    %v1265 = vsel %vm254, %v1225, 0
    %1267 = vmatpush.xpose.msra.mxu0 0.0
    %1268 = vmatpush.xpose.msra.mxu0 0.0
    %1269 = vmatpush.xpose.msra.mxu0 0.0
    %1270 = vmatpush.xpose.msra.mxu0 0.0
    %1271 = vmatpush.xpose.msra.mxu0 0.0
    %1272 = vmatpush.xpose.msra.mxu0 0.0
    %1273 = vmatpush.xpose.msra.mxu0 0.0
    %1274 = vmatpush.xpose.msra.mxu0 0.0
    %1275 = vmatpush.xpose.msra.mxu0 0.0
    %1276 = vmatpush.xpose.msra.mxu0 0.0
    %1277 = vmatpush.xpose.msra.mxu0 0.0
    %1278 = vmatpush.xpose.msra.mxu0 0.0
    %1279 = vmatpush.xpose.msra.mxu0 0.0
    %1280 = vmatpush.xpose.msra.mxu0 0.0
    %1281 = vmatpush.xpose.msra.mxu0 %v1265
    %1282 = vmatpush.xpose.msra.mxu0 %v1262
    %1283 = vmatmul.f32.gmra.mxu0 %v1256
    %v1284 = vpop.f32.mrf.mxu0
    %v1285 = vadd.f32 %v100, %v1284
    %1286 = vmatmul.f32.gmra.mxu0 %v1259
    %v1287 = vpop.f32.mrf.mxu0
    %v1288 = vadd.f32 %v101, %v1287
    %1289 = vdwg.mxu0
    %v1290 = vsel %vm290, %v1285, -inf
    %1291 = vmax.xlane.f32.xlu0 %v1290
    %v1292 = vpop.xlane.xlu0 %1291
    %v1293 = vsel %vm290, %v1288, -inf
    %1294 = vmax.xlane.f32.xlu0 %v1293
    %v1295 = vpop.xlane.xlu0 %1294
    %v1296 = vsub.f32 %v1285, %v1292
    %v1297 = vsub.f32 %v1288, %v1295
    %v1298 = vmul.f32 %v1296, 1.442695
    %v1299 = vpow.pop %v1298
    %v1300 = vmul.f32 %v1297, 1.442695
    %v1301 = vpow.pop %v1300
    %v1302 = vsel %vm290, %v1299, 0.0
    %1303 = vadd.xlane.f32.xlu0 %v1302
    %v1304 = vpop.xlane.xlu0 %1303
    %v1305 = vsel %vm290, %v1301, 0.0
    %1306 = vadd.xlane.f32.xlu0 %v1305
    %v1307 = vpop.xlane.xlu0 %1306
    %v1308 = vrcp.pop %v1304
    %v1309 = vrcp.pop %v1307
    %v1310 = vmul.f32 %v1299, %v1308
    %v1311 = vmul.f32 %v1301, %v1309
    %v1313 = vsel %vm290, %v1310, 0
    %v1316 = vsel %vm290, %v1311, 0
    %1318 = vmatpush.msra.mxu0 0.0
    %1319 = vmatpush.msra.mxu0 0.0
    %1320 = vmatpush.msra.mxu0 0.0
    %1321 = vmatpush.msra.mxu0 0.0
    %1322 = vmatpush.msra.mxu0 0.0
    %1323 = vmatpush.msra.mxu0 0.0
    %1324 = vmatpush.msra.mxu0 0.0
    %1325 = vmatpush.msra.mxu0 0.0
    %1326 = vmatpush.msra.mxu0 0.0
    %1327 = vmatpush.msra.mxu0 0.0
    %1328 = vmatpush.msra.mxu0 0.0
    %1329 = vmatpush.msra.mxu0 0.0
    %1330 = vmatpush.msra.mxu0 0.0
    %1331 = vmatpush.msra.mxu0 0.0
    %1332 = vmatpush.msra.mxu0 %v1253
    %1333 = vmatpush.msra.mxu0 %v1250
    %1334 = vmatmul.f32.gmra.mxu0 %v1313
    %v1335 = vpop.f32.mrf.mxu0
    %v1336 = vadd.f32 0.0, %v1335
    %1337 = vmatmul.f32.gmra.mxu0 %v1316
    %v1338 = vpop.f32.mrf.mxu0
    %v1339 = vadd.f32 0.0, %v1338
    %1340 = vdwg.mxu0
    %s1341 = scalar_lea.vmem %s3, 416
    %v1342 = vld [vmem:[%s1341] sm:$0xff]
    %v1343 = vld [vmem:[%s1341 + $0x8] sm:$0xff]
    %v1344 = vld [vmem:[%s1341 + $0x10] sm:$0xff]
    %v1345 = vld [vmem:[%s1341 + $0x18] sm:$0xff]
    %1346 = vmatpush.msra.mxu0 0.0
    %1347 = vmatpush.msra.mxu0 0.0
    %1348 = vmatpush.msra.mxu0 0.0
    %1349 = vmatpush.msra.mxu0 0.0
    %1350 = vmatpush.msra.mxu0 0.0
    %1351 = vmatpush.msra.mxu0 0.0
    %1352 = vmatpush.msra.mxu0 0.0
    %1353 = vmatpush.msra.mxu0 0.0
    %1354 = vmatpush.msra.mxu0 0.0
    %1355 = vmatpush.msra.mxu0 0.0
    %1356 = vmatpush.msra.mxu0 0.0
    %1357 = vmatpush.msra.mxu0 0.0
    %1358 = vmatpush.msra.mxu0 %v1345
    %1359 = vmatpush.msra.mxu0 %v1344
    %1360 = vmatpush.msra.mxu0 %v1343
    %1361 = vmatpush.msra.mxu0 %v1342
    %1362 = vmatmul.f32.gmra.mxu0 %v1171
    %v1363 = vpop.f32.mrf.mxu0
    %v1364 = vadd.f32 0.0, %v1363
    %1365 = vmatmul.f32.gmra.mxu0 %v1174
    %v1366 = vpop.f32.mrf.mxu0
    %v1367 = vadd.f32 0.0, %v1366
    %1368 = vdwg.mxu0
    %s1369 = scalar_lea.vmem %s3, 544
    %v1370 = vld [vmem:[%s1369] sm:$0xff]
    %v1371 = vld [vmem:[%s1369 + $0x8] sm:$0xff]
    %v1372 = vld [vmem:[%s1369 + $0x10] sm:$0xff]
    %v1373 = vld [vmem:[%s1369 + $0x18] sm:$0xff]
    %1374 = vmatpush.msra.mxu0 0.0
    %1375 = vmatpush.msra.mxu0 0.0
    %1376 = vmatpush.msra.mxu0 0.0
    %1377 = vmatpush.msra.mxu0 0.0
    %1378 = vmatpush.msra.mxu0 0.0
    %1379 = vmatpush.msra.mxu0 0.0
    %1380 = vmatpush.msra.mxu0 0.0
    %1381 = vmatpush.msra.mxu0 0.0
    %1382 = vmatpush.msra.mxu0 0.0
    %1383 = vmatpush.msra.mxu0 0.0
    %1384 = vmatpush.msra.mxu0 0.0
    %1385 = vmatpush.msra.mxu0 0.0
    %1386 = vmatpush.msra.mxu0 %v1373
    %1387 = vmatpush.msra.mxu0 %v1372
    %1388 = vmatpush.msra.mxu0 %v1371
    %1389 = vmatpush.msra.mxu0 %v1370
    %1390 = vmatmul.f32.gmra.mxu0 %v1171
    %v1391 = vpop.f32.mrf.mxu0
    %v1392 = vadd.f32 0.0, %v1391
    %1393 = vmatmul.f32.gmra.mxu0 %v1174
    %v1394 = vpop.f32.mrf.mxu0
    %v1395 = vadd.f32 0.0, %v1394
    %1396 = vdwg.mxu0
    %s1397 = scalar_lea.vmem %s3, 672
    %v1398 = vld [vmem:[%s1397] sm:$0xff]
    %v1399 = vld [vmem:[%s1397 + $0x8] sm:$0xff]
    %v1400 = vld [vmem:[%s1397 + $0x10] sm:$0xff]
    %v1401 = vld [vmem:[%s1397 + $0x18] sm:$0xff]
    %1402 = vmatpush.msra.mxu0 0.0
    %1403 = vmatpush.msra.mxu0 0.0
    %1404 = vmatpush.msra.mxu0 0.0
    %1405 = vmatpush.msra.mxu0 0.0
    %1406 = vmatpush.msra.mxu0 0.0
    %1407 = vmatpush.msra.mxu0 0.0
    %1408 = vmatpush.msra.mxu0 0.0
    %1409 = vmatpush.msra.mxu0 0.0
    %1410 = vmatpush.msra.mxu0 0.0
    %1411 = vmatpush.msra.mxu0 0.0
    %1412 = vmatpush.msra.mxu0 0.0
    %1413 = vmatpush.msra.mxu0 0.0
    %1414 = vmatpush.msra.mxu0 %v1401
    %1415 = vmatpush.msra.mxu0 %v1400
    %1416 = vmatpush.msra.mxu0 %v1399
    %1417 = vmatpush.msra.mxu0 %v1398
    %1418 = vmatmul.f32.gmra.mxu0 %v1171
    %v1419 = vpop.f32.mrf.mxu0
    %v1420 = vadd.f32 0.0, %v1419
    %1421 = vmatmul.f32.gmra.mxu0 %v1174
    %v1422 = vpop.f32.mrf.mxu0
    %v1423 = vadd.f32 0.0, %v1422
    %1424 = vdwg.mxu0
    %v1426 = vsel %vm254, %v1364, 0
    %v1429 = vsel %vm254, %v1367, 0
    %v1432 = vsel %vm254, %v1392, 0
    %v1435 = vsel %vm254, %v1395, 0
    %1437 = vmatpush.xpose.msra.mxu0 0.0
    %1438 = vmatpush.xpose.msra.mxu0 0.0
    %1439 = vmatpush.xpose.msra.mxu0 0.0
    %1440 = vmatpush.xpose.msra.mxu0 0.0
    %1441 = vmatpush.xpose.msra.mxu0 0.0
    %1442 = vmatpush.xpose.msra.mxu0 0.0
    %1443 = vmatpush.xpose.msra.mxu0 0.0
    %1444 = vmatpush.xpose.msra.mxu0 0.0
    %1445 = vmatpush.xpose.msra.mxu0 0.0
    %1446 = vmatpush.xpose.msra.mxu0 0.0
    %1447 = vmatpush.xpose.msra.mxu0 0.0
    %1448 = vmatpush.xpose.msra.mxu0 0.0
    %1449 = vmatpush.xpose.msra.mxu0 0.0
    %1450 = vmatpush.xpose.msra.mxu0 0.0
    %1451 = vmatpush.xpose.msra.mxu0 %v1435
    %1452 = vmatpush.xpose.msra.mxu0 %v1432
    %1453 = vmatmul.f32.gmra.mxu0 %v1426
    %v1454 = vpop.f32.mrf.mxu0
    %v1455 = vadd.f32 %v100, %v1454
    %1456 = vmatmul.f32.gmra.mxu0 %v1429
    %v1457 = vpop.f32.mrf.mxu0
    %v1458 = vadd.f32 %v101, %v1457
    %1459 = vdwg.mxu0
    %v1460 = vsel %vm290, %v1455, -inf
    %1461 = vmax.xlane.f32.xlu0 %v1460
    %v1462 = vpop.xlane.xlu0 %1461
    %v1463 = vsel %vm290, %v1458, -inf
    %1464 = vmax.xlane.f32.xlu0 %v1463
    %v1465 = vpop.xlane.xlu0 %1464
    %v1466 = vsub.f32 %v1455, %v1462
    %v1467 = vsub.f32 %v1458, %v1465
    %v1468 = vmul.f32 %v1466, 1.442695
    %v1469 = vpow.pop %v1468
    %v1470 = vmul.f32 %v1467, 1.442695
    %v1471 = vpow.pop %v1470
    %v1472 = vsel %vm290, %v1469, 0.0
    %1473 = vadd.xlane.f32.xlu0 %v1472
    %v1474 = vpop.xlane.xlu0 %1473
    %v1475 = vsel %vm290, %v1471, 0.0
    %1476 = vadd.xlane.f32.xlu0 %v1475
    %v1477 = vpop.xlane.xlu0 %1476
    %v1478 = vrcp.pop %v1474
    %v1479 = vrcp.pop %v1477
    %v1480 = vmul.f32 %v1469, %v1478
    %v1481 = vmul.f32 %v1471, %v1479
    %v1483 = vsel %vm290, %v1480, 0
    %v1486 = vsel %vm290, %v1481, 0
    %1488 = vmatpush.msra.mxu0 0.0
    %1489 = vmatpush.msra.mxu0 0.0
    %1490 = vmatpush.msra.mxu0 0.0
    %1491 = vmatpush.msra.mxu0 0.0
    %1492 = vmatpush.msra.mxu0 0.0
    %1493 = vmatpush.msra.mxu0 0.0
    %1494 = vmatpush.msra.mxu0 0.0
    %1495 = vmatpush.msra.mxu0 0.0
    %1496 = vmatpush.msra.mxu0 0.0
    %1497 = vmatpush.msra.mxu0 0.0
    %1498 = vmatpush.msra.mxu0 0.0
    %1499 = vmatpush.msra.mxu0 0.0
    %1500 = vmatpush.msra.mxu0 0.0
    %1501 = vmatpush.msra.mxu0 0.0
    %1502 = vmatpush.msra.mxu0 %v1423
    %1503 = vmatpush.msra.mxu0 %v1420
    %1504 = vmatmul.f32.gmra.mxu0 %v1483
    %v1505 = vpop.f32.mrf.mxu0
    %v1506 = vadd.f32 0.0, %v1505
    %1507 = vmatmul.f32.gmra.mxu0 %v1486
    %v1508 = vpop.f32.mrf.mxu0
    %v1509 = vadd.f32 0.0, %v1508
    %1510 = vdwg.mxu0
    %v1512 = vsel %vm254, %v1506, 0
    %v1515 = vsel %vm254, %v1509, 0
    %1517 = vmatpush.msra.mxu0 0.0
    %1518 = vmatpush.msra.mxu0 0.0
    %1519 = vmatpush.msra.mxu0 0.0
    %1520 = vmatpush.msra.mxu0 0.0
    %1521 = vmatpush.msra.mxu0 0.0
    %1522 = vmatpush.msra.mxu0 0.0
    %1523 = vmatpush.msra.mxu0 0.0
    %1524 = vmatpush.msra.mxu0 0.0
    %1525 = vmatpush.msra.mxu0 0.0
    %1526 = vmatpush.msra.mxu0 0.0
    %1527 = vmatpush.msra.mxu0 0.0
    %1528 = vmatpush.msra.mxu0 0.0
    %1529 = vmatpush.msra.mxu0 0.0
    %1530 = vmatpush.msra.mxu0 0.0
    %1531 = vmatpush.msra.mxu0 0.0
    %1532 = vmatpush.msra.mxu0 %v1112
    %1533 = vmatmul.f32.gmra.mxu0 %v1512
    %v1534 = vpop.f32.mrf.mxu0
    %v1535 = vadd.f32 0.0, %v1534
    %1536 = vmatmul.f32.gmra.mxu0 %v1515
    %v1537 = vpop.f32.mrf.mxu0
    %v1538 = vadd.f32 0.0, %v1537
    %1539 = vdwg.mxu0
    %v1541 = vsel %vm254, %v1336, 0
    %v1544 = vsel %vm254, %v1339, 0
    %1546 = vmatpush.msra.mxu0 0.0
    %1547 = vmatpush.msra.mxu0 0.0
    %1548 = vmatpush.msra.mxu0 0.0
    %1549 = vmatpush.msra.mxu0 0.0
    %1550 = vmatpush.msra.mxu0 0.0
    %1551 = vmatpush.msra.mxu0 0.0
    %1552 = vmatpush.msra.mxu0 0.0
    %1553 = vmatpush.msra.mxu0 0.0
    %1554 = vmatpush.msra.mxu0 0.0
    %1555 = vmatpush.msra.mxu0 0.0
    %1556 = vmatpush.msra.mxu0 0.0
    %1557 = vmatpush.msra.mxu0 0.0
    %1558 = vmatpush.msra.mxu0 0.0
    %1559 = vmatpush.msra.mxu0 0.0
    %1560 = vmatpush.msra.mxu0 0.0
    %1561 = vmatpush.msra.mxu0 %v1111
    %1562 = vmatmul.f32.gmra.mxu0 %v1541
    %v1563 = vpop.f32.mrf.mxu0
    %v1564 = vadd.f32 %v1535, %v1563
    %1565 = vmatmul.f32.gmra.mxu0 %v1544
    %v1566 = vpop.f32.mrf.mxu0
    %v1567 = vadd.f32 %v1538, %v1566
    %1568 = vdwg.mxu0
    %s1569 = scalar_lea.vmem %s3, 448
    %v1570 = vld [vmem:[%s1569] sm:$0xff]
    %v1571 = vld [vmem:[%s1569 + $0x8] sm:$0xff]
    %v1572 = vld [vmem:[%s1569 + $0x10] sm:$0xff]
    %v1573 = vld [vmem:[%s1569 + $0x18] sm:$0xff]
    %1574 = vmatpush.msra.mxu0 0.0
    %1575 = vmatpush.msra.mxu0 0.0
    %1576 = vmatpush.msra.mxu0 0.0
    %1577 = vmatpush.msra.mxu0 0.0
    %1578 = vmatpush.msra.mxu0 0.0
    %1579 = vmatpush.msra.mxu0 0.0
    %1580 = vmatpush.msra.mxu0 0.0
    %1581 = vmatpush.msra.mxu0 0.0
    %1582 = vmatpush.msra.mxu0 0.0
    %1583 = vmatpush.msra.mxu0 0.0
    %1584 = vmatpush.msra.mxu0 0.0
    %1585 = vmatpush.msra.mxu0 0.0
    %1586 = vmatpush.msra.mxu0 %v1573
    %1587 = vmatpush.msra.mxu0 %v1572
    %1588 = vmatpush.msra.mxu0 %v1571
    %1589 = vmatpush.msra.mxu0 %v1570
    %1590 = vmatmul.f32.gmra.mxu0 %v1171
    %v1591 = vpop.f32.mrf.mxu0
    %v1592 = vadd.f32 0.0, %v1591
    %1593 = vmatmul.f32.gmra.mxu0 %v1174
    %v1594 = vpop.f32.mrf.mxu0
    %v1595 = vadd.f32 0.0, %v1594
    %1596 = vdwg.mxu0
    %s1597 = scalar_lea.vmem %s3, 576
    %v1598 = vld [vmem:[%s1597] sm:$0xff]
    %v1599 = vld [vmem:[%s1597 + $0x8] sm:$0xff]
    %v1600 = vld [vmem:[%s1597 + $0x10] sm:$0xff]
    %v1601 = vld [vmem:[%s1597 + $0x18] sm:$0xff]
    %1602 = vmatpush.msra.mxu0 0.0
    %1603 = vmatpush.msra.mxu0 0.0
    %1604 = vmatpush.msra.mxu0 0.0
    %1605 = vmatpush.msra.mxu0 0.0
    %1606 = vmatpush.msra.mxu0 0.0
    %1607 = vmatpush.msra.mxu0 0.0
    %1608 = vmatpush.msra.mxu0 0.0
    %1609 = vmatpush.msra.mxu0 0.0
    %1610 = vmatpush.msra.mxu0 0.0
    %1611 = vmatpush.msra.mxu0 0.0
    %1612 = vmatpush.msra.mxu0 0.0
    %1613 = vmatpush.msra.mxu0 0.0
    %1614 = vmatpush.msra.mxu0 %v1601
    %1615 = vmatpush.msra.mxu0 %v1600
    %1616 = vmatpush.msra.mxu0 %v1599
    %1617 = vmatpush.msra.mxu0 %v1598
    %1618 = vmatmul.f32.gmra.mxu0 %v1171
    %v1619 = vpop.f32.mrf.mxu0
    %v1620 = vadd.f32 0.0, %v1619
    %1621 = vmatmul.f32.gmra.mxu0 %v1174
    %v1622 = vpop.f32.mrf.mxu0
    %v1623 = vadd.f32 0.0, %v1622
    %1624 = vdwg.mxu0
    %s1625 = scalar_lea.vmem %s3, 704
    %v1626 = vld [vmem:[%s1625] sm:$0xff]
    %v1627 = vld [vmem:[%s1625 + $0x8] sm:$0xff]
    %v1628 = vld [vmem:[%s1625 + $0x10] sm:$0xff]
    %v1629 = vld [vmem:[%s1625 + $0x18] sm:$0xff]
    %1630 = vmatpush.msra.mxu0 0.0
    %1631 = vmatpush.msra.mxu0 0.0
    %1632 = vmatpush.msra.mxu0 0.0
    %1633 = vmatpush.msra.mxu0 0.0
    %1634 = vmatpush.msra.mxu0 0.0
    %1635 = vmatpush.msra.mxu0 0.0
    %1636 = vmatpush.msra.mxu0 0.0
    %1637 = vmatpush.msra.mxu0 0.0
    %1638 = vmatpush.msra.mxu0 0.0
    %1639 = vmatpush.msra.mxu0 0.0
    %1640 = vmatpush.msra.mxu0 0.0
    %1641 = vmatpush.msra.mxu0 0.0
    %1642 = vmatpush.msra.mxu0 %v1629
    %1643 = vmatpush.msra.mxu0 %v1628
    %1644 = vmatpush.msra.mxu0 %v1627
    %1645 = vmatpush.msra.mxu0 %v1626
    %1646 = vmatmul.f32.gmra.mxu0 %v1171
    %v1647 = vpop.f32.mrf.mxu0
    %v1648 = vadd.f32 0.0, %v1647
    %1649 = vmatmul.f32.gmra.mxu0 %v1174
    %v1650 = vpop.f32.mrf.mxu0
    %v1651 = vadd.f32 0.0, %v1650
    %1652 = vdwg.mxu0
    %v1654 = vsel %vm254, %v1592, 0
    %v1657 = vsel %vm254, %v1595, 0
    %v1660 = vsel %vm254, %v1620, 0
    %v1663 = vsel %vm254, %v1623, 0
    %1665 = vmatpush.xpose.msra.mxu0 0.0
    %1666 = vmatpush.xpose.msra.mxu0 0.0
    %1667 = vmatpush.xpose.msra.mxu0 0.0
    %1668 = vmatpush.xpose.msra.mxu0 0.0
    %1669 = vmatpush.xpose.msra.mxu0 0.0
    %1670 = vmatpush.xpose.msra.mxu0 0.0
    %1671 = vmatpush.xpose.msra.mxu0 0.0
    %1672 = vmatpush.xpose.msra.mxu0 0.0
    %1673 = vmatpush.xpose.msra.mxu0 0.0
    %1674 = vmatpush.xpose.msra.mxu0 0.0
    %1675 = vmatpush.xpose.msra.mxu0 0.0
    %1676 = vmatpush.xpose.msra.mxu0 0.0
    %1677 = vmatpush.xpose.msra.mxu0 0.0
    %1678 = vmatpush.xpose.msra.mxu0 0.0
    %1679 = vmatpush.xpose.msra.mxu0 %v1663
    %1680 = vmatpush.xpose.msra.mxu0 %v1660
    %1681 = vmatmul.f32.gmra.mxu0 %v1654
    %v1682 = vpop.f32.mrf.mxu0
    %v1683 = vadd.f32 %v100, %v1682
    %1684 = vmatmul.f32.gmra.mxu0 %v1657
    %v1685 = vpop.f32.mrf.mxu0
    %v1686 = vadd.f32 %v101, %v1685
    %1687 = vdwg.mxu0
    %v1688 = vsel %vm290, %v1683, -inf
    %1689 = vmax.xlane.f32.xlu0 %v1688
    %v1690 = vpop.xlane.xlu0 %1689
    %v1691 = vsel %vm290, %v1686, -inf
    %1692 = vmax.xlane.f32.xlu0 %v1691
    %v1693 = vpop.xlane.xlu0 %1692
    %v1694 = vsub.f32 %v1683, %v1690
    %v1695 = vsub.f32 %v1686, %v1693
    %v1696 = vmul.f32 %v1694, 1.442695
    %v1697 = vpow.pop %v1696
    %v1698 = vmul.f32 %v1695, 1.442695
    %v1699 = vpow.pop %v1698
    %v1700 = vsel %vm290, %v1697, 0.0
    %1701 = vadd.xlane.f32.xlu0 %v1700
    %v1702 = vpop.xlane.xlu0 %1701
    %v1703 = vsel %vm290, %v1699, 0.0
    %1704 = vadd.xlane.f32.xlu0 %v1703
    %v1705 = vpop.xlane.xlu0 %1704
    %v1706 = vrcp.pop %v1702
    %v1707 = vrcp.pop %v1705
    %v1708 = vmul.f32 %v1697, %v1706
    %v1709 = vmul.f32 %v1699, %v1707
    %v1711 = vsel %vm290, %v1708, 0
    %v1714 = vsel %vm290, %v1709, 0
    %1716 = vmatpush.msra.mxu0 0.0
    %1717 = vmatpush.msra.mxu0 0.0
    %1718 = vmatpush.msra.mxu0 0.0
    %1719 = vmatpush.msra.mxu0 0.0
    %1720 = vmatpush.msra.mxu0 0.0
    %1721 = vmatpush.msra.mxu0 0.0
    %1722 = vmatpush.msra.mxu0 0.0
    %1723 = vmatpush.msra.mxu0 0.0
    %1724 = vmatpush.msra.mxu0 0.0
    %1725 = vmatpush.msra.mxu0 0.0
    %1726 = vmatpush.msra.mxu0 0.0
    %1727 = vmatpush.msra.mxu0 0.0
    %1728 = vmatpush.msra.mxu0 0.0
    %1729 = vmatpush.msra.mxu0 0.0
    %1730 = vmatpush.msra.mxu0 %v1651
    %1731 = vmatpush.msra.mxu0 %v1648
    %1732 = vmatmul.f32.gmra.mxu0 %v1711
    %v1733 = vpop.f32.mrf.mxu0
    %v1734 = vadd.f32 0.0, %v1733
    %1735 = vmatmul.f32.gmra.mxu0 %v1714
    %v1736 = vpop.f32.mrf.mxu0
    %v1737 = vadd.f32 0.0, %v1736
    %1738 = vdwg.mxu0
    %v1740 = vsel %vm254, %v1734, 0
    %v1743 = vsel %vm254, %v1737, 0
    %1745 = vmatpush.msra.mxu0 0.0
    %1746 = vmatpush.msra.mxu0 0.0
    %1747 = vmatpush.msra.mxu0 0.0
    %1748 = vmatpush.msra.mxu0 0.0
    %1749 = vmatpush.msra.mxu0 0.0
    %1750 = vmatpush.msra.mxu0 0.0
    %1751 = vmatpush.msra.mxu0 0.0
    %1752 = vmatpush.msra.mxu0 0.0
    %1753 = vmatpush.msra.mxu0 0.0
    %1754 = vmatpush.msra.mxu0 0.0
    %1755 = vmatpush.msra.mxu0 0.0
    %1756 = vmatpush.msra.mxu0 0.0
    %1757 = vmatpush.msra.mxu0 0.0
    %1758 = vmatpush.msra.mxu0 0.0
    %1759 = vmatpush.msra.mxu0 0.0
    %1760 = vmatpush.msra.mxu0 %v1113
    %1761 = vmatmul.f32.gmra.mxu0 %v1740
    %v1762 = vpop.f32.mrf.mxu0
    %v1763 = vadd.f32 0.0, %v1762
    %1764 = vmatmul.f32.gmra.mxu0 %v1743
    %v1765 = vpop.f32.mrf.mxu0
    %v1766 = vadd.f32 0.0, %v1765
    %1767 = vdwg.mxu0
    %v1768 = vadd.f32 %v1564, %v1763
    %v1769 = vadd.f32 %v1567, %v1766
    %s1770 = scalar_lea.vmem %s3, 480
    %v1771 = vld [vmem:[%s1770] sm:$0xff]
    %v1772 = vld [vmem:[%s1770 + $0x8] sm:$0xff]
    %v1773 = vld [vmem:[%s1770 + $0x10] sm:$0xff]
    %v1774 = vld [vmem:[%s1770 + $0x18] sm:$0xff]
    %1775 = vmatpush.msra.mxu0 0.0
    %1776 = vmatpush.msra.mxu0 0.0
    %1777 = vmatpush.msra.mxu0 0.0
    %1778 = vmatpush.msra.mxu0 0.0
    %1779 = vmatpush.msra.mxu0 0.0
    %1780 = vmatpush.msra.mxu0 0.0
    %1781 = vmatpush.msra.mxu0 0.0
    %1782 = vmatpush.msra.mxu0 0.0
    %1783 = vmatpush.msra.mxu0 0.0
    %1784 = vmatpush.msra.mxu0 0.0
    %1785 = vmatpush.msra.mxu0 0.0
    %1786 = vmatpush.msra.mxu0 0.0
    %1787 = vmatpush.msra.mxu0 %v1774
    %1788 = vmatpush.msra.mxu0 %v1773
    %1789 = vmatpush.msra.mxu0 %v1772
    %1790 = vmatpush.msra.mxu0 %v1771
    %1791 = vmatmul.f32.gmra.mxu0 %v1171
    %v1792 = vpop.f32.mrf.mxu0
    %v1793 = vadd.f32 0.0, %v1792
    %1794 = vmatmul.f32.gmra.mxu0 %v1174
    %v1795 = vpop.f32.mrf.mxu0
    %v1796 = vadd.f32 0.0, %v1795
    %1797 = vdwg.mxu0
    %s1798 = scalar_lea.vmem %s3, 608
    %v1799 = vld [vmem:[%s1798] sm:$0xff]
    %v1800 = vld [vmem:[%s1798 + $0x8] sm:$0xff]
    %v1801 = vld [vmem:[%s1798 + $0x10] sm:$0xff]
    %v1802 = vld [vmem:[%s1798 + $0x18] sm:$0xff]
    %1803 = vmatpush.msra.mxu0 0.0
    %1804 = vmatpush.msra.mxu0 0.0
    %1805 = vmatpush.msra.mxu0 0.0
    %1806 = vmatpush.msra.mxu0 0.0
    %1807 = vmatpush.msra.mxu0 0.0
    %1808 = vmatpush.msra.mxu0 0.0
    %1809 = vmatpush.msra.mxu0 0.0
    %1810 = vmatpush.msra.mxu0 0.0
    %1811 = vmatpush.msra.mxu0 0.0
    %1812 = vmatpush.msra.mxu0 0.0
    %1813 = vmatpush.msra.mxu0 0.0
    %1814 = vmatpush.msra.mxu0 0.0
    %1815 = vmatpush.msra.mxu0 %v1802
    %1816 = vmatpush.msra.mxu0 %v1801
    %1817 = vmatpush.msra.mxu0 %v1800
    %1818 = vmatpush.msra.mxu0 %v1799
    %1819 = vmatmul.f32.gmra.mxu0 %v1171
    %v1820 = vpop.f32.mrf.mxu0
    %v1821 = vadd.f32 0.0, %v1820
    %1822 = vmatmul.f32.gmra.mxu0 %v1174
    %v1823 = vpop.f32.mrf.mxu0
    %v1824 = vadd.f32 0.0, %v1823
    %1825 = vdwg.mxu0
    %s1826 = scalar_lea.vmem %s3, 736
    %v1827 = vld [vmem:[%s1826] sm:$0xff]
    %v1828 = vld [vmem:[%s1826 + $0x8] sm:$0xff]
    %v1829 = vld [vmem:[%s1826 + $0x10] sm:$0xff]
    %v1830 = vld [vmem:[%s1826 + $0x18] sm:$0xff]
    %1831 = vmatpush.msra.mxu0 0.0
    %1832 = vmatpush.msra.mxu0 0.0
    %1833 = vmatpush.msra.mxu0 0.0
    %1834 = vmatpush.msra.mxu0 0.0
    %1835 = vmatpush.msra.mxu0 0.0
    %1836 = vmatpush.msra.mxu0 0.0
    %1837 = vmatpush.msra.mxu0 0.0
    %1838 = vmatpush.msra.mxu0 0.0
    %1839 = vmatpush.msra.mxu0 0.0
    %1840 = vmatpush.msra.mxu0 0.0
    %1841 = vmatpush.msra.mxu0 0.0
    %1842 = vmatpush.msra.mxu0 0.0
    %1843 = vmatpush.msra.mxu0 %v1830
    %1844 = vmatpush.msra.mxu0 %v1829
    %1845 = vmatpush.msra.mxu0 %v1828
    %1846 = vmatpush.msra.mxu0 %v1827
    %1847 = vmatmul.f32.gmra.mxu0 %v1171
    %v1848 = vpop.f32.mrf.mxu0
    %v1849 = vadd.f32 0.0, %v1848
    %1850 = vmatmul.f32.gmra.mxu0 %v1174
    %v1851 = vpop.f32.mrf.mxu0
    %v1852 = vadd.f32 0.0, %v1851
    %1853 = vdwg.mxu0
    %v1855 = vsel %vm254, %v1793, 0
    %v1858 = vsel %vm254, %v1796, 0
    %v1861 = vsel %vm254, %v1821, 0
    %v1864 = vsel %vm254, %v1824, 0
    %1866 = vmatpush.xpose.msra.mxu0 0.0
    %1867 = vmatpush.xpose.msra.mxu0 0.0
    %1868 = vmatpush.xpose.msra.mxu0 0.0
    %1869 = vmatpush.xpose.msra.mxu0 0.0
    %1870 = vmatpush.xpose.msra.mxu0 0.0
    %1871 = vmatpush.xpose.msra.mxu0 0.0
    %1872 = vmatpush.xpose.msra.mxu0 0.0
    %1873 = vmatpush.xpose.msra.mxu0 0.0
    %1874 = vmatpush.xpose.msra.mxu0 0.0
    %1875 = vmatpush.xpose.msra.mxu0 0.0
    %1876 = vmatpush.xpose.msra.mxu0 0.0
    %1877 = vmatpush.xpose.msra.mxu0 0.0
    %1878 = vmatpush.xpose.msra.mxu0 0.0
    %1879 = vmatpush.xpose.msra.mxu0 0.0
    %1880 = vmatpush.xpose.msra.mxu0 %v1864
    %1881 = vmatpush.xpose.msra.mxu0 %v1861
    %1882 = vmatmul.f32.gmra.mxu0 %v1855
    %v1883 = vpop.f32.mrf.mxu0
    %v1884 = vadd.f32 %v100, %v1883
    %1885 = vmatmul.f32.gmra.mxu0 %v1858
    %v1886 = vpop.f32.mrf.mxu0
    %v1887 = vadd.f32 %v101, %v1886
    %1888 = vdwg.mxu0
    %v1889 = vsel %vm290, %v1884, -inf
    %1890 = vmax.xlane.f32.xlu0 %v1889
    %v1891 = vpop.xlane.xlu0 %1890
    %v1892 = vsel %vm290, %v1887, -inf
    %1893 = vmax.xlane.f32.xlu0 %v1892
    %v1894 = vpop.xlane.xlu0 %1893
    %v1895 = vsub.f32 %v1884, %v1891
    %v1896 = vsub.f32 %v1887, %v1894
    %v1897 = vmul.f32 %v1895, 1.442695
    %v1898 = vpow.pop %v1897
    %v1899 = vmul.f32 %v1896, 1.442695
    %v1900 = vpow.pop %v1899
    %v1901 = vsel %vm290, %v1898, 0.0
    %1902 = vadd.xlane.f32.xlu0 %v1901
    %v1903 = vpop.xlane.xlu0 %1902
    %v1904 = vsel %vm290, %v1900, 0.0
    %1905 = vadd.xlane.f32.xlu0 %v1904
    %v1906 = vpop.xlane.xlu0 %1905
    %v1907 = vrcp.pop %v1903
    %v1908 = vrcp.pop %v1906
    %v1909 = vmul.f32 %v1898, %v1907
    %v1910 = vmul.f32 %v1900, %v1908
    %v1912 = vsel %vm290, %v1909, 0
    %v1915 = vsel %vm290, %v1910, 0
    %1917 = vmatpush.msra.mxu0 0.0
    %1918 = vmatpush.msra.mxu0 0.0
    %1919 = vmatpush.msra.mxu0 0.0
    %1920 = vmatpush.msra.mxu0 0.0
    %1921 = vmatpush.msra.mxu0 0.0
    %1922 = vmatpush.msra.mxu0 0.0
    %1923 = vmatpush.msra.mxu0 0.0
    %1924 = vmatpush.msra.mxu0 0.0
    %1925 = vmatpush.msra.mxu0 0.0
    %1926 = vmatpush.msra.mxu0 0.0
    %1927 = vmatpush.msra.mxu0 0.0
    %1928 = vmatpush.msra.mxu0 0.0
    %1929 = vmatpush.msra.mxu0 0.0
    %1930 = vmatpush.msra.mxu0 0.0
    %1931 = vmatpush.msra.mxu0 %v1852
    %1932 = vmatpush.msra.mxu0 %v1849
    %1933 = vmatmul.f32.gmra.mxu0 %v1912
    %v1934 = vpop.f32.mrf.mxu0
    %v1935 = vadd.f32 0.0, %v1934
    %1936 = vmatmul.f32.gmra.mxu0 %v1915
    %v1937 = vpop.f32.mrf.mxu0
    %v1938 = vadd.f32 0.0, %v1937
    %1939 = vdwg.mxu0
    %v1941 = vsel %vm254, %v1935, 0
    %v1944 = vsel %vm254, %v1938, 0
    %1946 = vmatpush.msra.mxu0 0.0
    %1947 = vmatpush.msra.mxu0 0.0
    %1948 = vmatpush.msra.mxu0 0.0
    %1949 = vmatpush.msra.mxu0 0.0
    %1950 = vmatpush.msra.mxu0 0.0
    %1951 = vmatpush.msra.mxu0 0.0
    %1952 = vmatpush.msra.mxu0 0.0
    %1953 = vmatpush.msra.mxu0 0.0
    %1954 = vmatpush.msra.mxu0 0.0
    %1955 = vmatpush.msra.mxu0 0.0
    %1956 = vmatpush.msra.mxu0 0.0
    %1957 = vmatpush.msra.mxu0 0.0
    %1958 = vmatpush.msra.mxu0 0.0
    %1959 = vmatpush.msra.mxu0 0.0
    %1960 = vmatpush.msra.mxu0 0.0
    %1961 = vmatpush.msra.mxu0 %v1114
    %1962 = vmatmul.f32.gmra.mxu0 %v1941
    %v1963 = vpop.f32.mrf.mxu0
    %v1964 = vadd.f32 0.0, %v1963
    %1965 = vmatmul.f32.gmra.mxu0 %v1944
    %v1966 = vpop.f32.mrf.mxu0
    %v1967 = vadd.f32 0.0, %v1966
    %1968 = vdwg.mxu0
    %v1969 = vadd.f32 %v1768, %v1964
    %v1970 = vadd.f32 %v1769, %v1967
    %v1971 = vadd.f32 %v1106, %v1969
    %v1972 = vadd.f32 %v1107, %v1970
    %v1973 = vperm.slane %v1109, 4
    %v1974 = vadd.f32 %v1971, %v1973
    %v1975 = vadd.f32 %v1972, %v1973
    %v1976 = vsel %vm107, %v1974, 0.0
    %1977 = vadd.xlane.f32.xlu0 %v1976
    %v1978 = vpop.xlane.xlu0 %1977
    %v1979 = vsel %vm107, %v1975, 0.0
    %1980 = vadd.xlane.f32.xlu0 %v1979
    %v1981 = vpop.xlane.xlu0 %1980
    %v1982 = vmul.f32 %v1978, %v120
    %v1983 = vmul.f32 %v1981, %v120
    %v1984 = vsub.f32 %v1974, %v1982
    %v1985 = vsub.f32 %v1975, %v1983
    %v1986 = vmul.f32 %v1984, %v1984
    %v1987 = vmul.f32 %v1985, %v1985
    %v1988 = vsel %vm107, %v1986, 0.0
    %1989 = vadd.xlane.f32.xlu0 %v1988
    %v1990 = vpop.xlane.xlu0 %1989
    %v1991 = vsel %vm107, %v1987, 0.0
    %1992 = vadd.xlane.f32.xlu0 %v1991
    %v1993 = vpop.xlane.xlu0 %1992
    %v1994 = vmul.f32 %v1990, %v120
    %v1995 = vmul.f32 %v1993, %v120
    %v1996 = vadd.f32 %v1994, 1e-05
    %v1997 = vadd.f32 %v1995, 1e-05
    %v1998 = vrsqrt.pop %v1996
    %v1999 = vmul.f32 %v1998, %v1996
    %v2000 = vmul.f32 %v1999, %v1998
    %v2001 = vmul.f32 0.5, %v2000
    %v2002 = vsub.f32 1.5, %v2001
    %v2003 = vmul.f32 %v1998, %v2002
    %vm2004 = vweird.f32 %v1996
    %vm2005 = vweird.f32 %v1998
    %vm2006 = vmor %vm2004, %vm2005
    %v2007 = vsel %vm2006, %v1998, %v2003
    %v2008 = vrsqrt.pop %v1997
    %v2009 = vmul.f32 %v2008, %v1997
    %v2010 = vmul.f32 %v2009, %v2008
    %v2011 = vmul.f32 0.5, %v2010
    %v2012 = vsub.f32 1.5, %v2011
    %v2013 = vmul.f32 %v2008, %v2012
    %vm2014 = vweird.f32 %v1997
    %vm2015 = vweird.f32 %v2008
    %vm2016 = vmor %vm2014, %vm2015
    %v2017 = vsel %vm2016, %v2008, %v2013
    %v2018 = vmul.f32 %v1984, %v2007
    %v2019 = vmul.f32 %v1985, %v2017
    %v2020 = vperm.slane %v1109, 2
    %v2021 = vmul.f32 %v2018, %v2020
    %v2022 = vmul.f32 %v2019, %v2020
    %v2023 = vperm.slane %v1109, 3
    %v2024 = vadd.f32 %v2021, %v2023
    %v2025 = vadd.f32 %v2022, %v2023
    %s2026 = scalar_lea.vmem %s5, 32
    %v2027 = vld [vmem:[%s2026] sm:$0xff]
    %v2028 = vld [vmem:[%s2026 + $0x8] sm:$0xff]
    %v2029 = vld [vmem:[%s2026 + $0x10] sm:$0xff]
    %v2030 = vld [vmem:[%s2026 + $0x18] sm:$0xff]
    %s2031 = scalar_lea.vmem %s6, 1
    %v2032 = vld [vmem:[%s2031] sm:$0x1]
    %v2034 = vperm.slane %v2032, 0
    %v2037 = vsel %vm107, %v2024, 0
    %v2040 = vsel %vm107, %v2025, 0
    %2042 = vmatpush.msra.mxu0 0.0
    %2043 = vmatpush.msra.mxu0 0.0
    %2044 = vmatpush.msra.mxu0 0.0
    %2045 = vmatpush.msra.mxu0 0.0
    %2046 = vmatpush.msra.mxu0 0.0
    %2047 = vmatpush.msra.mxu0 0.0
    %2048 = vmatpush.msra.mxu0 0.0
    %2049 = vmatpush.msra.mxu0 0.0
    %2050 = vmatpush.msra.mxu0 0.0
    %2051 = vmatpush.msra.mxu0 0.0
    %2052 = vmatpush.msra.mxu0 0.0
    %2053 = vmatpush.msra.mxu0 0.0
    %2054 = vmatpush.msra.mxu0 %v2030
    %2055 = vmatpush.msra.mxu0 %v2029
    %2056 = vmatpush.msra.mxu0 %v2028
    %2057 = vmatpush.msra.mxu0 %v2027
    %2058 = vmatmul.f32.gmra.mxu0 %v2037
    %v2059 = vpop.f32.mrf.mxu0
    %v2060 = vadd.f32 %v2034, %v2059
    %2061 = vmatmul.f32.gmra.mxu0 %v2040
    %v2062 = vpop.f32.mrf.mxu0
    %v2063 = vadd.f32 %v2034, %v2062
    %2064 = vdwg.mxu0
    %v2065 = vmax.f32 %v2060, 0.0
    %v2066 = vmax.f32 %v2063, 0.0
    %s2067 = scalar_lea.vmem %s7, 128
    %v2068 = vld [vmem:[%s2067] sm:$0xff]
    %v2069 = vld [vmem:[%s2067 + $0x8] sm:$0xff]
    %v2070 = vld [vmem:[%s2067 + $0x10] sm:$0xff]
    %v2071 = vld [vmem:[%s2067 + $0x18] sm:$0xff]
    %v2072 = vld [vmem:[%s2067 + $0x20] sm:$0xff]
    %v2073 = vld [vmem:[%s2067 + $0x28] sm:$0xff]
    %v2074 = vld [vmem:[%s2067 + $0x30] sm:$0xff]
    %v2075 = vld [vmem:[%s2067 + $0x38] sm:$0xff]
    %v2076 = vld [vmem:[%s2067 + $0x40] sm:$0xff]
    %v2077 = vld [vmem:[%s2067 + $0x48] sm:$0xff]
    %v2078 = vld [vmem:[%s2067 + $0x50] sm:$0xff]
    %v2079 = vld [vmem:[%s2067 + $0x58] sm:$0xff]
    %v2080 = vld [vmem:[%s2067 + $0x60] sm:$0xff]
    %v2081 = vld [vmem:[%s2067 + $0x68] sm:$0xff]
    %v2082 = vld [vmem:[%s2067 + $0x70] sm:$0xff]
    %v2083 = vld [vmem:[%s2067 + $0x78] sm:$0xff]
    %v2084 = vperm.slane %v1109, 5
    %2085 = vmatpush.msra.mxu0 %v2083
    %2086 = vmatpush.msra.mxu0 %v2082
    %2087 = vmatpush.msra.mxu0 %v2081
    %2088 = vmatpush.msra.mxu0 %v2080
    %2089 = vmatpush.msra.mxu0 %v2079
    %2090 = vmatpush.msra.mxu0 %v2078
    %2091 = vmatpush.msra.mxu0 %v2077
    %2092 = vmatpush.msra.mxu0 %v2076
    %2093 = vmatpush.msra.mxu0 %v2075
    %2094 = vmatpush.msra.mxu0 %v2074
    %2095 = vmatpush.msra.mxu0 %v2073
    %2096 = vmatpush.msra.mxu0 %v2072
    %2097 = vmatpush.msra.mxu0 %v2071
    %2098 = vmatpush.msra.mxu0 %v2070
    %2099 = vmatpush.msra.mxu0 %v2069
    %2100 = vmatpush.msra.mxu0 %v2068
    %2101 = vmatmul.f32.gmra.mxu0 %v2065
    %v2102 = vpop.f32.mrf.mxu0
    %v2103 = vadd.f32 %v2084, %v2102
    %2104 = vmatmul.f32.gmra.mxu0 %v2066
    %v2105 = vpop.f32.mrf.mxu0
    %v2106 = vadd.f32 %v2084, %v2105
    %2107 = vdwg.mxu0
    %v2108 = vadd.f32 %v1974, %v2103
    %v2109 = vadd.f32 %v1975, %v2106
    %s2110 = scalar_lea.vmem %s8, 16
    %v2111 = vld [vmem:[%s2110] sm:$0xff]
    %v2112 = vsel %vm107, %v2108, 0.0
    %2113 = vadd.xlane.f32.xlu0 %v2112
    %v2114 = vpop.xlane.xlu0 %2113
    %v2115 = vsel %vm107, %v2109, 0.0
    %2116 = vadd.xlane.f32.xlu0 %v2115
    %v2117 = vpop.xlane.xlu0 %2116
    %v2118 = vmul.f32 %v2114, %v120
    %v2119 = vmul.f32 %v2117, %v120
    %v2120 = vsub.f32 %v2108, %v2118
    %v2121 = vsub.f32 %v2109, %v2119
    %v2122 = vmul.f32 %v2120, %v2120
    %v2123 = vmul.f32 %v2121, %v2121
    %v2124 = vsel %vm107, %v2122, 0.0
    %2125 = vadd.xlane.f32.xlu0 %v2124
    %v2126 = vpop.xlane.xlu0 %2125
    %v2127 = vsel %vm107, %v2123, 0.0
    %2128 = vadd.xlane.f32.xlu0 %v2127
    %v2129 = vpop.xlane.xlu0 %2128
    %v2130 = vmul.f32 %v2126, %v120
    %v2131 = vmul.f32 %v2129, %v120
    %v2132 = vadd.f32 %v2130, 1e-05
    %v2133 = vadd.f32 %v2131, 1e-05
    %v2134 = vrsqrt.pop %v2132
    %v2135 = vmul.f32 %v2134, %v2132
    %v2136 = vmul.f32 %v2135, %v2134
    %v2137 = vmul.f32 0.5, %v2136
    %v2138 = vsub.f32 1.5, %v2137
    %v2139 = vmul.f32 %v2134, %v2138
    %vm2140 = vweird.f32 %v2132
    %vm2141 = vweird.f32 %v2134
    %vm2142 = vmor %vm2140, %vm2141
    %v2143 = vsel %vm2142, %v2134, %v2139
    %v2144 = vrsqrt.pop %v2133
    %v2145 = vmul.f32 %v2144, %v2133
    %v2146 = vmul.f32 %v2145, %v2144
    %v2147 = vmul.f32 0.5, %v2146
    %v2148 = vsub.f32 1.5, %v2147
    %v2149 = vmul.f32 %v2144, %v2148
    %vm2150 = vweird.f32 %v2133
    %vm2151 = vweird.f32 %v2144
    %vm2152 = vmor %vm2150, %vm2151
    %v2153 = vsel %vm2152, %v2144, %v2149
    %v2154 = vmul.f32 %v2120, %v2143
    %v2155 = vmul.f32 %v2121, %v2153
    %v2156 = vperm.slane %v2111, 0
    %v2157 = vmul.f32 %v2154, %v2156
    %v2158 = vmul.f32 %v2155, %v2156
    %v2159 = vperm.slane %v2111, 1
    %v2160 = vadd.f32 %v2157, %v2159
    %v2161 = vadd.f32 %v2158, %v2159
    %v2162 = vlaneseq
    %v2163 = vshrl.u32 %v2162, 7
    %v2164 = vld [vmem:[%s10] sm:$0x1]
    %v2166 = vperm.slane %v2164, 0
    %v2168 = vadd.f32 %v2166, 0.0
    %v2169 = vmul.u32 %v2163, 8
    %vm2170 = vcmp.eq.s32.totalorder %v42, %v2169
    %v2171 = vsel %vm2170, 1, 0
    %v2172 = vcvt.s32.f32 %v2171
    %v2174 = vsel %vm290, %v2172, 0
    %2176 = vmatpush.msra.mxu0 0.0
    %2177 = vmatpush.msra.mxu0 0.0
    %2178 = vmatpush.msra.mxu0 0.0
    %2179 = vmatpush.msra.mxu0 0.0
    %2180 = vmatpush.msra.mxu0 0.0
    %2181 = vmatpush.msra.mxu0 0.0
    %2182 = vmatpush.msra.mxu0 0.0
    %2183 = vmatpush.msra.mxu0 0.0
    %2184 = vmatpush.msra.mxu0 0.0
    %2185 = vmatpush.msra.mxu0 0.0
    %2186 = vmatpush.msra.mxu0 0.0
    %2187 = vmatpush.msra.mxu0 0.0
    %2188 = vmatpush.msra.mxu0 0.0
    %2189 = vmatpush.msra.mxu0 0.0
    %2190 = vmatpush.msra.mxu0 %v2161
    %2191 = vmatpush.msra.mxu0 %v2160
    %2192 = vmatmul.f32.gmra.mxu0 %v2174
    %v2193 = vpop.f32.mrf.mxu0
    %v2194 = vadd.f32 0.0, %v2193
    %2195 = vdwg.mxu0
    %v2196 = vld [vmem:[%s9] sm:$0xff]
    %v2197 = vld [vmem:[%s9 + $0x8] sm:$0xff]
    %v2198 = vld [vmem:[%s9 + $0x10] sm:$0xff]
    %v2199 = vld [vmem:[%s9 + $0x18] sm:$0xff]
    %v2201 = vsel %vm107, %v2194, 0
    %2203 = vmatpush.msra.mxu0 0.0
    %2204 = vmatpush.msra.mxu0 0.0
    %2205 = vmatpush.msra.mxu0 0.0
    %2206 = vmatpush.msra.mxu0 0.0
    %2207 = vmatpush.msra.mxu0 0.0
    %2208 = vmatpush.msra.mxu0 0.0
    %2209 = vmatpush.msra.mxu0 0.0
    %2210 = vmatpush.msra.mxu0 0.0
    %2211 = vmatpush.msra.mxu0 0.0
    %2212 = vmatpush.msra.mxu0 0.0
    %2213 = vmatpush.msra.mxu0 0.0
    %2214 = vmatpush.msra.mxu0 0.0
    %2215 = vmatpush.msra.mxu0 %v2199
    %2216 = vmatpush.msra.mxu0 %v2198
    %2217 = vmatpush.msra.mxu0 %v2197
    %2218 = vmatpush.msra.mxu0 %v2196
    %2219 = vmatmul.f32.gmra.mxu0 %v2201
    %v2220 = vpop.f32.mrf.mxu0
    %v2221 = vadd.f32 0.0, %v2220
    %2222 = vdwg.mxu0
    %v2223 = vadd.f32 %v2168, %v2221
    %v2224 = vadd.s32 %v2169, 1
    %vm2225 = vcmp.eq.s32.totalorder %v42, %v2224
    %v2226 = vsel %vm2225, 1, 0
    %v2227 = vcvt.s32.f32 %v2226
    %v2229 = vsel %vm290, %v2227, 0
    %2231 = vmatpush.msra.mxu0 0.0
    %2232 = vmatpush.msra.mxu0 0.0
    %2233 = vmatpush.msra.mxu0 0.0
    %2234 = vmatpush.msra.mxu0 0.0
    %2235 = vmatpush.msra.mxu0 0.0
    %2236 = vmatpush.msra.mxu0 0.0
    %2237 = vmatpush.msra.mxu0 0.0
    %2238 = vmatpush.msra.mxu0 0.0
    %2239 = vmatpush.msra.mxu0 0.0
    %2240 = vmatpush.msra.mxu0 0.0
    %2241 = vmatpush.msra.mxu0 0.0
    %2242 = vmatpush.msra.mxu0 0.0
    %2243 = vmatpush.msra.mxu0 0.0
    %2244 = vmatpush.msra.mxu0 0.0
    %2245 = vmatpush.msra.mxu0 %v2161
    %2246 = vmatpush.msra.mxu0 %v2160
    %2247 = vmatmul.f32.gmra.mxu0 %v2229
    %v2248 = vpop.f32.mrf.mxu0
    %v2249 = vadd.f32 0.0, %v2248
    %2250 = vdwg.mxu0
    %s2251 = scalar_lea.vmem %s9, 32
    %v2252 = vld [vmem:[%s2251] sm:$0xff]
    %v2253 = vld [vmem:[%s2251 + $0x8] sm:$0xff]
    %v2254 = vld [vmem:[%s2251 + $0x10] sm:$0xff]
    %v2255 = vld [vmem:[%s2251 + $0x18] sm:$0xff]
    %v2257 = vsel %vm107, %v2249, 0
    %2259 = vmatpush.msra.mxu0 0.0
    %2260 = vmatpush.msra.mxu0 0.0
    %2261 = vmatpush.msra.mxu0 0.0
    %2262 = vmatpush.msra.mxu0 0.0
    %2263 = vmatpush.msra.mxu0 0.0
    %2264 = vmatpush.msra.mxu0 0.0
    %2265 = vmatpush.msra.mxu0 0.0
    %2266 = vmatpush.msra.mxu0 0.0
    %2267 = vmatpush.msra.mxu0 0.0
    %2268 = vmatpush.msra.mxu0 0.0
    %2269 = vmatpush.msra.mxu0 0.0
    %2270 = vmatpush.msra.mxu0 0.0
    %2271 = vmatpush.msra.mxu0 %v2255
    %2272 = vmatpush.msra.mxu0 %v2254
    %2273 = vmatpush.msra.mxu0 %v2253
    %2274 = vmatpush.msra.mxu0 %v2252
    %2275 = vmatmul.f32.gmra.mxu0 %v2257
    %v2276 = vpop.f32.mrf.mxu0
    %v2277 = vadd.f32 0.0, %v2276
    %2278 = vdwg.mxu0
    %v2279 = vadd.f32 %v2223, %v2277
    %v2280 = vadd.s32 %v2169, 2
    %vm2281 = vcmp.eq.s32.totalorder %v42, %v2280
    %v2282 = vsel %vm2281, 1, 0
    %v2283 = vcvt.s32.f32 %v2282
    %v2285 = vsel %vm290, %v2283, 0
    %2287 = vmatpush.msra.mxu0 0.0
    %2288 = vmatpush.msra.mxu0 0.0
    %2289 = vmatpush.msra.mxu0 0.0
    %2290 = vmatpush.msra.mxu0 0.0
    %2291 = vmatpush.msra.mxu0 0.0
    %2292 = vmatpush.msra.mxu0 0.0
    %2293 = vmatpush.msra.mxu0 0.0
    %2294 = vmatpush.msra.mxu0 0.0
    %2295 = vmatpush.msra.mxu0 0.0
    %2296 = vmatpush.msra.mxu0 0.0
    %2297 = vmatpush.msra.mxu0 0.0
    %2298 = vmatpush.msra.mxu0 0.0
    %2299 = vmatpush.msra.mxu0 0.0
    %2300 = vmatpush.msra.mxu0 0.0
    %2301 = vmatpush.msra.mxu0 %v2161
    %2302 = vmatpush.msra.mxu0 %v2160
    %2303 = vmatmul.f32.gmra.mxu0 %v2285
    %v2304 = vpop.f32.mrf.mxu0
    %v2305 = vadd.f32 0.0, %v2304
    %2306 = vdwg.mxu0
    %s2307 = scalar_lea.vmem %s9, 64
    %v2308 = vld [vmem:[%s2307] sm:$0xff]
    %v2309 = vld [vmem:[%s2307 + $0x8] sm:$0xff]
    %v2310 = vld [vmem:[%s2307 + $0x10] sm:$0xff]
    %v2311 = vld [vmem:[%s2307 + $0x18] sm:$0xff]
    %v2313 = vsel %vm107, %v2305, 0
    %2315 = vmatpush.msra.mxu0 0.0
    %2316 = vmatpush.msra.mxu0 0.0
    %2317 = vmatpush.msra.mxu0 0.0
    %2318 = vmatpush.msra.mxu0 0.0
    %2319 = vmatpush.msra.mxu0 0.0
    %2320 = vmatpush.msra.mxu0 0.0
    %2321 = vmatpush.msra.mxu0 0.0
    %2322 = vmatpush.msra.mxu0 0.0
    %2323 = vmatpush.msra.mxu0 0.0
    %2324 = vmatpush.msra.mxu0 0.0
    %2325 = vmatpush.msra.mxu0 0.0
    %2326 = vmatpush.msra.mxu0 0.0
    %2327 = vmatpush.msra.mxu0 %v2311
    %2328 = vmatpush.msra.mxu0 %v2310
    %2329 = vmatpush.msra.mxu0 %v2309
    %2330 = vmatpush.msra.mxu0 %v2308
    %2331 = vmatmul.f32.gmra.mxu0 %v2313
    %v2332 = vpop.f32.mrf.mxu0
    %v2333 = vadd.f32 0.0, %v2332
    %2334 = vdwg.mxu0
    %v2335 = vadd.f32 %v2279, %v2333
    %v2336 = vadd.s32 %v2169, 3
    %vm2337 = vcmp.eq.s32.totalorder %v42, %v2336
    %v2338 = vsel %vm2337, 1, 0
    %v2339 = vcvt.s32.f32 %v2338
    %v2341 = vsel %vm290, %v2339, 0
    %2343 = vmatpush.msra.mxu0 0.0
    %2344 = vmatpush.msra.mxu0 0.0
    %2345 = vmatpush.msra.mxu0 0.0
    %2346 = vmatpush.msra.mxu0 0.0
    %2347 = vmatpush.msra.mxu0 0.0
    %2348 = vmatpush.msra.mxu0 0.0
    %2349 = vmatpush.msra.mxu0 0.0
    %2350 = vmatpush.msra.mxu0 0.0
    %2351 = vmatpush.msra.mxu0 0.0
    %2352 = vmatpush.msra.mxu0 0.0
    %2353 = vmatpush.msra.mxu0 0.0
    %2354 = vmatpush.msra.mxu0 0.0
    %2355 = vmatpush.msra.mxu0 0.0
    %2356 = vmatpush.msra.mxu0 0.0
    %2357 = vmatpush.msra.mxu0 %v2161
    %2358 = vmatpush.msra.mxu0 %v2160
    %2359 = vmatmul.f32.gmra.mxu0 %v2341
    %v2360 = vpop.f32.mrf.mxu0
    %v2361 = vadd.f32 0.0, %v2360
    %2362 = vdwg.mxu0
    %s2363 = scalar_lea.vmem %s9, 96
    %v2364 = vld [vmem:[%s2363] sm:$0xff]
    %v2365 = vld [vmem:[%s2363 + $0x8] sm:$0xff]
    %v2366 = vld [vmem:[%s2363 + $0x10] sm:$0xff]
    %v2367 = vld [vmem:[%s2363 + $0x18] sm:$0xff]
    %v2369 = vsel %vm107, %v2361, 0
    %2371 = vmatpush.msra.mxu0 0.0
    %2372 = vmatpush.msra.mxu0 0.0
    %2373 = vmatpush.msra.mxu0 0.0
    %2374 = vmatpush.msra.mxu0 0.0
    %2375 = vmatpush.msra.mxu0 0.0
    %2376 = vmatpush.msra.mxu0 0.0
    %2377 = vmatpush.msra.mxu0 0.0
    %2378 = vmatpush.msra.mxu0 0.0
    %2379 = vmatpush.msra.mxu0 0.0
    %2380 = vmatpush.msra.mxu0 0.0
    %2381 = vmatpush.msra.mxu0 0.0
    %2382 = vmatpush.msra.mxu0 0.0
    %2383 = vmatpush.msra.mxu0 %v2367
    %2384 = vmatpush.msra.mxu0 %v2366
    %2385 = vmatpush.msra.mxu0 %v2365
    %2386 = vmatpush.msra.mxu0 %v2364
    %2387 = vmatmul.f32.gmra.mxu0 %v2369
    %v2388 = vpop.f32.mrf.mxu0
    %v2389 = vadd.f32 0.0, %v2388
    %2390 = vdwg.mxu0
    %v2391 = vadd.f32 %v2335, %v2389
    %v2392 = vadd.s32 %v2169, 4
    %vm2393 = vcmp.eq.s32.totalorder %v42, %v2392
    %v2394 = vsel %vm2393, 1, 0
    %v2395 = vcvt.s32.f32 %v2394
    %v2397 = vsel %vm290, %v2395, 0
    %2399 = vmatpush.msra.mxu0 0.0
    %2400 = vmatpush.msra.mxu0 0.0
    %2401 = vmatpush.msra.mxu0 0.0
    %2402 = vmatpush.msra.mxu0 0.0
    %2403 = vmatpush.msra.mxu0 0.0
    %2404 = vmatpush.msra.mxu0 0.0
    %2405 = vmatpush.msra.mxu0 0.0
    %2406 = vmatpush.msra.mxu0 0.0
    %2407 = vmatpush.msra.mxu0 0.0
    %2408 = vmatpush.msra.mxu0 0.0
    %2409 = vmatpush.msra.mxu0 0.0
    %2410 = vmatpush.msra.mxu0 0.0
    %2411 = vmatpush.msra.mxu0 0.0
    %2412 = vmatpush.msra.mxu0 0.0
    %2413 = vmatpush.msra.mxu0 %v2161
    %2414 = vmatpush.msra.mxu0 %v2160
    %2415 = vmatmul.f32.gmra.mxu0 %v2397
    %v2416 = vpop.f32.mrf.mxu0
    %v2417 = vadd.f32 0.0, %v2416
    %2418 = vdwg.mxu0
    %s2419 = scalar_lea.vmem %s9, 128
    %v2420 = vld [vmem:[%s2419] sm:$0xff]
    %v2421 = vld [vmem:[%s2419 + $0x8] sm:$0xff]
    %v2422 = vld [vmem:[%s2419 + $0x10] sm:$0xff]
    %v2423 = vld [vmem:[%s2419 + $0x18] sm:$0xff]
    %v2425 = vsel %vm107, %v2417, 0
    %2427 = vmatpush.msra.mxu0 0.0
    %2428 = vmatpush.msra.mxu0 0.0
    %2429 = vmatpush.msra.mxu0 0.0
    %2430 = vmatpush.msra.mxu0 0.0
    %2431 = vmatpush.msra.mxu0 0.0
    %2432 = vmatpush.msra.mxu0 0.0
    %2433 = vmatpush.msra.mxu0 0.0
    %2434 = vmatpush.msra.mxu0 0.0
    %2435 = vmatpush.msra.mxu0 0.0
    %2436 = vmatpush.msra.mxu0 0.0
    %2437 = vmatpush.msra.mxu0 0.0
    %2438 = vmatpush.msra.mxu0 0.0
    %2439 = vmatpush.msra.mxu0 %v2423
    %2440 = vmatpush.msra.mxu0 %v2422
    %2441 = vmatpush.msra.mxu0 %v2421
    %2442 = vmatpush.msra.mxu0 %v2420
    %2443 = vmatmul.f32.gmra.mxu0 %v2425
    %v2444 = vpop.f32.mrf.mxu0
    %v2445 = vadd.f32 0.0, %v2444
    %2446 = vdwg.mxu0
    %v2447 = vadd.f32 %v2391, %v2445
    %v2448 = vadd.s32 %v2169, 5
    %vm2449 = vcmp.eq.s32.totalorder %v42, %v2448
    %v2450 = vsel %vm2449, 1, 0
    %v2451 = vcvt.s32.f32 %v2450
    %v2453 = vsel %vm290, %v2451, 0
    %2455 = vmatpush.msra.mxu0 0.0
    %2456 = vmatpush.msra.mxu0 0.0
    %2457 = vmatpush.msra.mxu0 0.0
    %2458 = vmatpush.msra.mxu0 0.0
    %2459 = vmatpush.msra.mxu0 0.0
    %2460 = vmatpush.msra.mxu0 0.0
    %2461 = vmatpush.msra.mxu0 0.0
    %2462 = vmatpush.msra.mxu0 0.0
    %2463 = vmatpush.msra.mxu0 0.0
    %2464 = vmatpush.msra.mxu0 0.0
    %2465 = vmatpush.msra.mxu0 0.0
    %2466 = vmatpush.msra.mxu0 0.0
    %2467 = vmatpush.msra.mxu0 0.0
    %2468 = vmatpush.msra.mxu0 0.0
    %2469 = vmatpush.msra.mxu0 %v2161
    %2470 = vmatpush.msra.mxu0 %v2160
    %2471 = vmatmul.f32.gmra.mxu0 %v2453
    %v2472 = vpop.f32.mrf.mxu0
    %v2473 = vadd.f32 0.0, %v2472
    %2474 = vdwg.mxu0
    %s2475 = scalar_lea.vmem %s9, 160
    %v2476 = vld [vmem:[%s2475] sm:$0xff]
    %v2477 = vld [vmem:[%s2475 + $0x8] sm:$0xff]
    %v2478 = vld [vmem:[%s2475 + $0x10] sm:$0xff]
    %v2479 = vld [vmem:[%s2475 + $0x18] sm:$0xff]
    %v2481 = vsel %vm107, %v2473, 0
    %2483 = vmatpush.msra.mxu0 0.0
    %2484 = vmatpush.msra.mxu0 0.0
    %2485 = vmatpush.msra.mxu0 0.0
    %2486 = vmatpush.msra.mxu0 0.0
    %2487 = vmatpush.msra.mxu0 0.0
    %2488 = vmatpush.msra.mxu0 0.0
    %2489 = vmatpush.msra.mxu0 0.0
    %2490 = vmatpush.msra.mxu0 0.0
    %2491 = vmatpush.msra.mxu0 0.0
    %2492 = vmatpush.msra.mxu0 0.0
    %2493 = vmatpush.msra.mxu0 0.0
    %2494 = vmatpush.msra.mxu0 0.0
    %2495 = vmatpush.msra.mxu0 %v2479
    %2496 = vmatpush.msra.mxu0 %v2478
    %2497 = vmatpush.msra.mxu0 %v2477
    %2498 = vmatpush.msra.mxu0 %v2476
    %2499 = vmatmul.f32.gmra.mxu0 %v2481
    %v2500 = vpop.f32.mrf.mxu0
    %v2501 = vadd.f32 0.0, %v2500
    %2502 = vdwg.mxu0
    %v2503 = vadd.f32 %v2447, %v2501
    %v2504 = vadd.s32 %v2169, 6
    %vm2505 = vcmp.eq.s32.totalorder %v42, %v2504
    %v2506 = vsel %vm2505, 1, 0
    %v2507 = vcvt.s32.f32 %v2506
    %v2509 = vsel %vm290, %v2507, 0
    %2511 = vmatpush.msra.mxu0 0.0
    %2512 = vmatpush.msra.mxu0 0.0
    %2513 = vmatpush.msra.mxu0 0.0
    %2514 = vmatpush.msra.mxu0 0.0
    %2515 = vmatpush.msra.mxu0 0.0
    %2516 = vmatpush.msra.mxu0 0.0
    %2517 = vmatpush.msra.mxu0 0.0
    %2518 = vmatpush.msra.mxu0 0.0
    %2519 = vmatpush.msra.mxu0 0.0
    %2520 = vmatpush.msra.mxu0 0.0
    %2521 = vmatpush.msra.mxu0 0.0
    %2522 = vmatpush.msra.mxu0 0.0
    %2523 = vmatpush.msra.mxu0 0.0
    %2524 = vmatpush.msra.mxu0 0.0
    %2525 = vmatpush.msra.mxu0 %v2161
    %2526 = vmatpush.msra.mxu0 %v2160
    %2527 = vmatmul.f32.gmra.mxu0 %v2509
    %v2528 = vpop.f32.mrf.mxu0
    %v2529 = vadd.f32 0.0, %v2528
    %2530 = vdwg.mxu0
    %s2531 = scalar_lea.vmem %s9, 192
    %v2532 = vld [vmem:[%s2531] sm:$0xff]
    %v2533 = vld [vmem:[%s2531 + $0x8] sm:$0xff]
    %v2534 = vld [vmem:[%s2531 + $0x10] sm:$0xff]
    %v2535 = vld [vmem:[%s2531 + $0x18] sm:$0xff]
    %v2537 = vsel %vm107, %v2529, 0
    %2539 = vmatpush.msra.mxu0 0.0
    %2540 = vmatpush.msra.mxu0 0.0
    %2541 = vmatpush.msra.mxu0 0.0
    %2542 = vmatpush.msra.mxu0 0.0
    %2543 = vmatpush.msra.mxu0 0.0
    %2544 = vmatpush.msra.mxu0 0.0
    %2545 = vmatpush.msra.mxu0 0.0
    %2546 = vmatpush.msra.mxu0 0.0
    %2547 = vmatpush.msra.mxu0 0.0
    %2548 = vmatpush.msra.mxu0 0.0
    %2549 = vmatpush.msra.mxu0 0.0
    %2550 = vmatpush.msra.mxu0 0.0
    %2551 = vmatpush.msra.mxu0 %v2535
    %2552 = vmatpush.msra.mxu0 %v2534
    %2553 = vmatpush.msra.mxu0 %v2533
    %2554 = vmatpush.msra.mxu0 %v2532
    %2555 = vmatmul.f32.gmra.mxu0 %v2537
    %v2556 = vpop.f32.mrf.mxu0
    %v2557 = vadd.f32 0.0, %v2556
    %2558 = vdwg.mxu0
    %v2559 = vadd.f32 %v2503, %v2557
    %v2560 = vadd.s32 %v2169, 7
    %vm2561 = vcmp.eq.s32.totalorder %v42, %v2560
    %v2562 = vsel %vm2561, 1, 0
    %v2563 = vcvt.s32.f32 %v2562
    %v2565 = vsel %vm290, %v2563, 0
    %2567 = vmatpush.msra.mxu0 0.0
    %2568 = vmatpush.msra.mxu0 0.0
    %2569 = vmatpush.msra.mxu0 0.0
    %2570 = vmatpush.msra.mxu0 0.0
    %2571 = vmatpush.msra.mxu0 0.0
    %2572 = vmatpush.msra.mxu0 0.0
    %2573 = vmatpush.msra.mxu0 0.0
    %2574 = vmatpush.msra.mxu0 0.0
    %2575 = vmatpush.msra.mxu0 0.0
    %2576 = vmatpush.msra.mxu0 0.0
    %2577 = vmatpush.msra.mxu0 0.0
    %2578 = vmatpush.msra.mxu0 0.0
    %2579 = vmatpush.msra.mxu0 0.0
    %2580 = vmatpush.msra.mxu0 0.0
    %2581 = vmatpush.msra.mxu0 %v2161
    %2582 = vmatpush.msra.mxu0 %v2160
    %2583 = vmatmul.f32.gmra.mxu0 %v2565
    %v2584 = vpop.f32.mrf.mxu0
    %v2585 = vadd.f32 0.0, %v2584
    %2586 = vdwg.mxu0
    %s2587 = scalar_lea.vmem %s9, 224
    %v2588 = vld [vmem:[%s2587] sm:$0xff]
    %v2589 = vld [vmem:[%s2587 + $0x8] sm:$0xff]
    %v2590 = vld [vmem:[%s2587 + $0x10] sm:$0xff]
    %v2591 = vld [vmem:[%s2587 + $0x18] sm:$0xff]
    %v2593 = vsel %vm107, %v2585, 0
    %2595 = vmatpush.msra.mxu0 0.0
    %2596 = vmatpush.msra.mxu0 0.0
    %2597 = vmatpush.msra.mxu0 0.0
    %2598 = vmatpush.msra.mxu0 0.0
    %2599 = vmatpush.msra.mxu0 0.0
    %2600 = vmatpush.msra.mxu0 0.0
    %2601 = vmatpush.msra.mxu0 0.0
    %2602 = vmatpush.msra.mxu0 0.0
    %2603 = vmatpush.msra.mxu0 0.0
    %2604 = vmatpush.msra.mxu0 0.0
    %2605 = vmatpush.msra.mxu0 0.0
    %2606 = vmatpush.msra.mxu0 0.0
    %2607 = vmatpush.msra.mxu0 %v2591
    %2608 = vmatpush.msra.mxu0 %v2590
    %2609 = vmatpush.msra.mxu0 %v2589
    %2610 = vmatpush.msra.mxu0 %v2588
    %2611 = vmatmul.f32.gmra.mxu0 %v2593
    %v2612 = vpop.f32.mrf.mxu0
    %v2613 = vadd.f32 0.0, %v2612
    %2614 = vdwg.mxu0
    %v2615 = vadd.f32 %v2559, %v2613
    %2616 = vst [vmem:[#allocation2] sm:$0x3] %v2615
    // Predicated region
    $region46: #{hangman_forward.1} parent=1 // pred_check
      _
    $region47: #{hangman_forward.1} parent=1 // pred_check_branch
      %2618 = sbr.rel (0) target = $region49
    $region48: #{hangman_forward.1} parent=1 // pred_region
      %2620 = vsyncadd [#allocation3], 0
      %s2622 = sshll.u32 [#allocation2], 4
      %s2623 = int_to_ptr.vmem [resolvable:$true] %s2622
      %s2624 = sshll.u32 %s11, 4
      %s2625 = int_to_ptr.hbm [resolvable:$true] %s2624
      %2627 = dma.vmem_to_hbm [thread:$0]  %s2623, 32, %s2625, [#allocation3]
    $region49: #{hangman_forward.1} parent=1 // pred_fallthru
      _
    // Predicated region
    $region50: #{hangman_forward.1} parent=1 // pred_check
      _
    $region51: #{hangman_forward.1} parent=1 // pred_check_branch
      %2629 = sbr.rel (0) target = $region53
    $region52: #{hangman_forward.1} parent=1 // pred_region
      %2631 = dma.done [#allocation3], 32
    $region53: #{hangman_forward.1} parent=1 // pred_fallthru
      _
    %2632 = vsyncpa [#allocation3], 1

</llo_original>
